<compile_context>
chip_gen: v6e
topology: v6e:2x2x1
jax: 0.10.0
libtpu: 0.0.40
codegen_flags: <defaults>
</compile_context>

<pallas_src>
import functools

import jax
import jax.numpy as jnp
from jax import lax
from jax.experimental import pallas as pl
from jax.experimental.pallas import tpu as pltpu

LANE = 128                      # TPU vreg lane width -> channel padding target
_BN_EPS = 1e-5
_TILE_VMEM_BUDGET = 24 * 1024 * 1024    # per-step working-set budget (v7x-safe)
_VMEM_LIMIT = 48 * 1024 * 1024          # scoped VMEM limit for the kernel


def _round_up(v, m):
    return (v + m - 1) // m * m


def _vmem_estimate(th_out, stride, w, wo, cin_p, chid_p, cout_p, expand):
    """Rough per-grid-step VMEM footprint (bytes) for a th_out-row tile."""
    f4 = 4
    th_s = th_out * stride
    th_in = th_s + 2
    # double-buffered pipelined blocks: body + two single-row halos in, 1 out
    blocks = 2 * ((th_s * w + 2 * w) * cin_p + th_out * wo * cout_p) * f4
    scratch = th_in * w * chid_p * f4                       # expanded window
    wslab = w if stride == 1 else wo
    work = (3 * th_in * wslab * chid_p                      # shifted tap slabs
            + th_out * wo * (chid_p + cout_p)) * f4         # acc + projection
    params = 2 * (chid_p * cout_p * 2                       # bf16 w_proj
                  + (16 + 2 + 2) * chid_p * f4 + 2 * cout_p * f4)
    if expand:
        params += 2 * (cin_p * chid_p * 2 + 2 * chid_p * f4)
    return blocks + scratch + work + params


def _pick_row_block(ho, stride, w, wo, cin_p, chid_p, cout_p, expand):
    """Largest divisor of `ho` whose working set fits the VMEM tile budget."""
    best = 1
    for t in range(1, ho + 1):
        if ho % t == 0 and _vmem_estimate(t, stride, w, wo, cin_p, chid_p,
                                          cout_p, expand) <= _TILE_VMEM_BUDGET:
            best = t
    return best


# ----------------------------- fused Pallas kernel ---------------------------

def _inverted_residual_kernel(*refs, W, Wo, TH_out, stride, expand, use_res):
    """One grid step = TH_out output rows of one image.

    refs (expand=True):
      x_top, x_body, x_bot, w_exp, bn_exp, w_dw, bn_dw, w_proj, bn_proj,
      out, h_scratch
    refs (expand=False):
      x_top, x_body, x_bot,                w_dw, bn_dw, w_proj, bn_proj,
      out, h_scratch
    """
    if expand:
        (x_top_ref, x_body_ref, x_bot_ref,
         w_exp_ref, bn_exp_ref,
         w_dw_ref, bn_dw_ref,
         w_proj_ref, bn_proj_ref,
         o_ref, h_scr) = refs
    else:
        (x_top_ref, x_body_ref, x_bot_ref,
         w_dw_ref, bn_dw_ref,
         w_proj_ref, bn_proj_ref,
         o_ref, h_scr) = refs
        w_exp_ref = bn_exp_ref = None

    CH = w_dw_ref.shape[-1]          # lane-padded hidden width
    TH_s = TH_out * stride           # input rows owned by this block
    TH_in = TH_s + 2                 # + 1-row halo on each side

    r = pl.program_id(1)
    nr = pl.num_programs(1)

    # ---- 1x1 expansion + BN + ReLU6 -> VMEM scratch --------------------------
    # bf16 MXU operands, f32 accumulation; no window concat (pieces are written
    # straight into the scratch at their row offsets).
    def expand_rows(x3):
        rows = x3.shape[0]
        x2 = x3.reshape(rows * W, x3.shape[-1])
        if expand:
            h = jnp.dot(x2.astype(jnp.bfloat16), w_exp_ref[...],
                        preferred_element_type=jnp.float32)
            h = h * bn_exp_ref[0:1, :] + bn_exp_ref[1:2, :]
            h = jnp.clip(h, 0.0, 6.0)
        else:
            h = x2.astype(jnp.float32)
        return h.reshape(rows, W, CH)

    h_scr[1:TH_s + 1] = expand_rows(x_body_ref[0])
    # 1-row halos: zeroed only when they fall outside the image (first / last
    # row block) -- a 2-row fixup instead of a full-slab OOB select per step.
    h_scr[0:1] = expand_rows(x_top_ref[0]) * (r > 0).astype(jnp.float32)
    h_scr[TH_s + 1:TH_in] = (expand_rows(x_bot_ref[0])
                             * (r < nr - 1).astype(jnp.float32))

    # ---- 3x3 depthwise conv: column shifts hoisted out of the 9-tap loop -----
    if stride == 1:
        h_mid = h_scr[...]                                     # (TH_in, W, CH)
        cidx = lax.broadcasted_iota(jnp.int32, (W, 1), 0)
        left = jnp.where(cidx >= 1, pltpu.roll(h_mid, shift=1, axis=1), 0.0)
        right = jnp.where(cidx <= W - 2,
                          pltpu.roll(h_mid, shift=W - 1, axis=1), 0.0)
        slabs = (left, h_mid, right)                           # kw = 0, 1, 2
    else:
        # Columns were deinterleaved to [even | odd] in the wrapper, so the
        # stride-2 taps are contiguous slices: no selection matmul, no strided
        # gather, and the tap MACs run on Wo (not W) columns.
        h_even = h_scr[:, 0:Wo, :]                             # cols 0,2,4,...
        h_odd = h_scr[:, Wo:2 * Wo, :]                         # cols 1,3,5,...
        cidx = lax.broadcasted_iota(jnp.int32, (Wo, 1), 0)
        h_m1 = jnp.where(cidx >= 1, pltpu.roll(h_odd, shift=1, axis=1), 0.0)
        slabs = (h_m1, h_even, h_odd)                          # kw = 0, 1, 2

    # NOTE: on v6e/v7x the tap slabs could additionally be kept in bf16 (f32
    # acc) to halve vld/vst bytes; kept f32 so v5e (no bf16 VPU) pays no casts.
    acc = None
    for kh in range(3):
        for kw in range(3):
            rows = slabs[kw][kh:kh + stride * TH_out]
            if stride == 2:
                rows = rows.reshape(TH_out, 2, Wo, CH)[:, 0]   # every 2nd row
            tap = w_dw_ref[3 * kh + kw:3 * kh + kw + 1, :]     # (1, CH)
            term = rows.reshape(TH_out * Wo, CH) * tap
            acc = term if acc is None else acc + term          # init from tap 0

    d = acc * bn_dw_ref[0:1, :] + bn_dw_ref[1:2, :]
    d = jnp.clip(d, 0.0, 6.0)

    # ---- 1x1 projection + BN (+ residual) ------------------------------------
    y = jnp.dot(d.astype(jnp.bfloat16), w_proj_ref[...],
                preferred_element_type=jnp.float32)
    y = y * bn_proj_ref[0:1, :] + bn_proj_ref[1:2, :]
    if use_res:          # stride == 1 and inp == oup -> body rows == out rows
        y = y + x_body_ref[0].reshape(TH_out * Wo, -1)
    o_ref[0] = y.reshape(TH_out, Wo, -1).astype(o_ref.dtype)


# --------------------------- module equivalent --------------------------------

class InvertedResidualPallas:
    """Inference-mode InvertedResidual implemented as one fused Pallas kernel."""

    def __init__(self, inp, oup, stride, expand_ratio, key):
        assert stride in (1, 2)
        self.inp, self.oup = inp, oup
        self.stride = stride
        self.expand_ratio = expand_ratio
        self.hidden = int(round(inp * expand_ratio))
        self.use_res_connect = stride == 1 and inp == oup

        # lane-padded channel widths -> dense vregs / unmasked vector stores
        self.cin_p = _round_up(inp, LANE)
        self.chid_p = _round_up(self.hidden, LANE)
        self.cout_p = _round_up(oup, LANE)

        k0, k1, k2 = jax.random.split(key, 3)
        if expand_ratio != 1:
            self.w_expand = 0.1 * jax.random.normal(
                k0, (inp, self.hidden), jnp.float32)            # 1x1 expand
        self.w_dw = 0.1 * jax.random.normal(
            k1, (3, 3, self.hidden), jnp.float32)               # 3x3 depthwise
        self.w_proj = 0.1 * jax.random.normal(
            k2, (self.hidden, oup), jnp.float32)                # 1x1 project

        def bn_fold(c, c_pad):
            # inference BN, deterministic init (gamma=1, beta=0, mean=0, var=1)
            gamma = jnp.ones((c,), jnp.float32)
            beta = jnp.zeros((c,), jnp.float32)
            mean = jnp.zeros((c,), jnp.float32)
            var = jnp.ones((c,), jnp.float32)
            scale = gamma / jnp.sqrt(var + _BN_EPS)
            bias = beta - mean * scale
            sb = jnp.stack([scale, bias])                       # (2, c)
            return jnp.pad(sb, ((0, 0), (0, c_pad - c)))

        # MXU operands stored as bf16 (padded lanes stay exactly zero); BN and
        # depthwise taps stay f32.
        if expand_ratio != 1:
            self.w_expand_p = jnp.pad(
                self.w_expand,
                ((0, self.cin_p - inp), (0, self.chid_p - self.hidden))
            ).astype(jnp.bfloat16)
            self.bn_expand_p = bn_fold(self.hidden, self.chid_p)
        # flat (9, CH) taps: clean row loads, no (3,3,CH) sublane gathers
        self.w_dw_p = jnp.pad(
            self.w_dw, ((0, 0), (0, 0), (0, self.chid_p - self.hidden))
        ).reshape(9, self.chid_p)
        self.bn_dw_p = bn_fold(self.hidden, self.chid_p)
        self.w_proj_p = jnp.pad(
            self.w_proj,
            ((0, self.chid_p - self.hidden), (0, self.cout_p - oup))
        ).astype(jnp.bfloat16)
        self.bn_proj_p = bn_fold(oup, self.cout_p)

    def __call__(self, x_nchw):
        # PyTorch-style NCHW in/out; the transpose + channel pad / slice would
        # be dropped when composing blocks NHWC / lane-padded end-to-end.
        x = jnp.transpose(x_nchw, (0, 2, 3, 1)).astype(jnp.float32)   # -> NHWC
        N, H, W, C = x.shape
        assert C == self.inp
        if self.stride == 2:
            assert H % 2 == 0 and W % 2 == 0
        Ho, Wo = H // self.stride, W // self.stride
        x = jnp.pad(x, ((0, 0), (0, 0), (0, 0), (0, self.cin_p - C)))
        if self.stride == 2:
            # Layout plumbing (fuses with the transpose/pad copy above):
            # deinterleave columns to [even | odd] so the in-kernel stride-2
            # taps are contiguous slices.
            x = jnp.concatenate([x[:, :, 0::2, :], x[:, :, 1::2, :]], axis=2)

        expand = self.expand_ratio != 1
        TH_out = _pick_row_block(Ho, self.stride, W, Wo, self.cin_p,
                                 self.chid_p, self.cout_p, expand)
        n_row_blocks = Ho // TH_out
        TH_s = TH_out * self.stride          # input rows owned per grid step
        TH_in = TH_s + 2

        body_spec = pl.BlockSpec((1, TH_s, W, self.cin_p),
                                 lambda n, r: (n, r, 0, 0))
        # single-row halo blocks: clamped at image edges, zeroed in-kernel only
        # on boundary blocks
        top_spec = pl.BlockSpec(
            (1, 1, W, self.cin_p),
            lambda n, r: (n, jnp.maximum(r * TH_s - 1, 0), 0, 0))
        bot_spec = pl.BlockSpec(
            (1, 1, W, self.cin_p),
            lambda n, r: (n, jnp.minimum(r * TH_s + TH_s, H - 1), 0, 0))

        const2 = lambda n, r: (0, 0)         # params stay VMEM-resident
        # NOTE: pipeline_mode=pl.Buffered(1) on these grid-constant param specs
        # would single-buffer them (saves a few MiB for wide hidden dims on
        # v7x); omitted for portability across Pallas versions.

        inputs = [x, x, x]
        in_specs = [top_spec, body_spec, bot_spec]
        if expand:
            inputs += [self.w_expand_p, self.bn_expand_p]
            in_specs += [pl.BlockSpec((self.cin_p, self.chid_p), const2),
                         pl.BlockSpec((2, self.chid_p), const2)]
        inputs += [self.w_dw_p, self.bn_dw_p, self.w_proj_p, self.bn_proj_p]
        in_specs += [pl.BlockSpec((9, self.chid_p), const2),
                     pl.BlockSpec((2, self.chid_p), const2),
                     pl.BlockSpec((self.chid_p, self.cout_p), const2),
                     pl.BlockSpec((2, self.cout_p), const2)]

        out_spec = pl.BlockSpec((1, TH_out, Wo, self.cout_p),
                                lambda n, r: (n, r, 0, 0))

        kernel = functools.partial(
            _inverted_residual_kernel,
            W=W, Wo=Wo, TH_out=TH_out, stride=self.stride,
            expand=expand, use_res=self.use_res_connect)

        y = pl.pallas_call(
            kernel,
            out_shape=jax.ShapeDtypeStruct((N, Ho, Wo, self.cout_p), jnp.float32),
            grid=(N, n_row_blocks),
            in_specs=in_specs,
            out_specs=out_spec,
            scratch_shapes=[pltpu.VMEM((TH_in, W, self.chid_p), jnp.float32)],
            compiler_params=pltpu.CompilerParams(
                dimension_semantics=("parallel", "parallel"),
                vmem_limit_bytes=_VMEM_LIMIT),
        )(*inputs)

        y = y[:, :, :, :self.oup]                      # drop lane padding
        return jnp.transpose(y, (0, 3, 1, 2))          # NHWC -> NCHW


# ------------------------------ JAX reference ---------------------------------

def reference(x_nchw, blk):
    """Pure-JAX (lax.conv) reference for the same folded-BN inference block."""
    bnscale = 1.0 / jnp.sqrt(1.0 + _BN_EPS)

    def conv(x, w, stride=1, pad=0, groups=1):
        return lax.conv_general_dilated(
            x, w, window_strides=(stride, stride),
            padding=[(pad, pad), (pad, pad)],
            dimension_numbers=("NCHW", "OIHW", "NCHW"),
            feature_group_count=groups)

    h = x_nchw
    if blk.expand_ratio != 1:
        w1 = blk.w_expand.T.reshape(blk.hidden, blk.inp, 1, 1)
        h = jnp.clip(conv(h, w1) * bnscale, 0.0, 6.0)
    wd = jnp.transpose(blk.w_dw, (2, 0, 1)).reshape(blk.hidden, 1, 3, 3)
    h = jnp.clip(conv(h, wd, stride=blk.stride, pad=1, groups=blk.hidden) * bnscale,
                 0.0, 6.0)
    w2 = blk.w_proj.T.reshape(blk.oup, blk.hidden, 1, 1)
    h = conv(h, w2) * bnscale
    if blk.use_res_connect:
        h = x_nchw + h
    return h


# ----------------------------------- main --------------------------------------

if __name__ == "__main__":
    key = jax.random.PRNGKey(0)
    k1, k2, k3, kx = jax.random.split(key, 4)

    x = jax.random.normal(kx, (2, 4, 16, 16), jnp.float32)   # NCHW, PyTorch-style

    configs = [
        # (inp, oup, stride, expand_ratio, param_key)
        (4, 4, 1, 2, k1),   # expansion + residual connection, stride 1
        (4, 8, 2, 1, k2),   # expand_ratio == 1 branch, stride 2
        (4, 6, 2, 6, k3),   # expansion, stride 2, no residual
    ]

    for inp, oup, stride, expand_ratio, kp in configs:
        blk = InvertedResidualPallas(inp, oup, stride, expand_ratio, kp)
        y = jax.block_until_ready(blk(x))
        y_ref = jax.block_until_ready(reference(x, blk))
        assert y.shape == y_ref.shape, (y.shape, y_ref.shape)
        err = float(jnp.max(jnp.abs(y - y_ref)))
        # bf16 MXU operands in the kernel vs pure-f32 lax.conv reference
        assert err < 1e-1, err

    print("KERNEL_OK")
</pallas_src>

<mosaic_0001>
module attributes {stable_mosaic.version = 11 : i64} {
  func.func @_inverted_residual_kernel(%arg0: i32, %arg1: i32, %arg2: memref<1x1x16x128xf32, #tpu.memory_space<vmem>>, %arg3: memref<1x16x16x128xf32, #tpu.memory_space<vmem>>, %arg4: memref<1x1x16x128xf32, #tpu.memory_space<vmem>>, %arg5: memref<128x128xbf16, #tpu.memory_space<vmem>>, %arg6: memref<2x128xf32, #tpu.memory_space<vmem>>, %arg7: memref<9x128xf32, #tpu.memory_space<vmem>>, %arg8: memref<2x128xf32, #tpu.memory_space<vmem>>, %arg9: memref<128x128xbf16, #tpu.memory_space<vmem>>, %arg10: memref<2x128xf32, #tpu.memory_space<vmem>>, %arg11: memref<1x16x16x128xf32, #tpu.memory_space<vmem>>, %arg12: memref<18x16x128xf32, #tpu.memory_space<vmem>>) attributes {dimension_semantics = [#tpu.dimension_semantics<parallel>, #tpu.dimension_semantics<parallel>], iteration_bounds = array<i64: 2, 1>, scalar_prefetch = 0 : i64, scratch_operands = 1 : i64, tpu.core_type = #tpu.core_type<tc>, window_params = [{transform_indices = @transform_0, window_bounds = array<i64: 1, 1, 16, 128>}, {transform_indices = @transform_1, window_bounds = array<i64: 1, 16, 16, 128>}, {transform_indices = @transform_2, window_bounds = array<i64: 1, 1, 16, 128>}, {pipeline_mode = #tpu.pipeline_mode<synchronous>, transform_indices = @transform_3, window_bounds = array<i64: 128, 128>}, {pipeline_mode = #tpu.pipeline_mode<synchronous>, transform_indices = @transform_4, window_bounds = array<i64: 2, 128>}, {pipeline_mode = #tpu.pipeline_mode<synchronous>, transform_indices = @transform_5, window_bounds = array<i64: 9, 128>}, {pipeline_mode = #tpu.pipeline_mode<synchronous>, transform_indices = @transform_6, window_bounds = array<i64: 2, 128>}, {pipeline_mode = #tpu.pipeline_mode<synchronous>, transform_indices = @transform_7, window_bounds = array<i64: 128, 128>}, {pipeline_mode = #tpu.pipeline_mode<synchronous>, transform_indices = @transform_8, window_bounds = array<i64: 2, 128>}, {transform_indices = @transform_9, window_bounds = array<i64: 1, 16, 16, 128>}]} {
    %c0 = arith.constant 0 : index
    %c0_0 = arith.constant 0 : index
    %c0_1 = arith.constant 0 : index
    %c0_2 = arith.constant 0 : index
    %0 = vector.load %arg3[%c0, %c0_0, %c0_1, %c0_2] : memref<1x16x16x128xf32, #tpu.memory_space<vmem>>, vector<1x16x16x128xf32>
    %1 = vector.shape_cast %0 : vector<1x16x16x128xf32> to vector<16x16x128xf32>
    %2 = vector.shape_cast %1 : vector<16x16x128xf32> to vector<256x128xf32>
    %3 = arith.truncf %2 : vector<256x128xf32> to vector<256x128xbf16>
    %c0_3 = arith.constant 0 : index
    %c0_4 = arith.constant 0 : index
    %4 = vector.load %arg5[%c0_3, %c0_4] : memref<128x128xbf16, #tpu.memory_space<vmem>>, vector<128x128xbf16>
    %cst = arith.constant dense<0.000000e+00> : vector<256x128xf32>
    %5 = tpu.matmul %3, %4, %cst {dimension_numbers = #tpu.dot_dimension_numbers<[1], [0], [0], [1], [0, 0, 1, 1], [], []>} : vector<256x128xbf16>, vector<128x128xbf16>, vector<256x128xf32> -> vector<256x128xf32>
    %c0_5 = arith.constant 0 : index
    %c0_6 = arith.constant 0 : index
    %6 = vector.load %arg6[%c0_5, %c0_6] : memref<2x128xf32, #tpu.memory_space<vmem>>, vector<1x128xf32>
    %7 = vector.broadcast %6 : vector<1x128xf32> to vector<256x128xf32>
    %8 = arith.mulf %5, %7 : vector<256x128xf32>
    %c1 = arith.constant 1 : index
    %c0_7 = arith.constant 0 : index
    %9 = vector.load %arg6[%c1, %c0_7] : memref<2x128xf32, #tpu.memory_space<vmem>>, vector<1x128xf32>
    %10 = vector.broadcast %9 : vector<1x128xf32> to vector<256x128xf32>
    %11 = arith.addf %8, %10 : vector<256x128xf32>
    %cst_8 = arith.constant 0.000000e+00 : f32
    %cst_9 = arith.constant 6.000000e+00 : f32
    %12 = vector.broadcast %cst_8 : f32 to vector<256x128xf32>
    %13 = arith.maximumf %12, %11 : vector<256x128xf32>
    %14 = vector.broadcast %cst_9 : f32 to vector<256x128xf32>
    %15 = arith.minimumf %14, %13 : vector<256x128xf32>
    %16 = vector.shape_cast %15 : vector<256x128xf32> to vector<16x16x128xf32>
    %c1_10 = arith.constant 1 : index
    %c0_11 = arith.constant 0 : index
    %c0_12 = arith.constant 0 : index
    %17 = vector.load %arg12[%c1_10, %c0_11, %c0_12] : memref<18x16x128xf32, #tpu.memory_space<vmem>>, vector<16x16x128xf32>
    tpu.vector_store %arg12[%c1_10, %c0_11, %c0_12], %16 {strides = array<i32>} : memref<18x16x128xf32, #tpu.memory_space<vmem>>, vector<16x16x128xf32>,
    %c0_13 = arith.constant 0 : index
    %c0_14 = arith.constant 0 : index
    %c0_15 = arith.constant 0 : index
    %c0_16 = arith.constant 0 : index
    %18 = vector.load %arg2[%c0_13, %c0_14, %c0_15, %c0_16] : memref<1x1x16x128xf32, #tpu.memory_space<vmem>>, vector<1x1x16x128xf32>
    %19 = vector.shape_cast %18 : vector<1x1x16x128xf32> to vector<1x16x128xf32>
    %20 = vector.shape_cast %19 : vector<1x16x128xf32> to vector<16x128xf32>
    %21 = arith.truncf %20 : vector<16x128xf32> to vector<16x128xbf16>
    %c0_17 = arith.constant 0 : index
    %c0_18 = arith.constant 0 : index
    %22 = vector.load %arg5[%c0_17, %c0_18] : memref<128x128xbf16, #tpu.memory_space<vmem>>, vector<128x128xbf16>
    %cst_19 = arith.constant dense<0.000000e+00> : vector<16x128xf32>
    %23 = tpu.matmul %21, %22, %cst_19 {dimension_numbers = #tpu.dot_dimension_numbers<[1], [0], [0], [1], [0, 0, 1, 1], [], []>} : vector<16x128xbf16>, vector<128x128xbf16>, vector<16x128xf32> -> vector<16x128xf32>
    %c0_20 = arith.constant 0 : index
    %c0_21 = arith.constant 0 : index
    %24 = vector.load %arg6[%c0_20, %c0_21] : memref<2x128xf32, #tpu.memory_space<vmem>>, vector<1x128xf32>
    %25 = vector.broadcast %24 : vector<1x128xf32> to vector<16x128xf32>
    %26 = arith.mulf %23, %25 : vector<16x128xf32>
    %c1_22 = arith.constant 1 : index
    %c0_23 = arith.constant 0 : index
    %27 = vector.load %arg6[%c1_22, %c0_23] : memref<2x128xf32, #tpu.memory_space<vmem>>, vector<1x128xf32>
    %28 = vector.broadcast %27 : vector<1x128xf32> to vector<16x128xf32>
    %29 = arith.addf %26, %28 : vector<16x128xf32>
    %cst_24 = arith.constant 0.000000e+00 : f32
    %cst_25 = arith.constant 6.000000e+00 : f32
    %30 = vector.broadcast %cst_24 : f32 to vector<16x128xf32>
    %31 = arith.maximumf %30, %29 : vector<16x128xf32>
    %32 = vector.broadcast %cst_25 : f32 to vector<16x128xf32>
    %33 = arith.minimumf %32, %31 : vector<16x128xf32>
    %34 = vector.shape_cast %33 : vector<16x128xf32> to vector<1x16x128xf32>
    %c0_i32 = arith.constant 0 : i32
    %35 = arith.cmpi sgt, %arg1, %c0_i32 : i32
    %36 = arith.extui %35 : i1 to i32
    %37 = arith.sitofp %36 : i32 to f32
    %38 = vector.broadcast %37 : f32 to vector<1x16x128xf32>
    %39 = arith.mulf %34, %38 : vector<1x16x128xf32>
    %c0_26 = arith.constant 0 : index
    %c0_27 = arith.constant 0 : index
    %c0_28 = arith.constant 0 : index
    %40 = vector.load %arg12[%c0_26, %c0_27, %c0_28] : memref<18x16x128xf32, #tpu.memory_space<vmem>>, vector<1x16x128xf32>
    tpu.vector_store %arg12[%c0_26, %c0_27, %c0_28], %39 {strides = array<i32>} : memref<18x16x128xf32, #tpu.memory_space<vmem>>, vector<1x16x128xf32>,
    %c0_29 = arith.constant 0 : index
    %c0_30 = arith.constant 0 : index
    %c0_31 = arith.constant 0 : index
    %c0_32 = arith.constant 0 : index
    %41 = vector.load %arg4[%c0_29, %c0_30, %c0_31, %c0_32] : memref<1x1x16x128xf32, #tpu.memory_space<vmem>>, vector<1x1x16x128xf32>
    %42 = vector.shape_cast %41 : vector<1x1x16x128xf32> to vector<1x16x128xf32>
    %43 = vector.shape_cast %42 : vector<1x16x128xf32> to vector<16x128xf32>
    %44 = arith.truncf %43 : vector<16x128xf32> to vector<16x128xbf16>
    %c0_33 = arith.constant 0 : index
    %c0_34 = arith.constant 0 : index
    %45 = vector.load %arg5[%c0_33, %c0_34] : memref<128x128xbf16, #tpu.memory_space<vmem>>, vector<128x128xbf16>
    %cst_35 = arith.constant dense<0.000000e+00> : vector<16x128xf32>
    %46 = tpu.matmul %44, %45, %cst_35 {dimension_numbers = #tpu.dot_dimension_numbers<[1], [0], [0], [1], [0, 0, 1, 1], [], []>} : vector<16x128xbf16>, vector<128x128xbf16>, vector<16x128xf32> -> vector<16x128xf32>
    %c0_36 = arith.constant 0 : index
    %c0_37 = arith.constant 0 : index
    %47 = vector.load %arg6[%c0_36, %c0_37] : memref<2x128xf32, #tpu.memory_space<vmem>>, vector<1x128xf32>
    %48 = vector.broadcast %47 : vector<1x128xf32> to vector<16x128xf32>
    %49 = arith.mulf %46, %48 : vector<16x128xf32>
    %c1_38 = arith.constant 1 : index
    %c0_39 = arith.constant 0 : index
    %50 = vector.load %arg6[%c1_38, %c0_39] : memref<2x128xf32, #tpu.memory_space<vmem>>, vector<1x128xf32>
    %51 = vector.broadcast %50 : vector<1x128xf32> to vector<16x128xf32>
    %52 = arith.addf %49, %51 : vector<16x128xf32>
    %cst_40 = arith.constant 0.000000e+00 : f32
    %cst_41 = arith.constant 6.000000e+00 : f32
    %53 = vector.broadcast %cst_40 : f32 to vector<16x128xf32>
    %54 = arith.maximumf %53, %52 : vector<16x128xf32>
    %55 = vector.broadcast %cst_41 : f32 to vector<16x128xf32>
    %56 = arith.minimumf %55, %54 : vector<16x128xf32>
    %57 = vector.shape_cast %56 : vector<16x128xf32> to vector<1x16x128xf32>
    %c0_i32_42 = arith.constant 0 : i32
    %58 = arith.cmpi slt, %arg1, %c0_i32_42 : i32
    %59 = arith.extui %58 : i1 to i32
    %60 = arith.sitofp %59 : i32 to f32
    %61 = vector.broadcast %60 : f32 to vector<1x16x128xf32>
    %62 = arith.mulf %57, %61 : vector<1x16x128xf32>
    %c17 = arith.constant 17 : index
    %c0_43 = arith.constant 0 : index
    %c0_44 = arith.constant 0 : index
    %63 = vector.load %arg12[%c17, %c0_43, %c0_44] : memref<18x16x128xf32, #tpu.memory_space<vmem>>, vector<1x16x128xf32>
    tpu.vector_store %arg12[%c17, %c0_43, %c0_44], %62 {strides = array<i32>} : memref<18x16x128xf32, #tpu.memory_space<vmem>>, vector<1x16x128xf32>,
    %c0_45 = arith.constant 0 : index
    %c0_46 = arith.constant 0 : index
    %c0_47 = arith.constant 0 : index
    %64 = vector.load %arg12[%c0_45, %c0_46, %c0_47] : memref<18x16x128xf32, #tpu.memory_space<vmem>>, vector<18x16x128xf32>
    %65 = tpu.iota {dimensions = array<i32: 0>} : vector<16x1xi32>
    %c1_i32 = arith.constant 1 : i32
    %66 = vector.broadcast %c1_i32 : i32 to vector<16x1xi32>
    %67 = arith.cmpi sge, %65, %66 : vector<16x1xi32>
    %c1_i32_48 = arith.constant 1 : i32
    %68 = tpu.dynamic_rotate %64 by %c1_i32_48 dim 1 : vector<18x16x128xf32>, i32 -> vector<18x16x128xf32>
    %cst_49 = arith.constant 0.000000e+00 : f32
    %69 = vector.shape_cast %67 : vector<16x1xi1> to vector<1x16x1xi1>
    %70 = vector.broadcast %69 : vector<1x16x1xi1> to vector<18x16x128xi1>
    %71 = vector.broadcast %cst_49 : f32 to vector<18x16x128xf32>
    %72 = arith.select %70, %68, %71 : vector<18x16x128xi1>, vector<18x16x128xf32>
    %c14_i32 = arith.constant 14 : i32
    %73 = vector.broadcast %c14_i32 : i32 to vector<16x1xi32>
    %74 = arith.cmpi sle, %65, %73 : vector<16x1xi32>
    %c15_i32 = arith.constant 15 : i32
    %75 = tpu.dynamic_rotate %64 by %c15_i32 dim 1 : vector<18x16x128xf32>, i32 -> vector<18x16x128xf32>
    %cst_50 = arith.constant 0.000000e+00 : f32
    %76 = vector.shape_cast %74 : vector<16x1xi1> to vector<1x16x1xi1>
    %77 = vector.broadcast %76 : vector<1x16x1xi1> to vector<18x16x128xi1>
    %78 = vector.broadcast %cst_50 : f32 to vector<18x16x128xf32>
    %79 = arith.select %77, %75, %78 : vector<18x16x128xi1>, vector<18x16x128xf32>
    %80 = vector.extract_strided_slice %72 {offsets = [0, 0, 0], sizes = [16, 16, 128], strides = [1, 1, 1]} : vector<18x16x128xf32> to vector<16x16x128xf32>
    %c0_51 = arith.constant 0 : index
    %c0_52 = arith.constant 0 : index
    %81 = vector.load %arg7[%c0_51, %c0_52] : memref<9x128xf32, #tpu.memory_space<vmem>>, vector<1x128xf32>
    %82 = vector.shape_cast %80 : vector<16x16x128xf32> to vector<256x128xf32>
    %83 = vector.broadcast %81 : vector<1x128xf32> to vector<256x128xf32>
    %84 = arith.mulf %82, %83 : vector<256x128xf32>
    %85 = vector.extract_strided_slice %64 {offsets = [0, 0, 0], sizes = [16, 16, 128], strides = [1, 1, 1]} : vector<18x16x128xf32> to vector<16x16x128xf32>
    %c1_53 = arith.constant 1 : index
    %c0_54 = arith.constant 0 : index
    %86 = vector.load %arg7[%c1_53, %c0_54] : memref<9x128xf32, #tpu.memory_space<vmem>>, vector<1x128xf32>
    %87 = vector.shape_cast %85 : vector<16x16x128xf32> to vector<256x128xf32>
    %88 = vector.broadcast %86 : vector<1x128xf32> to vector<256x128xf32>
    %89 = arith.mulf %87, %88 : vector<256x128xf32>
    %90 = arith.addf %84, %89 : vector<256x128xf32>
    %91 = vector.extract_strided_slice %79 {offsets = [0, 0, 0], sizes = [16, 16, 128], strides = [1, 1, 1]} : vector<18x16x128xf32> to vector<16x16x128xf32>
    %c2 = arith.constant 2 : index
    %c0_55 = arith.constant 0 : index
    %92 = vector.load %arg7[%c2, %c0_55] : memref<9x128xf32, #tpu.memory_space<vmem>>, vector<1x128xf32>
    %93 = vector.shape_cast %91 : vector<16x16x128xf32> to vector<256x128xf32>
    %94 = vector.broadcast %92 : vector<1x128xf32> to vector<256x128xf32>
    %95 = arith.mulf %93, %94 : vector<256x128xf32>
    %96 = arith.addf %90, %95 : vector<256x128xf32>
    %97 = vector.extract_strided_slice %72 {offsets = [1, 0, 0], sizes = [16, 16, 128], strides = [1, 1, 1]} : vector<18x16x128xf32> to vector<16x16x128xf32>
    %c3 = arith.constant 3 : index
    %c0_56 = arith.constant 0 : index
    %98 = vector.load %arg7[%c3, %c0_56] : memref<9x128xf32, #tpu.memory_space<vmem>>, vector<1x128xf32>
    %99 = vector.shape_cast %97 : vector<16x16x128xf32> to vector<256x128xf32>
    %100 = vector.broadcast %98 : vector<1x128xf32> to vector<256x128xf32>
    %101 = arith.mulf %99, %100 : vector<256x128xf32>
    %102 = arith.addf %96, %101 : vector<256x128xf32>
    %103 = vector.extract_strided_slice %64 {offsets = [1, 0, 0], sizes = [16, 16, 128], strides = [1, 1, 1]} : vector<18x16x128xf32> to vector<16x16x128xf32>
    %c4 = arith.constant 4 : index
    %c0_57 = arith.constant 0 : index
    %104 = vector.load %arg7[%c4, %c0_57] : memref<9x128xf32, #tpu.memory_space<vmem>>, vector<1x128xf32>
    %105 = vector.shape_cast %103 : vector<16x16x128xf32> to vector<256x128xf32>
    %106 = vector.broadcast %104 : vector<1x128xf32> to vector<256x128xf32>
    %107 = arith.mulf %105, %106 : vector<256x128xf32>
    %108 = arith.addf %102, %107 : vector<256x128xf32>
    %109 = vector.extract_strided_slice %79 {offsets = [1, 0, 0], sizes = [16, 16, 128], strides = [1, 1, 1]} : vector<18x16x128xf32> to vector<16x16x128xf32>
    %c5 = arith.constant 5 : index
    %c0_58 = arith.constant 0 : index
    %110 = vector.load %arg7[%c5, %c0_58] : memref<9x128xf32, #tpu.memory_space<vmem>>, vector<1x128xf32>
    %111 = vector.shape_cast %109 : vector<16x16x128xf32> to vector<256x128xf32>
    %112 = vector.broadcast %110 : vector<1x128xf32> to vector<256x128xf32>
    %113 = arith.mulf %111, %112 : vector<256x128xf32>
    %114 = arith.addf %108, %113 : vector<256x128xf32>
    %115 = vector.extract_strided_slice %72 {offsets = [2, 0, 0], sizes = [16, 16, 128], strides = [1, 1, 1]} : vector<18x16x128xf32> to vector<16x16x128xf32>
    %c6 = arith.constant 6 : index
    %c0_59 = arith.constant 0 : index
    %116 = vector.load %arg7[%c6, %c0_59] : memref<9x128xf32, #tpu.memory_space<vmem>>, vector<1x128xf32>
    %117 = vector.shape_cast %115 : vector<16x16x128xf32> to vector<256x128xf32>
    %118 = vector.broadcast %116 : vector<1x128xf32> to vector<256x128xf32>
    %119 = arith.mulf %117, %118 : vector<256x128xf32>
    %120 = arith.addf %114, %119 : vector<256x128xf32>
    %121 = vector.extract_strided_slice %64 {offsets = [2, 0, 0], sizes = [16, 16, 128], strides = [1, 1, 1]} : vector<18x16x128xf32> to vector<16x16x128xf32>
    %c7 = arith.constant 7 : index
    %c0_60 = arith.constant 0 : index
    %122 = vector.load %arg7[%c7, %c0_60] : memref<9x128xf32, #tpu.memory_space<vmem>>, vector<1x128xf32>
    %123 = vector.shape_cast %121 : vector<16x16x128xf32> to vector<256x128xf32>
    %124 = vector.broadcast %122 : vector<1x128xf32> to vector<256x128xf32>
    %125 = arith.mulf %123, %124 : vector<256x128xf32>
    %126 = arith.addf %120, %125 : vector<256x128xf32>
    %127 = vector.extract_strided_slice %79 {offsets = [2, 0, 0], sizes = [16, 16, 128], strides = [1, 1, 1]} : vector<18x16x128xf32> to vector<16x16x128xf32>
    %c8 = arith.constant 8 : index
    %c0_61 = arith.constant 0 : index
    %128 = vector.load %arg7[%c8, %c0_61] : memref<9x128xf32, #tpu.memory_space<vmem>>, vector<1x128xf32>
    %129 = vector.shape_cast %127 : vector<16x16x128xf32> to vector<256x128xf32>
    %130 = vector.broadcast %128 : vector<1x128xf32> to vector<256x128xf32>
    %131 = arith.mulf %129, %130 : vector<256x128xf32>
    %132 = arith.addf %126, %131 : vector<256x128xf32>
    %c0_62 = arith.constant 0 : index
    %c0_63 = arith.constant 0 : index
    %133 = vector.load %arg8[%c0_62, %c0_63] : memref<2x128xf32, #tpu.memory_space<vmem>>, vector<1x128xf32>
    %134 = vector.broadcast %133 : vector<1x128xf32> to vector<256x128xf32>
    %135 = arith.mulf %132, %134 : vector<256x128xf32>
    %c1_64 = arith.constant 1 : index
    %c0_65 = arith.constant 0 : index
    %136 = vector.load %arg8[%c1_64, %c0_65] : memref<2x128xf32, #tpu.memory_space<vmem>>, vector<1x128xf32>
    %137 = vector.broadcast %136 : vector<1x128xf32> to vector<256x128xf32>
    %138 = arith.addf %135, %137 : vector<256x128xf32>
    %cst_66 = arith.constant 0.000000e+00 : f32
    %cst_67 = arith.constant 6.000000e+00 : f32
    %139 = vector.broadcast %cst_66 : f32 to vector<256x128xf32>
    %140 = arith.maximumf %139, %138 : vector<256x128xf32>
    %141 = vector.broadcast %cst_67 : f32 to vector<256x128xf32>
    %142 = arith.minimumf %141, %140 : vector<256x128xf32>
    %143 = arith.truncf %142 : vector<256x128xf32> to vector<256x128xbf16>
    %c0_68 = arith.constant 0 : index
    %c0_69 = arith.constant 0 : index
    %144 = vector.load %arg9[%c0_68, %c0_69] : memref<128x128xbf16, #tpu.memory_space<vmem>>, vector<128x128xbf16>
    %cst_70 = arith.constant dense<0.000000e+00> : vector<256x128xf32>
    %145 = tpu.matmul %143, %144, %cst_70 {dimension_numbers = #tpu.dot_dimension_numbers<[1], [0], [0], [1], [0, 0, 1, 1], [], []>} : vector<256x128xbf16>, vector<128x128xbf16>, vector<256x128xf32> -> vector<256x128xf32>
    %c0_71 = arith.constant 0 : index
    %c0_72 = arith.constant 0 : index
    %146 = vector.load %arg10[%c0_71, %c0_72] : memref<2x128xf32, #tpu.memory_space<vmem>>, vector<1x128xf32>
    %147 = vector.broadcast %146 : vector<1x128xf32> to vector<256x128xf32>
    %148 = arith.mulf %145, %147 : vector<256x128xf32>
    %c1_73 = arith.constant 1 : index
    %c0_74 = arith.constant 0 : index
    %149 = vector.load %arg10[%c1_73, %c0_74] : memref<2x128xf32, #tpu.memory_space<vmem>>, vector<1x128xf32>
    %150 = vector.broadcast %149 : vector<1x128xf32> to vector<256x128xf32>
    %151 = arith.addf %148, %150 : vector<256x128xf32>
    %c0_75 = arith.constant 0 : index
    %c0_76 = arith.constant 0 : index
    %c0_77 = arith.constant 0 : index
    %c0_78 = arith.constant 0 : index
    %152 = vector.load %arg3[%c0_75, %c0_76, %c0_77, %c0_78] : memref<1x16x16x128xf32, #tpu.memory_space<vmem>>, vector<1x16x16x128xf32>
    %153 = vector.shape_cast %152 : vector<1x16x16x128xf32> to vector<16x16x128xf32>
    %154 = vector.shape_cast %153 : vector<16x16x128xf32> to vector<256x128xf32>
    %155 = arith.addf %151, %154 : vector<256x128xf32>
    %156 = vector.shape_cast %155 : vector<256x128xf32> to vector<16x16x128xf32>
    %c0_79 = arith.constant 0 : index
    %c0_80 = arith.constant 0 : index
    %c0_81 = arith.constant 0 : index
    %c0_82 = arith.constant 0 : index
    %157 = vector.load %arg11[%c0_79, %c0_80, %c0_81, %c0_82] : memref<1x16x16x128xf32, #tpu.memory_space<vmem>>, vector<1x16x16x128xf32>
    %158 = vector.shape_cast %157 : vector<1x16x16x128xf32> to vector<16x16x128xf32>
    %159 = vector.shape_cast %156 : vector<16x16x128xf32> to vector<1x16x16x128xf32>
    tpu.vector_store %arg11[%c0_79, %c0_80, %c0_81, %c0_82], %159 {strides = array<i32>} : memref<1x16x16x128xf32, #tpu.memory_space<vmem>>, vector<1x16x16x128xf32>,
    return
  }
  func.func @transform_0(%arg0: i32, %arg1: i32) -> (i32, i32, i32, i32) {
    %c16_i32 = arith.constant 16 : i32
    %0 = arith.muli %arg1, %c16_i32 : i32
    %c1_i32 = arith.constant 1 : i32
    %1 = arith.subi %0, %c1_i32 : i32
    %c0_i32 = arith.constant 0 : i32
    %2 = arith.maxsi %1, %c0_i32 : i32
    %c0_i32_0 = arith.constant 0 : i32
    %c0_i32_1 = arith.constant 0 : i32
    %c0_i32_2 = arith.constant 0 : i32
    return %arg0, %2, %c0_i32_0, %c0_i32_1 : i32, i32, i32, i32
  }
  func.func @transform_1(%arg0: i32, %arg1: i32) -> (i32, i32, i32, i32) {
    %c0_i32 = arith.constant 0 : i32
    %c0_i32_0 = arith.constant 0 : i32
    %c0_i32_1 = arith.constant 0 : i32
    return %arg0, %arg1, %c0_i32, %c0_i32_0 : i32, i32, i32, i32
  }
  func.func @transform_2(%arg0: i32, %arg1: i32) -> (i32, i32, i32, i32) {
    %c16_i32 = arith.constant 16 : i32
    %0 = arith.muli %arg1, %c16_i32 : i32
    %c16_i32_0 = arith.constant 16 : i32
    %1 = arith.addi %0, %c16_i32_0 : i32
    %c15_i32 = arith.constant 15 : i32
    %2 = arith.minsi %1, %c15_i32 : i32
    %c0_i32 = arith.constant 0 : i32
    %c0_i32_1 = arith.constant 0 : i32
    %c0_i32_2 = arith.constant 0 : i32
    return %arg0, %2, %c0_i32, %c0_i32_1 : i32, i32, i32, i32
  }
  func.func @transform_3(%arg0: i32, %arg1: i32) -> (i32, i32) {
    %c0_i32 = arith.constant 0 : i32
    %c0_i32_0 = arith.constant 0 : i32
    %c0_i32_1 = arith.constant 0 : i32
    return %c0_i32, %c0_i32_0 : i32, i32
  }
  func.func @transform_4(%arg0: i32, %arg1: i32) -> (i32, i32) {
    %c0_i32 = arith.constant 0 : i32
    %c0_i32_0 = arith.constant 0 : i32
    %c0_i32_1 = arith.constant 0 : i32
    return %c0_i32, %c0_i32_0 : i32, i32
  }
  func.func @transform_5(%arg0: i32, %arg1: i32) -> (i32, i32) {
    %c0_i32 = arith.constant 0 : i32
    %c0_i32_0 = arith.constant 0 : i32
    %c0_i32_1 = arith.constant 0 : i32
    return %c0_i32, %c0_i32_0 : i32, i32
  }
  func.func @transform_6(%arg0: i32, %arg1: i32) -> (i32, i32) {
    %c0_i32 = arith.constant 0 : i32
    %c0_i32_0 = arith.constant 0 : i32
    %c0_i32_1 = arith.constant 0 : i32
    return %c0_i32, %c0_i32_0 : i32, i32
  }
  func.func @transform_7(%arg0: i32, %arg1: i32) -> (i32, i32) {
    %c0_i32 = arith.constant 0 : i32
    %c0_i32_0 = arith.constant 0 : i32
    %c0_i32_1 = arith.constant 0 : i32
    return %c0_i32, %c0_i32_0 : i32, i32
  }
  func.func @transform_8(%arg0: i32, %arg1: i32) -> (i32, i32) {
    %c0_i32 = arith.constant 0 : i32
    %c0_i32_0 = arith.constant 0 : i32
    %c0_i32_1 = arith.constant 0 : i32
    return %c0_i32, %c0_i32_0 : i32, i32
  }
  func.func @transform_9(%arg0: i32, %arg1: i32) -> (i32, i32, i32, i32) {
    %c0_i32 = arith.constant 0 : i32
    %c0_i32_0 = arith.constant 0 : i32
    %c0_i32_1 = arith.constant 0 : i32
    return %arg0, %arg1, %c0_i32, %c0_i32_0 : i32, i32, i32, i32
  }
}

</mosaic_0001>

<llo_original>
// kernel: tpu_custom_call.1
$region0: #{tpu_custom_call.1}
  #allocation0 [shape = 'u32[]', space=smem, size = 0x4, offset = 0x4, fixed_abs, tag = 'smem constant byte address 0x4 - core index']
  #allocation1 [shape = 'u32[144,128]{1,0:T(1,128)}', space=vmem, size = 0x12000, scoped, tag = 'internal scratch']
  #allocation2 [shape = 'f32[18,16,128]{2,1,0:T(8,128)}', space=vmem, size = 0x24000, scoped, tag = 'scratch operand']
  %s0 = inlined_call_operand.hbm [shape: f32[2,16,16,128], index: 0, kind: input, shape index: {}]
  %s1 = inlined_call_operand.hbm [shape: f32[2,16,16,128], index: 1, kind: input, shape index: {}]
  %s2 = inlined_call_operand.hbm [shape: f32[2,16,16,128], index: 2, kind: input, shape index: {}]
  %s3 = inlined_call_operand.hbm [shape: bf16[128,128], index: 3, kind: input, shape index: {}]
  %s4 = inlined_call_operand.vmem [shape: f32[2,128], index: 4, kind: input, shape index: {}]
  %s5 = inlined_call_operand.hbm [shape: f32[9,128], index: 5, kind: input, shape index: {}]
  %s6 = inlined_call_operand.vmem [shape: f32[2,128], index: 6, kind: input, shape index: {}]
  %s7 = inlined_call_operand.hbm [shape: bf16[128,128], index: 7, kind: input, shape index: {}]
  %s8 = inlined_call_operand.vmem [shape: f32[2,128], index: 8, kind: input, shape index: {}]
  %s9 = inlined_call_operand.hbm [shape: f32[2,16,16,128], index: 9, kind: output, shape index: {}]
  %s10 = sld [smem:[#allocation0]]
  $region93: #{tpu_custom_call.1} parent=0
    _
  %s12 = ssub.s32 1, %s10
  %s13 = scalar_select 0, %s12, %s10
  $region1: #{tpu_custom_call.1} parent=0
    #allocation3 [shape = 'u8[16384]{0}', space=vmem, size = 0x4000, scoped, tag = 'input window, operand 0']
    #allocation4 [shape = 's32[2]{0}', space=sflag, size = 0x8, scoped, tag = 'scoped memory for tpu_custom_call.1']
    #allocation5 [shape = 's32[2]{0}', space=sflag, size = 0x8, scoped, tag = 'scoped memory for tpu_custom_call.1']
    #allocation6 [shape = 'u8[262144]{0}', space=vmem, size = 0x40000, scoped, tag = 'input window, operand 1']
    #allocation7 [shape = 's32[2]{0}', space=sflag, size = 0x8, scoped, tag = 'scoped memory for tpu_custom_call.1']
    #allocation8 [shape = 'u8[16384]{0}', space=vmem, size = 0x4000, scoped, tag = 'input window, operand 2']
    #allocation9 [shape = 'u8[32768]{0}', space=vmem, size = 0x8000, scoped, tag = 'input window, operand 3, single buffered']
    #allocation10 [shape = 's32[1]{0}', space=sflag, size = 0x4, scoped, tag = 'scoped memory for tpu_custom_call.1']
    #allocation11 [shape = 'u8[8192]{0}', space=vmem, size = 0x2000, scoped, tag = 'input window, operand 5, single buffered']
    #allocation12 [shape = 'u8[32768]{0}', space=vmem, size = 0x8000, scoped, tag = 'input window, operand 7, single buffered']
    #allocation13 [shape = 's32[1]{0}', space=sflag, size = 0x4, scoped, tag = 'scoped memory for tpu_custom_call.1']
    #allocation14 [shape = 'u8[262144]{0}', space=vmem, size = 0x40000, scoped, tag = 'output window, operand 0']
    %14 = vsyncpa [#allocation4], 0
    %s15 = scalar_lea.sflag [#allocation4], 1
    %16 = vsyncpa %s15, 0
    %17 = vsyncpa [#allocation7], 0
    %s18 = scalar_lea.sflag [#allocation7], 1
    %19 = vsyncpa %s18, 0
    %20 = vsyncpa [#allocation10], 0
    %21 = vsyncpa [#allocation13], 0
    %22 = vsyncpa [#allocation5], 0
    %s23 = scalar_lea.sflag [#allocation5], 1
    %24 = vsyncpa %s23, 0
    loop: start=0, step=1, limit=4
    $region2: #{tpu_custom_call.1} parent=1 // loop_pre_header
      _
    $region3: #{tpu_custom_call.1} parent=1 // loop_header
      %s26 = sphi 0, %s30
      %p27 = scmp.ge.s32.totalorder %s26, 4
      %s33 = sphi 0, %s45
      %s34 = sphi 0, %s41
      %s35 = sphi 0, %s33
      %s36 = sphi 0, %s34
      %s37 = sphi 0, %s35
      %s38 = sphi 0, %s36
      %s58 = sphi 0, %s60
      %s61 = sphi 0, %s58
      %s62 = sphi 0, %s61
      %s78 = sphi 0, %s62
      %s86 = sphi 0, %s88
      %s89 = sphi 0, %s86
      %s90 = sphi 0, %s89
      %s106 = sphi 0, %s90
      %s122 = sphi 0, %s124
      %s125 = sphi 0, %s122
      %s126 = sphi 0, %s125
      %s142 = sphi 0, %s126
      %s146 = sphi 0, %s146
      %s148 = sphi 0, %s146
      %s149 = sphi 0, %s148
      %s163 = sphi 0, %s149
      %s167 = sphi 0, %s167
      %s169 = sphi 0, %s167
      %s170 = sphi 0, %s169
      %s184 = sphi 0, %s170
      %s188 = sphi 0, %s188
      %s190 = sphi 0, %s188
      %s191 = sphi 0, %s190
      %s205 = sphi 0, %s191
      %s209 = sphi 0, %s209
      %s211 = sphi 0, %s209
      %s212 = sphi 0, %s211
      %s226 = sphi 0, %s212
      %s230 = sphi 0, %s230
      %s232 = sphi 0, %s230
      %s233 = sphi 0, %s232
      %s247 = sphi 0, %s233
      %s251 = sphi 0, %s251
      %s253 = sphi 0, %s251
      %s254 = sphi 0, %s253
      %s268 = sphi 0, %s254
      %s276 = sphi 0, %s278
      %s279 = sphi 0, %s276
      %s280 = sphi 0, %s279
      %s296 = sphi 0, %s280
    $region4: #{tpu_custom_call.1} parent=1 // loop_header_branch
      %29 = sbr.rel (%p27) target = $region8
    $region5: #{tpu_custom_call.1} parent=1 // loop_body
      %s31 = ssub.s32 %s26, 1
      %s32 = ssub.s32 %s26, 2
      %s39 = sadd.s32 1, %s34
      %p40 = scmp.ge.s32.totalorder %s39, 1
      %s41 = scalar_select %p40, 0, %s39
      %s42 = sadd.s32 1, %s33
      %s43 = scalar_select %p40, %s42, %s33
      %p44 = scmp.ge.s32.totalorder %s43, 2
      %s45 = scalar_select %p44, 0, %s43
      %s46 = smul.u32 %s34, 16
      %s47 = ssub.s32 %s46, 1
      %p48 = scmp.gt.s32.totalorder %s47, 0
      %s49 = scalar_select %p48, %s47, 0
      %s50 = smul.u32 %s41, 16
      %s51 = ssub.s32 %s50, 1
      %p52 = scmp.gt.s32.totalorder %s51, 0
      %s53 = scalar_select %p52, %s51, 0
      %s54 = ssub.s32 %s33, %s45
      %s55 = ssub.s32 %s49, %s53
      %s56 = sor.u32 %s54, %s55
      %p57 = scmp.eq.s32.totalorder %s56, 0
      %s59 = sadd.s32 %s58, 1
      %s60 = scalar_select %p57, %s58, %s59
      %p63 = pneg %p57
      %p64 = scmp.eq.s32.totalorder %s26, 1
      %p65 = por %p63, %p64
      %p66 = scmp.ne.s32.totalorder %s58, %s61
      %p67 = scmp.eq.s32.totalorder %s26, 0
      %p68 = por %p66, %p67
      %p69 = scmp.ne.s32.totalorder %s58, %s61
      %p70 = scmp.eq.s32.totalorder %s31, 1
      %p71 = por %p69, %p70
      %p72 = scmp.ne.s32.totalorder %s61, %s62
      %p73 = scmp.eq.s32.totalorder %s31, 0
      %p74 = por %p72, %p73
      %p75 = scmp.ne.s32.totalorder %s61, %s62
      %p76 = scmp.eq.s32.totalorder %s32, 1
      %p77 = por %p75, %p76
      %p79 = scmp.ne.s32.totalorder %s62, %s78
      %p80 = scmp.eq.s32.totalorder %s32, 0
      %p81 = por %p79, %p80
      %s82 = ssub.s32 %s33, %s45
      %s83 = ssub.s32 %s34, %s41
      %s84 = sor.u32 %s82, %s83
      %p85 = scmp.eq.s32.totalorder %s84, 0
      %s87 = sadd.s32 %s86, 1
      %s88 = scalar_select %p85, %s86, %s87
      %p91 = pneg %p85
      %p92 = scmp.eq.s32.totalorder %s26, 1
      %p93 = por %p91, %p92
      %p94 = scmp.ne.s32.totalorder %s86, %s89
      %p95 = scmp.eq.s32.totalorder %s26, 0
      %p96 = por %p94, %p95
      %p97 = scmp.ne.s32.totalorder %s86, %s89
      %p98 = scmp.eq.s32.totalorder %s31, 1
      %p99 = por %p97, %p98
      %p100 = scmp.ne.s32.totalorder %s89, %s90
      %p101 = scmp.eq.s32.totalorder %s31, 0
      %p102 = por %p100, %p101
      %p103 = scmp.ne.s32.totalorder %s89, %s90
      %p104 = scmp.eq.s32.totalorder %s32, 1
      %p105 = por %p103, %p104
      %p107 = scmp.ne.s32.totalorder %s90, %s106
      %p108 = scmp.eq.s32.totalorder %s32, 0
      %p109 = por %p107, %p108
      %s110 = smul.u32 %s34, 16
      %s111 = sadd.s32 %s110, 16
      %p112 = scmp.lt.s32.totalorder %s111, 15
      %s113 = scalar_select %p112, %s111, 15
      %s114 = smul.u32 %s41, 16
      %s115 = sadd.s32 %s114, 16
      %p116 = scmp.lt.s32.totalorder %s115, 15
      %s117 = scalar_select %p116, %s115, 15
      %s118 = ssub.s32 %s33, %s45
      %s119 = ssub.s32 %s113, %s117
      %s120 = sor.u32 %s118, %s119
      %p121 = scmp.eq.s32.totalorder %s120, 0
      %s123 = sadd.s32 %s122, 1
      %s124 = scalar_select %p121, %s122, %s123
      %p127 = pneg %p121
      %p128 = scmp.eq.s32.totalorder %s26, 1
      %p129 = por %p127, %p128
      %p130 = scmp.ne.s32.totalorder %s122, %s125
      %p131 = scmp.eq.s32.totalorder %s26, 0
      %p132 = por %p130, %p131
      %p133 = scmp.ne.s32.totalorder %s122, %s125
      %p134 = scmp.eq.s32.totalorder %s31, 1
      %p135 = por %p133, %p134
      %p136 = scmp.ne.s32.totalorder %s125, %s126
      %p137 = scmp.eq.s32.totalorder %s31, 0
      %p138 = por %p136, %p137
      %p139 = scmp.ne.s32.totalorder %s125, %s126
      %p140 = scmp.eq.s32.totalorder %s32, 1
      %p141 = por %p139, %p140
      %p143 = scmp.ne.s32.totalorder %s126, %s142
      %p144 = scmp.eq.s32.totalorder %s32, 0
      %p145 = por %p143, %p144
      %s147 = sadd.s32 %s146, 1
      %p150 = scmp.eq.s32.totalorder %s26, 1
      %p151 = scmp.ne.s32.totalorder %s146, %s148
      %p152 = scmp.eq.s32.totalorder %s26, 0
      %p153 = por %p151, %p152
      %p154 = scmp.ne.s32.totalorder %s146, %s148
      %p155 = scmp.eq.s32.totalorder %s31, 1
      %p156 = por %p154, %p155
      %p157 = scmp.ne.s32.totalorder %s148, %s149
      %p158 = scmp.eq.s32.totalorder %s31, 0
      %p159 = por %p157, %p158
      %p160 = scmp.ne.s32.totalorder %s148, %s149
      %p161 = scmp.eq.s32.totalorder %s32, 1
      %p162 = por %p160, %p161
      %p164 = scmp.ne.s32.totalorder %s149, %s163
      %p165 = scmp.eq.s32.totalorder %s32, 0
      %p166 = por %p164, %p165
      %s168 = sadd.s32 %s167, 1
      %p171 = scmp.eq.s32.totalorder %s26, 1
      %p172 = scmp.ne.s32.totalorder %s167, %s169
      %p173 = scmp.eq.s32.totalorder %s26, 0
      %p174 = por %p172, %p173
      %p175 = scmp.ne.s32.totalorder %s167, %s169
      %p176 = scmp.eq.s32.totalorder %s31, 1
      %p177 = por %p175, %p176
      %p178 = scmp.ne.s32.totalorder %s169, %s170
      %p179 = scmp.eq.s32.totalorder %s31, 0
      %p180 = por %p178, %p179
      %p181 = scmp.ne.s32.totalorder %s169, %s170
      %p182 = scmp.eq.s32.totalorder %s32, 1
      %p183 = por %p181, %p182
      %p185 = scmp.ne.s32.totalorder %s170, %s184
      %p186 = scmp.eq.s32.totalorder %s32, 0
      %p187 = por %p185, %p186
      %s189 = sadd.s32 %s188, 1
      %p192 = scmp.eq.s32.totalorder %s26, 1
      %p193 = scmp.ne.s32.totalorder %s188, %s190
      %p194 = scmp.eq.s32.totalorder %s26, 0
      %p195 = por %p193, %p194
      %p196 = scmp.ne.s32.totalorder %s188, %s190
      %p197 = scmp.eq.s32.totalorder %s31, 1
      %p198 = por %p196, %p197
      %p199 = scmp.ne.s32.totalorder %s190, %s191
      %p200 = scmp.eq.s32.totalorder %s31, 0
      %p201 = por %p199, %p200
      %p202 = scmp.ne.s32.totalorder %s190, %s191
      %p203 = scmp.eq.s32.totalorder %s32, 1
      %p204 = por %p202, %p203
      %p206 = scmp.ne.s32.totalorder %s191, %s205
      %p207 = scmp.eq.s32.totalorder %s32, 0
      %p208 = por %p206, %p207
      %s210 = sadd.s32 %s209, 1
      %p213 = scmp.eq.s32.totalorder %s26, 1
      %p214 = scmp.ne.s32.totalorder %s209, %s211
      %p215 = scmp.eq.s32.totalorder %s26, 0
      %p216 = por %p214, %p215
      %p217 = scmp.ne.s32.totalorder %s209, %s211
      %p218 = scmp.eq.s32.totalorder %s31, 1
      %p219 = por %p217, %p218
      %p220 = scmp.ne.s32.totalorder %s211, %s212
      %p221 = scmp.eq.s32.totalorder %s31, 0
      %p222 = por %p220, %p221
      %p223 = scmp.ne.s32.totalorder %s211, %s212
      %p224 = scmp.eq.s32.totalorder %s32, 1
      %p225 = por %p223, %p224
      %p227 = scmp.ne.s32.totalorder %s212, %s226
      %p228 = scmp.eq.s32.totalorder %s32, 0
      %p229 = por %p227, %p228
      %s231 = sadd.s32 %s230, 1
      %p234 = scmp.eq.s32.totalorder %s26, 1
      %p235 = scmp.ne.s32.totalorder %s230, %s232
      %p236 = scmp.eq.s32.totalorder %s26, 0
      %p237 = por %p235, %p236
      %p238 = scmp.ne.s32.totalorder %s230, %s232
      %p239 = scmp.eq.s32.totalorder %s31, 1
      %p240 = por %p238, %p239
      %p241 = scmp.ne.s32.totalorder %s232, %s233
      %p242 = scmp.eq.s32.totalorder %s31, 0
      %p243 = por %p241, %p242
      %p244 = scmp.ne.s32.totalorder %s232, %s233
      %p245 = scmp.eq.s32.totalorder %s32, 1
      %p246 = por %p244, %p245
      %p248 = scmp.ne.s32.totalorder %s233, %s247
      %p249 = scmp.eq.s32.totalorder %s32, 0
      %p250 = por %p248, %p249
      %s252 = sadd.s32 %s251, 1
      %p255 = scmp.eq.s32.totalorder %s26, 1
      %p256 = scmp.ne.s32.totalorder %s251, %s253
      %p257 = scmp.eq.s32.totalorder %s26, 0
      %p258 = por %p256, %p257
      %p259 = scmp.ne.s32.totalorder %s251, %s253
      %p260 = scmp.eq.s32.totalorder %s31, 1
      %p261 = por %p259, %p260
      %p262 = scmp.ne.s32.totalorder %s253, %s254
      %p263 = scmp.eq.s32.totalorder %s31, 0
      %p264 = por %p262, %p263
      %p265 = scmp.ne.s32.totalorder %s253, %s254
      %p266 = scmp.eq.s32.totalorder %s32, 1
      %p267 = por %p265, %p266
      %p269 = scmp.ne.s32.totalorder %s254, %s268
      %p270 = scmp.eq.s32.totalorder %s32, 0
      %p271 = por %p269, %p270
      %s272 = ssub.s32 %s33, %s45
      %s273 = ssub.s32 %s34, %s41
      %s274 = sor.u32 %s272, %s273
      %p275 = scmp.eq.s32.totalorder %s274, 0
      %s277 = sadd.s32 %s276, 1
      %s278 = scalar_select %p275, %s276, %s277
      %p281 = pneg %p275
      %p282 = scmp.eq.s32.totalorder %s26, 1
      %p283 = por %p281, %p282
      %p284 = scmp.ne.s32.totalorder %s276, %s279
      %p285 = scmp.eq.s32.totalorder %s26, 0
      %p286 = por %p284, %p285
      %p287 = scmp.ne.s32.totalorder %s276, %s279
      %p288 = scmp.eq.s32.totalorder %s31, 1
      %p289 = por %p287, %p288
      %p290 = scmp.ne.s32.totalorder %s279, %s280
      %p291 = scmp.eq.s32.totalorder %s31, 0
      %p292 = por %p290, %p291
      %p293 = scmp.ne.s32.totalorder %s279, %s280
      %p294 = scmp.eq.s32.totalorder %s32, 1
      %p295 = por %p293, %p294
      %p297 = scmp.ne.s32.totalorder %s280, %s296
      %p298 = scmp.eq.s32.totalorder %s32, 0
      %p299 = por %p297, %p298
      %p300 = scmp.le.s32.totalorder 1, %s26
      %p301 = scmp.lt.s32.totalorder %s26, 3
      %p302 = pnand %p300, %p301
      %p303 = pneg %p302
      // Predicated region
      $region9: #{tpu_custom_call.1} parent=5 // pred_check
        _
      $region10: #{tpu_custom_call.1} parent=5 // pred_check_branch
        %305 = sbr.rel (%p302) target = $region12
      $region11: #{tpu_custom_call.1} parent=5 // pred_region
        %s306 = ssub.s32 %s26, 1
        // Predicated region
        $region13: #{tpu_custom_call.1} parent=11 // pred_check
          %p307 = pneg %p159
        $region14: #{tpu_custom_call.1} parent=11 // pred_check_branch
          %309 = sbr.rel (%p307) target = $region16
        $region15: #{tpu_custom_call.1} parent=11 // pred_region
          %s311 = ssub.s32 1024, 1024
          %312 = vsyncadd [#allocation10], %s311
          %s313 = sshll.u32 [#allocation9], 4
          %s314 = int_to_ptr.vmem [resolvable:$true] %s313
          %319 = dma.hbm_to_vmem [thread:$0]  %s3, 1024, %s314, [#allocation10], 64, 64, 4
        $region16: #{tpu_custom_call.1} parent=11 // pred_fallthru
          _
        // Predicated region
        $region17: #{tpu_custom_call.1} parent=11 // pred_check
          %p320 = pneg %p180
        $region18: #{tpu_custom_call.1} parent=11 // pred_check_branch
          %322 = sbr.rel (%p320) target = $region20
        $region19: #{tpu_custom_call.1} parent=11 // pred_region
          _
        $region20: #{tpu_custom_call.1} parent=11 // pred_fallthru
          _
        // Predicated region
        $region21: #{tpu_custom_call.1} parent=11 // pred_check
          %p323 = pneg %p201
        $region22: #{tpu_custom_call.1} parent=11 // pred_check_branch
          %325 = sbr.rel (%p323) target = $region24
        $region23: #{tpu_custom_call.1} parent=11 // pred_region
          %s327 = ssub.s32 256, 256
          %328 = vsyncadd [#allocation10], %s327
          %s329 = sshll.u32 [#allocation11], 4
          %s330 = int_to_ptr.vmem [resolvable:$true] %s329
          %335 = dma.hbm_to_vmem [thread:$0]  %s5, 256, %s330, [#allocation10], 128, 128, 8
        $region24: #{tpu_custom_call.1} parent=11 // pred_fallthru
          _
        // Predicated region
        $region25: #{tpu_custom_call.1} parent=11 // pred_check
          %p336 = pneg %p222
        $region26: #{tpu_custom_call.1} parent=11 // pred_check_branch
          %338 = sbr.rel (%p336) target = $region28
        $region27: #{tpu_custom_call.1} parent=11 // pred_region
          _
        $region28: #{tpu_custom_call.1} parent=11 // pred_fallthru
          _
        // Predicated region
        $region29: #{tpu_custom_call.1} parent=11 // pred_check
          %p339 = pneg %p243
        $region30: #{tpu_custom_call.1} parent=11 // pred_check_branch
          %341 = sbr.rel (%p339) target = $region32
        $region31: #{tpu_custom_call.1} parent=11 // pred_region
          %s343 = ssub.s32 1024, 1024
          %344 = vsyncadd [#allocation13], %s343
          %s345 = sshll.u32 [#allocation12], 4
          %s346 = int_to_ptr.vmem [resolvable:$true] %s345
          %351 = dma.hbm_to_vmem [thread:$0]  %s7, 1024, %s346, [#allocation13], 64, 64, 4
        $region32: #{tpu_custom_call.1} parent=11 // pred_fallthru
          _
        // Predicated region
        $region33: #{tpu_custom_call.1} parent=11 // pred_check
          %p352 = pneg %p264
        $region34: #{tpu_custom_call.1} parent=11 // pred_check_branch
          %354 = sbr.rel (%p352) target = $region36
        $region35: #{tpu_custom_call.1} parent=11 // pred_region
          _
        $region36: #{tpu_custom_call.1} parent=11 // pred_fallthru
          _
      $region12: #{tpu_custom_call.1} parent=5 // pred_fallthru
        _
      %p355 = scmp.lt.s32.totalorder %s26, 2
      // Predicated region
      $region37: #{tpu_custom_call.1} parent=5 // pred_check
        %p356 = pneg %p355
      $region38: #{tpu_custom_call.1} parent=5 // pred_check_branch
        %358 = sbr.rel (%p356) target = $region40
      $region39: #{tpu_custom_call.1} parent=5 // pred_region
        // Predicated region
        $region41: #{tpu_custom_call.1} parent=39 // pred_check
          %p359 = pneg %p68
        $region42: #{tpu_custom_call.1} parent=39 // pred_check_branch
          %361 = sbr.rel (%p359) target = $region44
        $region43: #{tpu_custom_call.1} parent=39 // pred_region
          %s362 = sand.u32 %s58, 1
          %s363 = scalar_lea.sflag [#allocation4], %s362
          %s364 = sand.u32 %s58, 1
          %s365 = smul.addr %s364, 16
          %s366 = scalar_lea.vmem [#allocation3], %s365
          %s367 = smul.u32 %s34, 16
          %s368 = ssub.s32 %s367, 1
          %p369 = scmp.gt.s32.totalorder %s368, 0
          %s370 = scalar_select %p369, %s368, 0
          %s372 = ssub.s32 256, 256
          %373 = vsyncadd %s363, %s372
          %s374 = smul.addr %s370, 2
          %s375 = smul.addr %s33, 32
          %s376 = sadd.s32 %s374, %s375
          %s377 = smul.addr %s376, 128
          %s378 = scalar_lea.hbm %s0, %s377
          %s379 = sshll.u32 %s366, 4
          %s380 = int_to_ptr.vmem [resolvable:$true] %s379
          %385 = dma.hbm_to_vmem [thread:$0]  %s378, 256, %s380, %s363, 128, 128, 8
        $region44: #{tpu_custom_call.1} parent=39 // pred_fallthru
          _
        // Predicated region
        $region45: #{tpu_custom_call.1} parent=39 // pred_check
          %p386 = pneg %p96
        $region46: #{tpu_custom_call.1} parent=39 // pred_check_branch
          %388 = sbr.rel (%p386) target = $region48
        $region47: #{tpu_custom_call.1} parent=39 // pred_region
          %s389 = sand.u32 %s26, 1
          %s390 = scalar_lea.sflag [#allocation7], %s389
          %s391 = sand.u32 %s86, 1
          %s392 = smul.addr %s391, 256
          %s393 = scalar_lea.vmem [#allocation6], %s392
          %s394 = smul.u32 16, %s34
          %s396 = ssub.s32 4096, 4096
          %397 = vsyncadd %s390, %s396
          %s398 = smul.addr %s394, 2
          %s399 = smul.addr %s33, 32
          %s400 = sadd.s32 %s398, %s399
          %s401 = smul.addr %s400, 128
          %s402 = scalar_lea.hbm %s1, %s401
          %s403 = sshll.u32 %s393, 4
          %s404 = int_to_ptr.vmem [resolvable:$true] %s403
          %409 = dma.hbm_to_vmem [thread:$0]  %s402, 4096, %s404, %s390, 128, 128, 8
        $region48: #{tpu_custom_call.1} parent=39 // pred_fallthru
          _
        // Predicated region
        $region49: #{tpu_custom_call.1} parent=39 // pred_check
          %p410 = pneg %p132
        $region50: #{tpu_custom_call.1} parent=39 // pred_check_branch
          %412 = sbr.rel (%p410) target = $region52
        $region51: #{tpu_custom_call.1} parent=39 // pred_region
          %s413 = sand.u32 %s26, 1
          %s414 = scalar_lea.sflag [#allocation7], %s413
          %s415 = sand.u32 %s122, 1
          %s416 = smul.addr %s415, 16
          %s417 = scalar_lea.vmem [#allocation8], %s416
          %s418 = smul.u32 %s34, 16
          %s419 = sadd.s32 %s418, 16
          %p420 = scmp.lt.s32.totalorder %s419, 15
          %s421 = scalar_select %p420, %s419, 15
          %s423 = ssub.s32 256, 256
          %424 = vsyncadd %s414, %s423
          %s425 = smul.addr %s421, 2
          %s426 = smul.addr %s33, 32
          %s427 = sadd.s32 %s425, %s426
          %s428 = smul.addr %s427, 128
          %s429 = scalar_lea.hbm %s2, %s428
          %s430 = sshll.u32 %s417, 4
          %s431 = int_to_ptr.vmem [resolvable:$true] %s430
          %436 = dma.hbm_to_vmem [thread:$0]  %s429, 256, %s431, %s414, 128, 128, 8
        $region52: #{tpu_custom_call.1} parent=39 // pred_fallthru
          _
      $region40: #{tpu_custom_call.1} parent=5 // pred_fallthru
        _
      %p437 = scmp.le.s32.totalorder 1, %s26
      %p438 = scmp.lt.s32.totalorder %s26, 3
      %p439 = pnand %p437, %p438
      %p440 = pneg %p439
      // Predicated region
      $region53: #{tpu_custom_call.1} parent=5 // pred_check
        _
      $region54: #{tpu_custom_call.1} parent=5 // pred_check_branch
        %442 = sbr.rel (%p439) target = $region56
      $region55: #{tpu_custom_call.1} parent=5 // pred_region
        %s443 = ssub.s32 %s26, 1
        %s444 = sand.u32 %s61, 1
        %s445 = scalar_lea.sflag [#allocation4], %s444
        %s446 = sand.u32 %s61, 1
        %s447 = smul.addr %s446, 16
        %s448 = scalar_lea.vmem [#allocation3], %s447
        // Predicated region
        $region57: #{tpu_custom_call.1} parent=55 // pred_check
          %p449 = pneg %p74
        $region58: #{tpu_custom_call.1} parent=55 // pred_check_branch
          %451 = sbr.rel (%p449) target = $region60
        $region59: #{tpu_custom_call.1} parent=55 // pred_region
          %452 = dma.done %s445, 256
        $region60: #{tpu_custom_call.1} parent=55 // pred_fallthru
          _
        %s453 = sand.u32 %s31, 1
        %s454 = scalar_lea.sflag [#allocation7], %s453
        %s455 = sand.u32 %s89, 1
        %s456 = smul.addr %s455, 256
        %s457 = scalar_lea.vmem [#allocation6], %s456
        // Predicated region
        $region61: #{tpu_custom_call.1} parent=55 // pred_check
          %p458 = pneg %p102
        $region62: #{tpu_custom_call.1} parent=55 // pred_check_branch
          %460 = sbr.rel (%p458) target = $region64
        $region63: #{tpu_custom_call.1} parent=55 // pred_region
          %461 = dma.done %s454, 4096
        $region64: #{tpu_custom_call.1} parent=55 // pred_fallthru
          _
        %s462 = sand.u32 %s31, 1
        %s463 = scalar_lea.sflag [#allocation7], %s462
        %s464 = sand.u32 %s125, 1
        %s465 = smul.addr %s464, 16
        %s466 = scalar_lea.vmem [#allocation8], %s465
        // Predicated region
        $region65: #{tpu_custom_call.1} parent=55 // pred_check
          %p467 = pneg %p138
        $region66: #{tpu_custom_call.1} parent=55 // pred_check_branch
          %469 = sbr.rel (%p467) target = $region68
        $region67: #{tpu_custom_call.1} parent=55 // pred_region
          %470 = dma.done %s463, 256
        $region68: #{tpu_custom_call.1} parent=55 // pred_fallthru
          _
        // Predicated region
        $region69: #{tpu_custom_call.1} parent=55 // pred_check
          %p471 = pneg %p159
        $region70: #{tpu_custom_call.1} parent=55 // pred_check_branch
          %473 = sbr.rel (%p471) target = $region72
        $region71: #{tpu_custom_call.1} parent=55 // pred_region
          %474 = dma.done [#allocation10], 1024
        $region72: #{tpu_custom_call.1} parent=55 // pred_fallthru
          _
        // Predicated region
        $region73: #{tpu_custom_call.1} parent=55 // pred_check
          %p475 = pneg %p201
        $region74: #{tpu_custom_call.1} parent=55 // pred_check_branch
          %477 = sbr.rel (%p475) target = $region76
        $region75: #{tpu_custom_call.1} parent=55 // pred_region
          %478 = dma.done [#allocation10], 256
        $region76: #{tpu_custom_call.1} parent=55 // pred_fallthru
          _
        // Predicated region
        $region77: #{tpu_custom_call.1} parent=55 // pred_check
          %p479 = pneg %p243
        $region78: #{tpu_custom_call.1} parent=55 // pred_check_branch
          %481 = sbr.rel (%p479) target = $region80
        $region79: #{tpu_custom_call.1} parent=55 // pred_region
          %482 = dma.done [#allocation13], 1024
        $region80: #{tpu_custom_call.1} parent=55 // pred_fallthru
          _
        %s483 = sand.u32 %s61, 1
        %s484 = scalar_lea.sflag [#allocation4], %s483
        %s485 = sand.u32 %s61, 1
        %s486 = smul.addr %s485, 16
        %s487 = scalar_lea.vmem [#allocation3], %s486
        %p488 = pneg %p74
        %p489 = pneg %p71
        %s490 = sand.u32 %s31, 1
        %s491 = scalar_lea.sflag [#allocation7], %s490
        %s492 = sand.u32 %s89, 1
        %s493 = smul.addr %s492, 256
        %s494 = scalar_lea.vmem [#allocation6], %s493
        %p495 = pneg %p102
        %p496 = pneg %p99
        %s497 = sand.u32 %s31, 1
        %s498 = scalar_lea.sflag [#allocation7], %s497
        %s499 = sand.u32 %s125, 1
        %s500 = smul.addr %s499, 16
        %s501 = scalar_lea.vmem [#allocation8], %s500
        %p502 = pneg %p138
        %p503 = pneg %p135
        %p504 = pneg %p159
        %p505 = pneg %p156
        %p506 = pneg %p180
        %p507 = pneg %p177
        %p508 = pneg %p201
        %p509 = pneg %p198
        %p510 = pneg %p222
        %p511 = pneg %p219
        %p512 = pneg %p243
        %p513 = pneg %p240
        %p514 = pneg %p264
        %p515 = pneg %p261
        %p516 = pneg %p292
        %p517 = pneg %p289
        %s518 = sand.u32 %s279, 1
        %s519 = scalar_lea.sflag [#allocation5], %s518
        %s520 = sand.u32 %s279, 1
        %s521 = smul.addr %s520, 256
        %s522 = scalar_lea.vmem [#allocation14], %s521
        %s523 = smul.u32 %s36, 16
        %s524 = ssub.s32 %s523, 1
        %p525 = scmp.gt.s32.totalorder %s524, 0
        %s526 = scalar_select %p525, %s524, 0
        %s527 = smul.u32 16, %s36
        %s528 = smul.u32 %s36, 16
        %s529 = sadd.s32 %s528, 16
        %p530 = scmp.lt.s32.totalorder %s529, 15
        %s531 = scalar_select %p530, %s529, 15
        %s532 = smul.u32 16, %s36
        %v534 = vld [vmem:[%s457] sm:$0xff]
        %v535 = vld [vmem:[%s457 + $0x8] sm:$0xff]
        %v536 = vld [vmem:[%s457 + $0x10] sm:$0xff]
        %v537 = vld [vmem:[%s457 + $0x18] sm:$0xff]
        %v538 = vld [vmem:[%s457 + $0x20] sm:$0xff]
        %v539 = vld [vmem:[%s457 + $0x28] sm:$0xff]
        %v540 = vld [vmem:[%s457 + $0x30] sm:$0xff]
        %v541 = vld [vmem:[%s457 + $0x38] sm:$0xff]
        %v542 = vld [vmem:[%s457 + $0x40] sm:$0xff]
        %v543 = vld [vmem:[%s457 + $0x48] sm:$0xff]
        %v544 = vld [vmem:[%s457 + $0x50] sm:$0xff]
        %v545 = vld [vmem:[%s457 + $0x58] sm:$0xff]
        %v546 = vld [vmem:[%s457 + $0x60] sm:$0xff]
        %v547 = vld [vmem:[%s457 + $0x68] sm:$0xff]
        %v548 = vld [vmem:[%s457 + $0x70] sm:$0xff]
        %v549 = vld [vmem:[%s457 + $0x78] sm:$0xff]
        %v550 = vld [vmem:[%s457 + $0x80] sm:$0xff]
        %v551 = vld [vmem:[%s457 + $0x88] sm:$0xff]
        %v552 = vld [vmem:[%s457 + $0x90] sm:$0xff]
        %v553 = vld [vmem:[%s457 + $0x98] sm:$0xff]
        %v554 = vld [vmem:[%s457 + $0xa0] sm:$0xff]
        %v555 = vld [vmem:[%s457 + $0xa8] sm:$0xff]
        %v556 = vld [vmem:[%s457 + $0xb0] sm:$0xff]
        %v557 = vld [vmem:[%s457 + $0xb8] sm:$0xff]
        %v558 = vld [vmem:[%s457 + $0xc0] sm:$0xff]
        %v559 = vld [vmem:[%s457 + $0xc8] sm:$0xff]
        %v560 = vld [vmem:[%s457 + $0xd0] sm:$0xff]
        %v561 = vld [vmem:[%s457 + $0xd8] sm:$0xff]
        %v562 = vld [vmem:[%s457 + $0xe0] sm:$0xff]
        %v563 = vld [vmem:[%s457 + $0xe8] sm:$0xff]
        %v564 = vld [vmem:[%s457 + $0xf0] sm:$0xff]
        %v565 = vld [vmem:[%s457 + $0xf8] sm:$0xff]
        %v566 = vpack.c.bf16 %v535, %v534
        %v567 = vpack.c.bf16 %v537, %v536
        %v568 = vpack.c.bf16 %v539, %v538
        %v569 = vpack.c.bf16 %v541, %v540
        %v570 = vpack.c.bf16 %v543, %v542
        %v571 = vpack.c.bf16 %v545, %v544
        %v572 = vpack.c.bf16 %v547, %v546
        %v573 = vpack.c.bf16 %v549, %v548
        %v574 = vpack.c.bf16 %v551, %v550
        %v575 = vpack.c.bf16 %v553, %v552
        %v576 = vpack.c.bf16 %v555, %v554
        %v577 = vpack.c.bf16 %v557, %v556
        %v578 = vpack.c.bf16 %v559, %v558
        %v579 = vpack.c.bf16 %v561, %v560
        %v580 = vpack.c.bf16 %v563, %v562
        %v581 = vpack.c.bf16 %v565, %v564
        %v582 = vld [vmem:[#allocation9] sm:$0xf]
        %v583 = vld [vmem:[#allocation9 + $0x4] sm:$0xf]
        %v584 = vld [vmem:[#allocation9 + $0x8] sm:$0xf]
        %v585 = vld [vmem:[#allocation9 + $0xc] sm:$0xf]
        %v586 = vld [vmem:[#allocation9 + $0x10] sm:$0xf]
        %v587 = vld [vmem:[#allocation9 + $0x14] sm:$0xf]
        %v588 = vld [vmem:[#allocation9 + $0x18] sm:$0xf]
        %v589 = vld [vmem:[#allocation9 + $0x1c] sm:$0xf]
        %v590 = vld [vmem:[#allocation9 + $0x20] sm:$0xf]
        %v591 = vld [vmem:[#allocation9 + $0x24] sm:$0xf]
        %v592 = vld [vmem:[#allocation9 + $0x28] sm:$0xf]
        %v593 = vld [vmem:[#allocation9 + $0x2c] sm:$0xf]
        %v594 = vld [vmem:[#allocation9 + $0x30] sm:$0xf]
        %v595 = vld [vmem:[#allocation9 + $0x34] sm:$0xf]
        %v596 = vld [vmem:[#allocation9 + $0x38] sm:$0xf]
        %v597 = vld [vmem:[#allocation9 + $0x3c] sm:$0xf]
        %v614 = vunpack.c.l.b16 %v582
        %v615 = vunpack.c.l.b16 %v583
        %v616 = vunpack.c.l.b16 %v584
        %v617 = vunpack.c.l.b16 %v585
        %v618 = vunpack.c.l.b16 %v586
        %v619 = vunpack.c.l.b16 %v587
        %v620 = vunpack.c.l.b16 %v588
        %v621 = vunpack.c.l.b16 %v589
        %v622 = vunpack.c.l.b16 %v590
        %v623 = vunpack.c.l.b16 %v591
        %v624 = vunpack.c.l.b16 %v592
        %v625 = vunpack.c.l.b16 %v593
        %v626 = vunpack.c.l.b16 %v594
        %v627 = vunpack.c.l.b16 %v595
        %v628 = vunpack.c.l.b16 %v596
        %v629 = vunpack.c.l.b16 %v597
        %v630 = vpack.c.b16 %v615, %v614
        %v631 = vpack.c.b16 %v617, %v616
        %v632 = vpack.c.b16 %v619, %v618
        %v633 = vpack.c.b16 %v621, %v620
        %v634 = vpack.c.b16 %v623, %v622
        %v635 = vpack.c.b16 %v625, %v624
        %v636 = vpack.c.b16 %v627, %v626
        %v637 = vpack.c.b16 %v629, %v628
        %646 = vmatprep.subr.bf16.mxu0 0
        %647 = vmatpush1.bf16.msra.mxu0 %v637
        %648 = vmatprep.subr.bf16.mxu0 0
        %649 = vmatpush1.bf16.msra.mxu0 %v636
        %650 = vmatprep.subr.bf16.mxu0 0
        %651 = vmatpush1.bf16.msra.mxu0 %v635
        %652 = vmatprep.subr.bf16.mxu0 0
        %653 = vmatpush1.bf16.msra.mxu0 %v634
        %654 = vmatprep.subr.bf16.mxu0 0
        %655 = vmatpush1.bf16.msra.mxu0 %v633
        %656 = vmatprep.subr.bf16.mxu0 0
        %657 = vmatpush1.bf16.msra.mxu0 %v632
        %658 = vmatprep.subr.bf16.mxu0 0
        %659 = vmatpush1.bf16.msra.mxu0 %v631
        %660 = vmatprep.subr.bf16.mxu0 0
        %661 = vmatpush1.bf16.msra.mxu0 %v630
        %662 = vmatprep.subr.bf16.mxu0 0
        %663 = vmatpush2.bf16.msra.mxu0 0
        %664 = vmatprep.subr.bf16.mxu0 0
        %665 = vmatpush2.bf16.msra.mxu0 0
        %666 = vmatprep.subr.bf16.mxu0 0
        %667 = vmatpush2.bf16.msra.mxu0 0
        %668 = vmatprep.subr.bf16.mxu0 0
        %669 = vmatpush2.bf16.msra.mxu0 0
        %670 = vmatprep.subr.bf16.mxu0 0
        %671 = vmatpush2.bf16.msra.mxu0 0
        %672 = vmatprep.subr.bf16.mxu0 0
        %673 = vmatpush2.bf16.msra.mxu0 0
        %674 = vmatprep.subr.bf16.mxu0 0
        %675 = vmatpush2.bf16.msra.mxu0 0
        %676 = vmatprep.subr.bf16.mxu0 0
        %677 = vmatpush2.bf16.msra.mxu0 0
        %678 = vmatprep.mubr.bf16.mxu0 0
        %679 = vmatmul.mubr.bf16.gmra.mxu0 %v566
        %v680 = vpop.f32.mrf.mxu0
        %v681 = vadd.f32 0.0, %v680
        %v682 = vpop.f32.mrf.mxu0
        %v683 = vpop.f32.mrf.mxu0
        %v684 = vadd.f32 0.0, %v683
        %v685 = vpop.f32.mrf.mxu0
        %686 = vmatprep.mubr.bf16.mxu0 0
        %687 = vmatmul.mubr.bf16.gmra.mxu0 %v567
        %v688 = vpop.f32.mrf.mxu0
        %v689 = vadd.f32 0.0, %v688
        %v690 = vpop.f32.mrf.mxu0
        %v691 = vpop.f32.mrf.mxu0
        %v692 = vadd.f32 0.0, %v691
        %v693 = vpop.f32.mrf.mxu0
        %694 = vmatprep.mubr.bf16.mxu0 0
        %695 = vmatmul.mubr.bf16.gmra.mxu0 %v568
        %v696 = vpop.f32.mrf.mxu0
        %v697 = vadd.f32 0.0, %v696
        %v698 = vpop.f32.mrf.mxu0
        %v699 = vpop.f32.mrf.mxu0
        %v700 = vadd.f32 0.0, %v699
        %v701 = vpop.f32.mrf.mxu0
        %702 = vmatprep.mubr.bf16.mxu0 0
        %703 = vmatmul.mubr.bf16.gmra.mxu0 %v569
        %v704 = vpop.f32.mrf.mxu0
        %v705 = vadd.f32 0.0, %v704
        %v706 = vpop.f32.mrf.mxu0
        %v707 = vpop.f32.mrf.mxu0
        %v708 = vadd.f32 0.0, %v707
        %v709 = vpop.f32.mrf.mxu0
        %710 = vmatprep.mubr.bf16.mxu0 0
        %711 = vmatmul.mubr.bf16.gmra.mxu0 %v570
        %v712 = vpop.f32.mrf.mxu0
        %v713 = vadd.f32 0.0, %v712
        %v714 = vpop.f32.mrf.mxu0
        %v715 = vpop.f32.mrf.mxu0
        %v716 = vadd.f32 0.0, %v715
        %v717 = vpop.f32.mrf.mxu0
        %718 = vmatprep.mubr.bf16.mxu0 0
        %719 = vmatmul.mubr.bf16.gmra.mxu0 %v571
        %v720 = vpop.f32.mrf.mxu0
        %v721 = vadd.f32 0.0, %v720
        %v722 = vpop.f32.mrf.mxu0
        %v723 = vpop.f32.mrf.mxu0
        %v724 = vadd.f32 0.0, %v723
        %v725 = vpop.f32.mrf.mxu0
        %726 = vmatprep.mubr.bf16.mxu0 0
        %727 = vmatmul.mubr.bf16.gmra.mxu0 %v572
        %v728 = vpop.f32.mrf.mxu0
        %v729 = vadd.f32 0.0, %v728
        %v730 = vpop.f32.mrf.mxu0
        %v731 = vpop.f32.mrf.mxu0
        %v732 = vadd.f32 0.0, %v731
        %v733 = vpop.f32.mrf.mxu0
        %734 = vmatprep.mubr.bf16.mxu0 0
        %735 = vmatmul.mubr.bf16.gmra.mxu0 %v573
        %v736 = vpop.f32.mrf.mxu0
        %v737 = vadd.f32 0.0, %v736
        %v738 = vpop.f32.mrf.mxu0
        %v739 = vpop.f32.mrf.mxu0
        %v740 = vadd.f32 0.0, %v739
        %v741 = vpop.f32.mrf.mxu0
        %742 = vmatprep.mubr.bf16.mxu0 0
        %743 = vmatmul.mubr.bf16.gmra.mxu0 %v574
        %v744 = vpop.f32.mrf.mxu0
        %v745 = vadd.f32 0.0, %v744
        %v746 = vpop.f32.mrf.mxu0
        %v747 = vpop.f32.mrf.mxu0
        %v748 = vadd.f32 0.0, %v747
        %v749 = vpop.f32.mrf.mxu0
        %750 = vmatprep.mubr.bf16.mxu0 0
        %751 = vmatmul.mubr.bf16.gmra.mxu0 %v575
        %v752 = vpop.f32.mrf.mxu0
        %v753 = vadd.f32 0.0, %v752
        %v754 = vpop.f32.mrf.mxu0
        %v755 = vpop.f32.mrf.mxu0
        %v756 = vadd.f32 0.0, %v755
        %v757 = vpop.f32.mrf.mxu0
        %758 = vmatprep.mubr.bf16.mxu0 0
        %759 = vmatmul.mubr.bf16.gmra.mxu0 %v576
        %v760 = vpop.f32.mrf.mxu0
        %v761 = vadd.f32 0.0, %v760
        %v762 = vpop.f32.mrf.mxu0
        %v763 = vpop.f32.mrf.mxu0
        %v764 = vadd.f32 0.0, %v763
        %v765 = vpop.f32.mrf.mxu0
        %766 = vmatprep.mubr.bf16.mxu0 0
        %767 = vmatmul.mubr.bf16.gmra.mxu0 %v577
        %v768 = vpop.f32.mrf.mxu0
        %v769 = vadd.f32 0.0, %v768
        %v770 = vpop.f32.mrf.mxu0
        %v771 = vpop.f32.mrf.mxu0
        %v772 = vadd.f32 0.0, %v771
        %v773 = vpop.f32.mrf.mxu0
        %774 = vmatprep.mubr.bf16.mxu0 0
        %775 = vmatmul.mubr.bf16.gmra.mxu0 %v578
        %v776 = vpop.f32.mrf.mxu0
        %v777 = vadd.f32 0.0, %v776
        %v778 = vpop.f32.mrf.mxu0
        %v779 = vpop.f32.mrf.mxu0
        %v780 = vadd.f32 0.0, %v779
        %v781 = vpop.f32.mrf.mxu0
        %782 = vmatprep.mubr.bf16.mxu0 0
        %783 = vmatmul.mubr.bf16.gmra.mxu0 %v579
        %v784 = vpop.f32.mrf.mxu0
        %v785 = vadd.f32 0.0, %v784
        %v786 = vpop.f32.mrf.mxu0
        %v787 = vpop.f32.mrf.mxu0
        %v788 = vadd.f32 0.0, %v787
        %v789 = vpop.f32.mrf.mxu0
        %790 = vmatprep.mubr.bf16.mxu0 0
        %791 = vmatmul.mubr.bf16.gmra.mxu0 %v580
        %v792 = vpop.f32.mrf.mxu0
        %v793 = vadd.f32 0.0, %v792
        %v794 = vpop.f32.mrf.mxu0
        %v795 = vpop.f32.mrf.mxu0
        %v796 = vadd.f32 0.0, %v795
        %v797 = vpop.f32.mrf.mxu0
        %798 = vmatprep.mubr.bf16.mxu0 0
        %799 = vmatmul.mubr.bf16.gmra.mxu0 %v581
        %v800 = vpop.f32.mrf.mxu0
        %v801 = vadd.f32 0.0, %v800
        %v802 = vpop.f32.mrf.mxu0
        %v803 = vpop.f32.mrf.mxu0
        %v804 = vadd.f32 0.0, %v803
        %v805 = vpop.f32.mrf.mxu0
        %806 = vdwg.mxu0
        %v807 = vld [vmem:[%s4] sm:$0x1]
        %v808 = vlaneseq
        %v809 = vshrl.u32 %v808, 7
        %v810 = vsub.s32 0, %v809
        %v811 = vrot.slane %v807, %v810
        %v812 = vmul.f32 %v681, %v811
        %v813 = vmul.f32 %v684, %v811
        %v814 = vmul.f32 %v689, %v811
        %v815 = vmul.f32 %v692, %v811
        %v816 = vmul.f32 %v697, %v811
        %v817 = vmul.f32 %v700, %v811
        %v818 = vmul.f32 %v705, %v811
        %v819 = vmul.f32 %v708, %v811
        %v820 = vmul.f32 %v713, %v811
        %v821 = vmul.f32 %v716, %v811
        %v822 = vmul.f32 %v721, %v811
        %v823 = vmul.f32 %v724, %v811
        %v824 = vmul.f32 %v729, %v811
        %v825 = vmul.f32 %v732, %v811
        %v826 = vmul.f32 %v737, %v811
        %v827 = vmul.f32 %v740, %v811
        %v828 = vmul.f32 %v745, %v811
        %v829 = vmul.f32 %v748, %v811
        %v830 = vmul.f32 %v753, %v811
        %v831 = vmul.f32 %v756, %v811
        %v832 = vmul.f32 %v761, %v811
        %v833 = vmul.f32 %v764, %v811
        %v834 = vmul.f32 %v769, %v811
        %v835 = vmul.f32 %v772, %v811
        %v836 = vmul.f32 %v777, %v811
        %v837 = vmul.f32 %v780, %v811
        %v838 = vmul.f32 %v785, %v811
        %v839 = vmul.f32 %v788, %v811
        %v840 = vmul.f32 %v793, %v811
        %v841 = vmul.f32 %v796, %v811
        %v842 = vmul.f32 %v801, %v811
        %v843 = vmul.f32 %v804, %v811
        %v844 = vld [vmem:[%s4 + $0x1] sm:$0x1]
        %v845 = vlaneseq
        %v846 = vshrl.u32 %v845, 7
        %v847 = vsub.s32 0, %v846
        %v848 = vrot.slane %v844, %v847
        %v849 = vadd.f32 %v812, %v848
        %v850 = vadd.f32 %v813, %v848
        %v851 = vadd.f32 %v814, %v848
        %v852 = vadd.f32 %v815, %v848
        %v853 = vadd.f32 %v816, %v848
        %v854 = vadd.f32 %v817, %v848
        %v855 = vadd.f32 %v818, %v848
        %v856 = vadd.f32 %v819, %v848
        %v857 = vadd.f32 %v820, %v848
        %v858 = vadd.f32 %v821, %v848
        %v859 = vadd.f32 %v822, %v848
        %v860 = vadd.f32 %v823, %v848
        %v861 = vadd.f32 %v824, %v848
        %v862 = vadd.f32 %v825, %v848
        %v863 = vadd.f32 %v826, %v848
        %v864 = vadd.f32 %v827, %v848
        %v865 = vadd.f32 %v828, %v848
        %v866 = vadd.f32 %v829, %v848
        %v867 = vadd.f32 %v830, %v848
        %v868 = vadd.f32 %v831, %v848
        %v869 = vadd.f32 %v832, %v848
        %v870 = vadd.f32 %v833, %v848
        %v871 = vadd.f32 %v834, %v848
        %v872 = vadd.f32 %v835, %v848
        %v873 = vadd.f32 %v836, %v848
        %v874 = vadd.f32 %v837, %v848
        %v875 = vadd.f32 %v838, %v848
        %v876 = vadd.f32 %v839, %v848
        %v877 = vadd.f32 %v840, %v848
        %v878 = vadd.f32 %v841, %v848
        %v879 = vadd.f32 %v842, %v848
        %v880 = vadd.f32 %v843, %v848
        %v881 = vmax.f32 %v849, 0.0
        %v882 = vmax.f32 %v850, 0.0
        %v883 = vmax.f32 %v851, 0.0
        %v884 = vmax.f32 %v852, 0.0
        %v885 = vmax.f32 %v853, 0.0
        %v886 = vmax.f32 %v854, 0.0
        %v887 = vmax.f32 %v855, 0.0
        %v888 = vmax.f32 %v856, 0.0
        %v889 = vmax.f32 %v857, 0.0
        %v890 = vmax.f32 %v858, 0.0
        %v891 = vmax.f32 %v859, 0.0
        %v892 = vmax.f32 %v860, 0.0
        %v893 = vmax.f32 %v861, 0.0
        %v894 = vmax.f32 %v862, 0.0
        %v895 = vmax.f32 %v863, 0.0
        %v896 = vmax.f32 %v864, 0.0
        %v897 = vmax.f32 %v865, 0.0
        %v898 = vmax.f32 %v866, 0.0
        %v899 = vmax.f32 %v867, 0.0
        %v900 = vmax.f32 %v868, 0.0
        %v901 = vmax.f32 %v869, 0.0
        %v902 = vmax.f32 %v870, 0.0
        %v903 = vmax.f32 %v871, 0.0
        %v904 = vmax.f32 %v872, 0.0
        %v905 = vmax.f32 %v873, 0.0
        %v906 = vmax.f32 %v874, 0.0
        %v907 = vmax.f32 %v875, 0.0
        %v908 = vmax.f32 %v876, 0.0
        %v909 = vmax.f32 %v877, 0.0
        %v910 = vmax.f32 %v878, 0.0
        %v911 = vmax.f32 %v879, 0.0
        %v912 = vmax.f32 %v880, 0.0
        %v913 = vmin.f32 %v881, 6.0
        %v914 = vmin.f32 %v882, 6.0
        %v915 = vmin.f32 %v883, 6.0
        %v916 = vmin.f32 %v884, 6.0
        %v917 = vmin.f32 %v885, 6.0
        %v918 = vmin.f32 %v886, 6.0
        %v919 = vmin.f32 %v887, 6.0
        %v920 = vmin.f32 %v888, 6.0
        %v921 = vmin.f32 %v889, 6.0
        %v922 = vmin.f32 %v890, 6.0
        %v923 = vmin.f32 %v891, 6.0
        %v924 = vmin.f32 %v892, 6.0
        %v925 = vmin.f32 %v893, 6.0
        %v926 = vmin.f32 %v894, 6.0
        %v927 = vmin.f32 %v895, 6.0
        %v928 = vmin.f32 %v896, 6.0
        %v929 = vmin.f32 %v897, 6.0
        %v930 = vmin.f32 %v898, 6.0
        %v931 = vmin.f32 %v899, 6.0
        %v932 = vmin.f32 %v900, 6.0
        %v933 = vmin.f32 %v901, 6.0
        %v934 = vmin.f32 %v902, 6.0
        %v935 = vmin.f32 %v903, 6.0
        %v936 = vmin.f32 %v904, 6.0
        %v937 = vmin.f32 %v905, 6.0
        %v938 = vmin.f32 %v906, 6.0
        %v939 = vmin.f32 %v907, 6.0
        %v940 = vmin.f32 %v908, 6.0
        %v941 = vmin.f32 %v909, 6.0
        %v942 = vmin.f32 %v910, 6.0
        %v943 = vmin.f32 %v911, 6.0
        %v944 = vmin.f32 %v912, 6.0
        %s945 = scalar_lea.vmem [#allocation2], 16
        %946 = vst [vmem:[%s945] sm:$0xff] %v913
        %947 = vst [vmem:[%s945 + $0x8] sm:$0xff] %v914
        %948 = vst [vmem:[%s945 + $0x10] sm:$0xff] %v915
        %949 = vst [vmem:[%s945 + $0x18] sm:$0xff] %v916
        %950 = vst [vmem:[%s945 + $0x20] sm:$0xff] %v917
        %951 = vst [vmem:[%s945 + $0x28] sm:$0xff] %v918
        %952 = vst [vmem:[%s945 + $0x30] sm:$0xff] %v919
        %953 = vst [vmem:[%s945 + $0x38] sm:$0xff] %v920
        %954 = vst [vmem:[%s945 + $0x40] sm:$0xff] %v921
        %955 = vst [vmem:[%s945 + $0x48] sm:$0xff] %v922
        %956 = vst [vmem:[%s945 + $0x50] sm:$0xff] %v923
        %957 = vst [vmem:[%s945 + $0x58] sm:$0xff] %v924
        %958 = vst [vmem:[%s945 + $0x60] sm:$0xff] %v925
        %959 = vst [vmem:[%s945 + $0x68] sm:$0xff] %v926
        %960 = vst [vmem:[%s945 + $0x70] sm:$0xff] %v927
        %961 = vst [vmem:[%s945 + $0x78] sm:$0xff] %v928
        %962 = vst [vmem:[%s945 + $0x80] sm:$0xff] %v929
        %963 = vst [vmem:[%s945 + $0x88] sm:$0xff] %v930
        %964 = vst [vmem:[%s945 + $0x90] sm:$0xff] %v931
        %965 = vst [vmem:[%s945 + $0x98] sm:$0xff] %v932
        %966 = vst [vmem:[%s945 + $0xa0] sm:$0xff] %v933
        %967 = vst [vmem:[%s945 + $0xa8] sm:$0xff] %v934
        %968 = vst [vmem:[%s945 + $0xb0] sm:$0xff] %v935
        %969 = vst [vmem:[%s945 + $0xb8] sm:$0xff] %v936
        %970 = vst [vmem:[%s945 + $0xc0] sm:$0xff] %v937
        %971 = vst [vmem:[%s945 + $0xc8] sm:$0xff] %v938
        %972 = vst [vmem:[%s945 + $0xd0] sm:$0xff] %v939
        %973 = vst [vmem:[%s945 + $0xd8] sm:$0xff] %v940
        %974 = vst [vmem:[%s945 + $0xe0] sm:$0xff] %v941
        %975 = vst [vmem:[%s945 + $0xe8] sm:$0xff] %v942
        %976 = vst [vmem:[%s945 + $0xf0] sm:$0xff] %v943
        %977 = vst [vmem:[%s945 + $0xf8] sm:$0xff] %v944
        %v978 = vld [vmem:[%s448] sm:$0xff]
        %v979 = vld [vmem:[%s448 + $0x8] sm:$0xff]
        %v980 = vpack.c.bf16 %v979, %v978
        %v981 = vld [vmem:[#allocation9] sm:$0xf]
        %v982 = vld [vmem:[#allocation9 + $0x4] sm:$0xf]
        %v983 = vld [vmem:[#allocation9 + $0x8] sm:$0xf]
        %v984 = vld [vmem:[#allocation9 + $0xc] sm:$0xf]
        %v985 = vld [vmem:[#allocation9 + $0x10] sm:$0xf]
        %v986 = vld [vmem:[#allocation9 + $0x14] sm:$0xf]
        %v987 = vld [vmem:[#allocation9 + $0x18] sm:$0xf]
        %v988 = vld [vmem:[#allocation9 + $0x1c] sm:$0xf]
        %v989 = vld [vmem:[#allocation9 + $0x20] sm:$0xf]
        %v990 = vld [vmem:[#allocation9 + $0x24] sm:$0xf]
        %v991 = vld [vmem:[#allocation9 + $0x28] sm:$0xf]
        %v992 = vld [vmem:[#allocation9 + $0x2c] sm:$0xf]
        %v993 = vld [vmem:[#allocation9 + $0x30] sm:$0xf]
        %v994 = vld [vmem:[#allocation9 + $0x34] sm:$0xf]
        %v995 = vld [vmem:[#allocation9 + $0x38] sm:$0xf]
        %v996 = vld [vmem:[#allocation9 + $0x3c] sm:$0xf]
        %v1013 = vunpack.c.l.b16 %v981
        %v1014 = vunpack.c.l.b16 %v982
        %v1015 = vunpack.c.l.b16 %v983
        %v1016 = vunpack.c.l.b16 %v984
        %v1017 = vunpack.c.l.b16 %v985
        %v1018 = vunpack.c.l.b16 %v986
        %v1019 = vunpack.c.l.b16 %v987
        %v1020 = vunpack.c.l.b16 %v988
        %v1021 = vunpack.c.l.b16 %v989
        %v1022 = vunpack.c.l.b16 %v990
        %v1023 = vunpack.c.l.b16 %v991
        %v1024 = vunpack.c.l.b16 %v992
        %v1025 = vunpack.c.l.b16 %v993
        %v1026 = vunpack.c.l.b16 %v994
        %v1027 = vunpack.c.l.b16 %v995
        %v1028 = vunpack.c.l.b16 %v996
        %v1029 = vpack.c.b16 %v1014, %v1013
        %v1030 = vpack.c.b16 %v1016, %v1015
        %v1031 = vpack.c.b16 %v1018, %v1017
        %v1032 = vpack.c.b16 %v1020, %v1019
        %v1033 = vpack.c.b16 %v1022, %v1021
        %v1034 = vpack.c.b16 %v1024, %v1023
        %v1035 = vpack.c.b16 %v1026, %v1025
        %v1036 = vpack.c.b16 %v1028, %v1027
        %1045 = vmatprep.subr.bf16.mxu0 0
        %1046 = vmatpush1.bf16.msra.mxu0 %v1036
        %1047 = vmatprep.subr.bf16.mxu0 0
        %1048 = vmatpush1.bf16.msra.mxu0 %v1035
        %1049 = vmatprep.subr.bf16.mxu0 0
        %1050 = vmatpush1.bf16.msra.mxu0 %v1034
        %1051 = vmatprep.subr.bf16.mxu0 0
        %1052 = vmatpush1.bf16.msra.mxu0 %v1033
        %1053 = vmatprep.subr.bf16.mxu0 0
        %1054 = vmatpush1.bf16.msra.mxu0 %v1032
        %1055 = vmatprep.subr.bf16.mxu0 0
        %1056 = vmatpush1.bf16.msra.mxu0 %v1031
        %1057 = vmatprep.subr.bf16.mxu0 0
        %1058 = vmatpush1.bf16.msra.mxu0 %v1030
        %1059 = vmatprep.subr.bf16.mxu0 0
        %1060 = vmatpush1.bf16.msra.mxu0 %v1029
        %1061 = vmatprep.subr.bf16.mxu0 0
        %1062 = vmatpush2.bf16.msra.mxu0 0
        %1063 = vmatprep.subr.bf16.mxu0 0
        %1064 = vmatpush2.bf16.msra.mxu0 0
        %1065 = vmatprep.subr.bf16.mxu0 0
        %1066 = vmatpush2.bf16.msra.mxu0 0
        %1067 = vmatprep.subr.bf16.mxu0 0
        %1068 = vmatpush2.bf16.msra.mxu0 0
        %1069 = vmatprep.subr.bf16.mxu0 0
        %1070 = vmatpush2.bf16.msra.mxu0 0
        %1071 = vmatprep.subr.bf16.mxu0 0
        %1072 = vmatpush2.bf16.msra.mxu0 0
        %1073 = vmatprep.subr.bf16.mxu0 0
        %1074 = vmatpush2.bf16.msra.mxu0 0
        %1075 = vmatprep.subr.bf16.mxu0 0
        %1076 = vmatpush2.bf16.msra.mxu0 0
        %1077 = vmatprep.mubr.bf16.mxu0 0
        %1078 = vmatmul.mubr.bf16.gmra.mxu0 %v980
        %v1079 = vpop.f32.mrf.mxu0
        %v1080 = vadd.f32 0.0, %v1079
        %v1081 = vpop.f32.mrf.mxu0
        %v1082 = vpop.f32.mrf.mxu0
        %v1083 = vadd.f32 0.0, %v1082
        %v1084 = vpop.f32.mrf.mxu0
        %1085 = vdwg.mxu0
        %v1086 = vld [vmem:[%s4] sm:$0x1]
        %v1087 = vlaneseq
        %v1088 = vshrl.u32 %v1087, 7
        %v1089 = vsub.s32 0, %v1088
        %v1090 = vrot.slane %v1086, %v1089
        %v1091 = vmul.f32 %v1080, %v1090
        %v1092 = vmul.f32 %v1083, %v1090
        %v1093 = vld [vmem:[%s4 + $0x1] sm:$0x1]
        %v1094 = vlaneseq
        %v1095 = vshrl.u32 %v1094, 7
        %v1096 = vsub.s32 0, %v1095
        %v1097 = vrot.slane %v1093, %v1096
        %v1098 = vadd.f32 %v1091, %v1097
        %v1099 = vadd.f32 %v1092, %v1097
        %v1100 = vmax.f32 %v1098, 0.0
        %v1101 = vmax.f32 %v1099, 0.0
        %v1102 = vmin.f32 %v1100, 6.0
        %v1103 = vmin.f32 %v1101, 6.0
        %p1104 = scmp.gt.s32.totalorder %s36, 0
        %s1105 = scalar_select %p1104, 1, 0
        %s1106 = scvt.s32.f32 %s1105
        %v1107 = vstv %s1106
        %v1108 = vmul.f32 %v1102, %v1107
        %v1109 = vmul.f32 %v1103, %v1107
        %1110 = vst [vmem:[#allocation2] sm:$0xff] %v1108
        %1111 = vst [vmem:[#allocation2 + $0x8] sm:$0xff] %v1109
        %v1112 = vld [vmem:[%s466] sm:$0xff]
        %v1113 = vld [vmem:[%s466 + $0x8] sm:$0xff]
        %v1114 = vpack.c.bf16 %v1113, %v1112
        %v1115 = vld [vmem:[#allocation9] sm:$0xf]
        %v1116 = vld [vmem:[#allocation9 + $0x4] sm:$0xf]
        %v1117 = vld [vmem:[#allocation9 + $0x8] sm:$0xf]
        %v1118 = vld [vmem:[#allocation9 + $0xc] sm:$0xf]
        %v1119 = vld [vmem:[#allocation9 + $0x10] sm:$0xf]
        %v1120 = vld [vmem:[#allocation9 + $0x14] sm:$0xf]
        %v1121 = vld [vmem:[#allocation9 + $0x18] sm:$0xf]
        %v1122 = vld [vmem:[#allocation9 + $0x1c] sm:$0xf]
        %v1123 = vld [vmem:[#allocation9 + $0x20] sm:$0xf]
        %v1124 = vld [vmem:[#allocation9 + $0x24] sm:$0xf]
        %v1125 = vld [vmem:[#allocation9 + $0x28] sm:$0xf]
        %v1126 = vld [vmem:[#allocation9 + $0x2c] sm:$0xf]
        %v1127 = vld [vmem:[#allocation9 + $0x30] sm:$0xf]
        %v1128 = vld [vmem:[#allocation9 + $0x34] sm:$0xf]
        %v1129 = vld [vmem:[#allocation9 + $0x38] sm:$0xf]
        %v1130 = vld [vmem:[#allocation9 + $0x3c] sm:$0xf]
        %v1147 = vunpack.c.l.b16 %v1115
        %v1148 = vunpack.c.l.b16 %v1116
        %v1149 = vunpack.c.l.b16 %v1117
        %v1150 = vunpack.c.l.b16 %v1118
        %v1151 = vunpack.c.l.b16 %v1119
        %v1152 = vunpack.c.l.b16 %v1120
        %v1153 = vunpack.c.l.b16 %v1121
        %v1154 = vunpack.c.l.b16 %v1122
        %v1155 = vunpack.c.l.b16 %v1123
        %v1156 = vunpack.c.l.b16 %v1124
        %v1157 = vunpack.c.l.b16 %v1125
        %v1158 = vunpack.c.l.b16 %v1126
        %v1159 = vunpack.c.l.b16 %v1127
        %v1160 = vunpack.c.l.b16 %v1128
        %v1161 = vunpack.c.l.b16 %v1129
        %v1162 = vunpack.c.l.b16 %v1130
        %v1163 = vpack.c.b16 %v1148, %v1147
        %v1164 = vpack.c.b16 %v1150, %v1149
        %v1165 = vpack.c.b16 %v1152, %v1151
        %v1166 = vpack.c.b16 %v1154, %v1153
        %v1167 = vpack.c.b16 %v1156, %v1155
        %v1168 = vpack.c.b16 %v1158, %v1157
        %v1169 = vpack.c.b16 %v1160, %v1159
        %v1170 = vpack.c.b16 %v1162, %v1161
        %1179 = vmatprep.subr.bf16.mxu0 0
        %1180 = vmatpush1.bf16.msra.mxu0 %v1170
        %1181 = vmatprep.subr.bf16.mxu0 0
        %1182 = vmatpush1.bf16.msra.mxu0 %v1169
        %1183 = vmatprep.subr.bf16.mxu0 0
        %1184 = vmatpush1.bf16.msra.mxu0 %v1168
        %1185 = vmatprep.subr.bf16.mxu0 0
        %1186 = vmatpush1.bf16.msra.mxu0 %v1167
        %1187 = vmatprep.subr.bf16.mxu0 0
        %1188 = vmatpush1.bf16.msra.mxu0 %v1166
        %1189 = vmatprep.subr.bf16.mxu0 0
        %1190 = vmatpush1.bf16.msra.mxu0 %v1165
        %1191 = vmatprep.subr.bf16.mxu0 0
        %1192 = vmatpush1.bf16.msra.mxu0 %v1164
        %1193 = vmatprep.subr.bf16.mxu0 0
        %1194 = vmatpush1.bf16.msra.mxu0 %v1163
        %1195 = vmatprep.subr.bf16.mxu0 0
        %1196 = vmatpush2.bf16.msra.mxu0 0
        %1197 = vmatprep.subr.bf16.mxu0 0
        %1198 = vmatpush2.bf16.msra.mxu0 0
        %1199 = vmatprep.subr.bf16.mxu0 0
        %1200 = vmatpush2.bf16.msra.mxu0 0
        %1201 = vmatprep.subr.bf16.mxu0 0
        %1202 = vmatpush2.bf16.msra.mxu0 0
        %1203 = vmatprep.subr.bf16.mxu0 0
        %1204 = vmatpush2.bf16.msra.mxu0 0
        %1205 = vmatprep.subr.bf16.mxu0 0
        %1206 = vmatpush2.bf16.msra.mxu0 0
        %1207 = vmatprep.subr.bf16.mxu0 0
        %1208 = vmatpush2.bf16.msra.mxu0 0
        %1209 = vmatprep.subr.bf16.mxu0 0
        %1210 = vmatpush2.bf16.msra.mxu0 0
        %1211 = vmatprep.mubr.bf16.mxu0 0
        %1212 = vmatmul.mubr.bf16.gmra.mxu0 %v1114
        %v1213 = vpop.f32.mrf.mxu0
        %v1214 = vadd.f32 0.0, %v1213
        %v1215 = vpop.f32.mrf.mxu0
        %v1216 = vpop.f32.mrf.mxu0
        %v1217 = vadd.f32 0.0, %v1216
        %v1218 = vpop.f32.mrf.mxu0
        %1219 = vdwg.mxu0
        %v1220 = vld [vmem:[%s4] sm:$0x1]
        %v1221 = vlaneseq
        %v1222 = vshrl.u32 %v1221, 7
        %v1223 = vsub.s32 0, %v1222
        %v1224 = vrot.slane %v1220, %v1223
        %v1225 = vmul.f32 %v1214, %v1224
        %v1226 = vmul.f32 %v1217, %v1224
        %v1227 = vld [vmem:[%s4 + $0x1] sm:$0x1]
        %v1228 = vlaneseq
        %v1229 = vshrl.u32 %v1228, 7
        %v1230 = vsub.s32 0, %v1229
        %v1231 = vrot.slane %v1227, %v1230
        %v1232 = vadd.f32 %v1225, %v1231
        %v1233 = vadd.f32 %v1226, %v1231
        %v1234 = vmax.f32 %v1232, 0.0
        %v1235 = vmax.f32 %v1233, 0.0
        %v1236 = vmin.f32 %v1234, 6.0
        %v1237 = vmin.f32 %v1235, 6.0
        %p1238 = scmp.lt.s32.totalorder %s36, 0
        %s1239 = scalar_select %p1238, 1, 0
        %s1240 = scvt.s32.f32 %s1239
        %v1241 = vstv %s1240
        %v1242 = vmul.f32 %v1236, %v1241
        %v1243 = vmul.f32 %v1237, %v1241
        %s1244 = scalar_lea.vmem [#allocation2], 272
        %1245 = vst [vmem:[%s1244] sm:$0xff] %v1242
        %1246 = vst [vmem:[%s1244 + $0x8] sm:$0xff] %v1243
        %v1247 = vld [vmem:[#allocation2] sm:$0xff]
        %v1248 = vld [vmem:[#allocation2 + $0x8] sm:$0xff]
        %v1249 = vld [vmem:[#allocation2 + $0x10] sm:$0xff]
        %v1250 = vld [vmem:[#allocation2 + $0x18] sm:$0xff]
        %v1251 = vld [vmem:[#allocation2 + $0x20] sm:$0xff]
        %v1252 = vld [vmem:[#allocation2 + $0x28] sm:$0xff]
        %v1253 = vld [vmem:[#allocation2 + $0x30] sm:$0xff]
        %v1254 = vld [vmem:[#allocation2 + $0x38] sm:$0xff]
        %v1255 = vld [vmem:[#allocation2 + $0x40] sm:$0xff]
        %v1256 = vld [vmem:[#allocation2 + $0x48] sm:$0xff]
        %v1257 = vld [vmem:[#allocation2 + $0x50] sm:$0xff]
        %v1258 = vld [vmem:[#allocation2 + $0x58] sm:$0xff]
        %v1259 = vld [vmem:[#allocation2 + $0x60] sm:$0xff]
        %v1260 = vld [vmem:[#allocation2 + $0x68] sm:$0xff]
        %v1261 = vld [vmem:[#allocation2 + $0x70] sm:$0xff]
        %v1262 = vld [vmem:[#allocation2 + $0x78] sm:$0xff]
        %v1263 = vld [vmem:[#allocation2 + $0x80] sm:$0xff]
        %v1264 = vld [vmem:[#allocation2 + $0x88] sm:$0xff]
        %v1265 = vld [vmem:[#allocation2 + $0x90] sm:$0xff]
        %v1266 = vld [vmem:[#allocation2 + $0x98] sm:$0xff]
        %v1267 = vld [vmem:[#allocation2 + $0xa0] sm:$0xff]
        %v1268 = vld [vmem:[#allocation2 + $0xa8] sm:$0xff]
        %v1269 = vld [vmem:[#allocation2 + $0xb0] sm:$0xff]
        %v1270 = vld [vmem:[#allocation2 + $0xb8] sm:$0xff]
        %v1271 = vld [vmem:[#allocation2 + $0xc0] sm:$0xff]
        %v1272 = vld [vmem:[#allocation2 + $0xc8] sm:$0xff]
        %v1273 = vld [vmem:[#allocation2 + $0xd0] sm:$0xff]
        %v1274 = vld [vmem:[#allocation2 + $0xd8] sm:$0xff]
        %v1275 = vld [vmem:[#allocation2 + $0xe0] sm:$0xff]
        %v1276 = vld [vmem:[#allocation2 + $0xe8] sm:$0xff]
        %v1277 = vld [vmem:[#allocation2 + $0xf0] sm:$0xff]
        %v1278 = vld [vmem:[#allocation2 + $0xf8] sm:$0xff]
        %v1279 = vld [vmem:[#allocation2 + $0x100] sm:$0xff]
        %v1280 = vld [vmem:[#allocation2 + $0x108] sm:$0xff]
        %v1281 = vld [vmem:[#allocation2 + $0x110] sm:$0xff]
        %v1282 = vld [vmem:[#allocation2 + $0x118] sm:$0xff]
        %v1283 = vlaneseq
        %v1284 = vshrl.u32 %v1283, 7
        %v1285 = vadd.s32 %v1284, 8
        %vm1286 = vcmp.ge.s32.totalorder %v1284, 1
        %vm1287 = vcmp.ge.s32.totalorder %v1285, 1
        %v1288 = vrot.slane %v1247, 7
        %v1289 = vrot.slane %v1249, 7
        %v1290 = vrot.slane %v1251, 7
        %v1291 = vrot.slane %v1253, 7
        %v1292 = vrot.slane %v1255, 7
        %v1293 = vrot.slane %v1257, 7
        %v1294 = vrot.slane %v1259, 7
        %v1295 = vrot.slane %v1261, 7
        %v1296 = vrot.slane %v1263, 7
        %v1297 = vrot.slane %v1265, 7
        %v1298 = vrot.slane %v1267, 7
        %v1299 = vrot.slane %v1269, 7
        %v1300 = vrot.slane %v1271, 7
        %v1301 = vrot.slane %v1273, 7
        %v1302 = vrot.slane %v1275, 7
        %v1303 = vrot.slane %v1277, 7
        %v1304 = vrot.slane %v1279, 7
        %v1305 = vrot.slane %v1281, 7
        %v1306 = vrot.slane %v1248, 7
        %v1307 = vrot.slane %v1250, 7
        %v1308 = vrot.slane %v1252, 7
        %v1309 = vrot.slane %v1254, 7
        %v1310 = vrot.slane %v1256, 7
        %v1311 = vrot.slane %v1258, 7
        %v1312 = vrot.slane %v1260, 7
        %v1313 = vrot.slane %v1262, 7
        %v1314 = vrot.slane %v1264, 7
        %v1315 = vrot.slane %v1266, 7
        %v1316 = vrot.slane %v1268, 7
        %v1317 = vrot.slane %v1270, 7
        %v1318 = vrot.slane %v1272, 7
        %v1319 = vrot.slane %v1274, 7
        %v1320 = vrot.slane %v1276, 7
        %v1321 = vrot.slane %v1278, 7
        %v1322 = vrot.slane %v1280, 7
        %v1323 = vrot.slane %v1282, 7
        %vm1324 = vcmp.lt.s32.totalorder %v1284, 1
        %v1325 = vsel %vm1324, %v1288, %v1306
        %v1326 = vsel %vm1324, %v1289, %v1307
        %v1327 = vsel %vm1324, %v1290, %v1308
        %v1328 = vsel %vm1324, %v1291, %v1309
        %v1329 = vsel %vm1324, %v1292, %v1310
        %v1330 = vsel %vm1324, %v1293, %v1311
        %v1331 = vsel %vm1324, %v1294, %v1312
        %v1332 = vsel %vm1324, %v1295, %v1313
        %v1333 = vsel %vm1324, %v1296, %v1314
        %v1334 = vsel %vm1324, %v1297, %v1315
        %v1335 = vsel %vm1324, %v1298, %v1316
        %v1336 = vsel %vm1324, %v1299, %v1317
        %v1337 = vsel %vm1324, %v1300, %v1318
        %v1338 = vsel %vm1324, %v1301, %v1319
        %v1339 = vsel %vm1324, %v1302, %v1320
        %v1340 = vsel %vm1324, %v1303, %v1321
        %v1341 = vsel %vm1324, %v1304, %v1322
        %v1342 = vsel %vm1324, %v1305, %v1323
        %v1343 = vsel %vm1324, %v1306, %v1288
        %v1344 = vsel %vm1324, %v1307, %v1289
        %v1345 = vsel %vm1324, %v1308, %v1290
        %v1346 = vsel %vm1324, %v1309, %v1291
        %v1347 = vsel %vm1324, %v1310, %v1292
        %v1348 = vsel %vm1324, %v1311, %v1293
        %v1349 = vsel %vm1324, %v1312, %v1294
        %v1350 = vsel %vm1324, %v1313, %v1295
        %v1351 = vsel %vm1324, %v1314, %v1296
        %v1352 = vsel %vm1324, %v1315, %v1297
        %v1353 = vsel %vm1324, %v1316, %v1298
        %v1354 = vsel %vm1324, %v1317, %v1299
        %v1355 = vsel %vm1324, %v1318, %v1300
        %v1356 = vsel %vm1324, %v1319, %v1301
        %v1357 = vsel %vm1324, %v1320, %v1302
        %v1358 = vsel %vm1324, %v1321, %v1303
        %v1359 = vsel %vm1324, %v1322, %v1304
        %v1360 = vsel %vm1324, %v1323, %v1305
        %v1361 = vsel %vm1286, 1, 0
        %v1362 = vsel %vm1287, 1, 0
        %vm1363 = vcmp.eq.s32.totalorder %v1361, 1
        %vm1364 = vcmp.eq.s32.totalorder %v1362, 1
        %v1365 = vsel %vm1363, %v1343, 0.0
        %v1366 = vsel %vm1364, %v1325, 0.0
        %v1367 = vsel %vm1363, %v1344, 0.0
        %v1368 = vsel %vm1364, %v1326, 0.0
        %v1369 = vsel %vm1363, %v1345, 0.0
        %v1370 = vsel %vm1364, %v1327, 0.0
        %v1371 = vsel %vm1363, %v1346, 0.0
        %v1372 = vsel %vm1364, %v1328, 0.0
        %v1373 = vsel %vm1363, %v1347, 0.0
        %v1374 = vsel %vm1364, %v1329, 0.0
        %v1375 = vsel %vm1363, %v1348, 0.0
        %v1376 = vsel %vm1364, %v1330, 0.0
        %v1377 = vsel %vm1363, %v1349, 0.0
        %v1378 = vsel %vm1364, %v1331, 0.0
        %v1379 = vsel %vm1363, %v1350, 0.0
        %v1380 = vsel %vm1364, %v1332, 0.0
        %v1381 = vsel %vm1363, %v1351, 0.0
        %v1382 = vsel %vm1364, %v1333, 0.0
        %v1383 = vsel %vm1363, %v1352, 0.0
        %v1384 = vsel %vm1364, %v1334, 0.0
        %v1385 = vsel %vm1363, %v1353, 0.0
        %v1386 = vsel %vm1364, %v1335, 0.0
        %v1387 = vsel %vm1363, %v1354, 0.0
        %v1388 = vsel %vm1364, %v1336, 0.0
        %v1389 = vsel %vm1363, %v1355, 0.0
        %v1390 = vsel %vm1364, %v1337, 0.0
        %v1391 = vsel %vm1363, %v1356, 0.0
        %v1392 = vsel %vm1364, %v1338, 0.0
        %v1393 = vsel %vm1363, %v1357, 0.0
        %v1394 = vsel %vm1364, %v1339, 0.0
        %v1395 = vsel %vm1363, %v1358, 0.0
        %v1396 = vsel %vm1364, %v1340, 0.0
        %v1397 = vsel %vm1363, %v1359, 0.0
        %v1398 = vsel %vm1364, %v1341, 0.0
        %v1399 = vsel %vm1363, %v1360, 0.0
        %v1400 = vsel %vm1364, %v1342, 0.0
        %vm1401 = vcmp.le.s32.totalorder %v1284, 14
        %vm1402 = vcmp.le.s32.totalorder %v1285, 14
        %v1403 = vrot.slane %v1247, 1
        %v1404 = vrot.slane %v1249, 1
        %v1405 = vrot.slane %v1251, 1
        %v1406 = vrot.slane %v1253, 1
        %v1407 = vrot.slane %v1255, 1
        %v1408 = vrot.slane %v1257, 1
        %v1409 = vrot.slane %v1259, 1
        %v1410 = vrot.slane %v1261, 1
        %v1411 = vrot.slane %v1263, 1
        %v1412 = vrot.slane %v1265, 1
        %v1413 = vrot.slane %v1267, 1
        %v1414 = vrot.slane %v1269, 1
        %v1415 = vrot.slane %v1271, 1
        %v1416 = vrot.slane %v1273, 1
        %v1417 = vrot.slane %v1275, 1
        %v1418 = vrot.slane %v1277, 1
        %v1419 = vrot.slane %v1279, 1
        %v1420 = vrot.slane %v1281, 1
        %v1421 = vrot.slane %v1248, 1
        %v1422 = vrot.slane %v1250, 1
        %v1423 = vrot.slane %v1252, 1
        %v1424 = vrot.slane %v1254, 1
        %v1425 = vrot.slane %v1256, 1
        %v1426 = vrot.slane %v1258, 1
        %v1427 = vrot.slane %v1260, 1
        %v1428 = vrot.slane %v1262, 1
        %v1429 = vrot.slane %v1264, 1
        %v1430 = vrot.slane %v1266, 1
        %v1431 = vrot.slane %v1268, 1
        %v1432 = vrot.slane %v1270, 1
        %v1433 = vrot.slane %v1272, 1
        %v1434 = vrot.slane %v1274, 1
        %v1435 = vrot.slane %v1276, 1
        %v1436 = vrot.slane %v1278, 1
        %v1437 = vrot.slane %v1280, 1
        %v1438 = vrot.slane %v1282, 1
        %vm1439 = vcmp.lt.s32.totalorder %v1284, 7
        %v1440 = vsel %vm1439, %v1403, %v1421
        %v1441 = vsel %vm1439, %v1404, %v1422
        %v1442 = vsel %vm1439, %v1405, %v1423
        %v1443 = vsel %vm1439, %v1406, %v1424
        %v1444 = vsel %vm1439, %v1407, %v1425
        %v1445 = vsel %vm1439, %v1408, %v1426
        %v1446 = vsel %vm1439, %v1409, %v1427
        %v1447 = vsel %vm1439, %v1410, %v1428
        %v1448 = vsel %vm1439, %v1411, %v1429
        %v1449 = vsel %vm1439, %v1412, %v1430
        %v1450 = vsel %vm1439, %v1413, %v1431
        %v1451 = vsel %vm1439, %v1414, %v1432
        %v1452 = vsel %vm1439, %v1415, %v1433
        %v1453 = vsel %vm1439, %v1416, %v1434
        %v1454 = vsel %vm1439, %v1417, %v1435
        %v1455 = vsel %vm1439, %v1418, %v1436
        %v1456 = vsel %vm1439, %v1419, %v1437
        %v1457 = vsel %vm1439, %v1420, %v1438
        %v1458 = vsel %vm1439, %v1421, %v1403
        %v1459 = vsel %vm1439, %v1422, %v1404
        %v1460 = vsel %vm1439, %v1423, %v1405
        %v1461 = vsel %vm1439, %v1424, %v1406
        %v1462 = vsel %vm1439, %v1425, %v1407
        %v1463 = vsel %vm1439, %v1426, %v1408
        %v1464 = vsel %vm1439, %v1427, %v1409
        %v1465 = vsel %vm1439, %v1428, %v1410
        %v1466 = vsel %vm1439, %v1429, %v1411
        %v1467 = vsel %vm1439, %v1430, %v1412
        %v1468 = vsel %vm1439, %v1431, %v1413
        %v1469 = vsel %vm1439, %v1432, %v1414
        %v1470 = vsel %vm1439, %v1433, %v1415
        %v1471 = vsel %vm1439, %v1434, %v1416
        %v1472 = vsel %vm1439, %v1435, %v1417
        %v1473 = vsel %vm1439, %v1436, %v1418
        %v1474 = vsel %vm1439, %v1437, %v1419
        %v1475 = vsel %vm1439, %v1438, %v1420
        %v1476 = vsel %vm1401, 1, 0
        %v1477 = vsel %vm1402, 1, 0
        %vm1478 = vcmp.eq.s32.totalorder %v1476, 1
        %vm1479 = vcmp.eq.s32.totalorder %v1477, 1
        %v1480 = vsel %vm1478, %v1440, 0.0
        %v1481 = vsel %vm1479, %v1458, 0.0
        %v1482 = vsel %vm1478, %v1441, 0.0
        %v1483 = vsel %vm1479, %v1459, 0.0
        %v1484 = vsel %vm1478, %v1442, 0.0
        %v1485 = vsel %vm1479, %v1460, 0.0
        %v1486 = vsel %vm1478, %v1443, 0.0
        %v1487 = vsel %vm1479, %v1461, 0.0
        %v1488 = vsel %vm1478, %v1444, 0.0
        %v1489 = vsel %vm1479, %v1462, 0.0
        %v1490 = vsel %vm1478, %v1445, 0.0
        %v1491 = vsel %vm1479, %v1463, 0.0
        %v1492 = vsel %vm1478, %v1446, 0.0
        %v1493 = vsel %vm1479, %v1464, 0.0
        %v1494 = vsel %vm1478, %v1447, 0.0
        %v1495 = vsel %vm1479, %v1465, 0.0
        %v1496 = vsel %vm1478, %v1448, 0.0
        %v1497 = vsel %vm1479, %v1466, 0.0
        %v1498 = vsel %vm1478, %v1449, 0.0
        %v1499 = vsel %vm1479, %v1467, 0.0
        %v1500 = vsel %vm1478, %v1450, 0.0
        %v1501 = vsel %vm1479, %v1468, 0.0
        %v1502 = vsel %vm1478, %v1451, 0.0
        %v1503 = vsel %vm1479, %v1469, 0.0
        %v1504 = vsel %vm1478, %v1452, 0.0
        %v1505 = vsel %vm1479, %v1470, 0.0
        %v1506 = vsel %vm1478, %v1453, 0.0
        %v1507 = vsel %vm1479, %v1471, 0.0
        %v1508 = vsel %vm1478, %v1454, 0.0
        %v1509 = vsel %vm1479, %v1472, 0.0
        %v1510 = vsel %vm1478, %v1455, 0.0
        %v1511 = vsel %vm1479, %v1473, 0.0
        %v1512 = vsel %vm1478, %v1456, 0.0
        %v1513 = vsel %vm1479, %v1474, 0.0
        %v1514 = vsel %vm1478, %v1457, 0.0
        %v1515 = vsel %vm1479, %v1475, 0.0
        %v1516 = vld [vmem:[#allocation11] sm:$0x1]
        %v1517 = vlaneseq
        %v1518 = vshrl.u32 %v1517, 7
        %v1519 = vsub.s32 0, %v1518
        %v1520 = vrot.slane %v1516, %v1519
        %v1521 = vmul.f32 %v1365, %v1520
        %v1522 = vmul.f32 %v1366, %v1520
        %v1523 = vmul.f32 %v1367, %v1520
        %v1524 = vmul.f32 %v1368, %v1520
        %v1525 = vmul.f32 %v1369, %v1520
        %v1526 = vmul.f32 %v1370, %v1520
        %v1527 = vmul.f32 %v1371, %v1520
        %v1528 = vmul.f32 %v1372, %v1520
        %v1529 = vmul.f32 %v1373, %v1520
        %v1530 = vmul.f32 %v1374, %v1520
        %v1531 = vmul.f32 %v1375, %v1520
        %v1532 = vmul.f32 %v1376, %v1520
        %v1533 = vmul.f32 %v1377, %v1520
        %v1534 = vmul.f32 %v1378, %v1520
        %v1535 = vmul.f32 %v1379, %v1520
        %v1536 = vmul.f32 %v1380, %v1520
        %v1537 = vmul.f32 %v1381, %v1520
        %v1538 = vmul.f32 %v1382, %v1520
        %v1539 = vmul.f32 %v1383, %v1520
        %v1540 = vmul.f32 %v1384, %v1520
        %v1541 = vmul.f32 %v1385, %v1520
        %v1542 = vmul.f32 %v1386, %v1520
        %v1543 = vmul.f32 %v1387, %v1520
        %v1544 = vmul.f32 %v1388, %v1520
        %v1545 = vmul.f32 %v1389, %v1520
        %v1546 = vmul.f32 %v1390, %v1520
        %v1547 = vmul.f32 %v1391, %v1520
        %v1548 = vmul.f32 %v1392, %v1520
        %v1549 = vmul.f32 %v1393, %v1520
        %v1550 = vmul.f32 %v1394, %v1520
        %v1551 = vmul.f32 %v1395, %v1520
        %v1552 = vmul.f32 %v1396, %v1520
        %v1553 = vld [vmem:[#allocation11 + $0x1] sm:$0x1]
        %v1554 = vlaneseq
        %v1555 = vshrl.u32 %v1554, 7
        %v1556 = vsub.s32 0, %v1555
        %v1557 = vrot.slane %v1553, %v1556
        %v1558 = vmul.f32 %v1247, %v1557
        %v1559 = vmul.f32 %v1248, %v1557
        %v1560 = vmul.f32 %v1249, %v1557
        %v1561 = vmul.f32 %v1250, %v1557
        %v1562 = vmul.f32 %v1251, %v1557
        %v1563 = vmul.f32 %v1252, %v1557
        %v1564 = vmul.f32 %v1253, %v1557
        %v1565 = vmul.f32 %v1254, %v1557
        %v1566 = vmul.f32 %v1255, %v1557
        %v1567 = vmul.f32 %v1256, %v1557
        %v1568 = vmul.f32 %v1257, %v1557
        %v1569 = vmul.f32 %v1258, %v1557
        %v1570 = vmul.f32 %v1259, %v1557
        %v1571 = vmul.f32 %v1260, %v1557
        %v1572 = vmul.f32 %v1261, %v1557
        %v1573 = vmul.f32 %v1262, %v1557
        %v1574 = vmul.f32 %v1263, %v1557
        %v1575 = vmul.f32 %v1264, %v1557
        %v1576 = vmul.f32 %v1265, %v1557
        %v1577 = vmul.f32 %v1266, %v1557
        %v1578 = vmul.f32 %v1267, %v1557
        %v1579 = vmul.f32 %v1268, %v1557
        %v1580 = vmul.f32 %v1269, %v1557
        %v1581 = vmul.f32 %v1270, %v1557
        %v1582 = vmul.f32 %v1271, %v1557
        %v1583 = vmul.f32 %v1272, %v1557
        %v1584 = vmul.f32 %v1273, %v1557
        %v1585 = vmul.f32 %v1274, %v1557
        %v1586 = vmul.f32 %v1275, %v1557
        %v1587 = vmul.f32 %v1276, %v1557
        %v1588 = vmul.f32 %v1277, %v1557
        %v1589 = vmul.f32 %v1278, %v1557
        %v1590 = vadd.f32 %v1521, %v1558
        %v1591 = vadd.f32 %v1522, %v1559
        %v1592 = vadd.f32 %v1523, %v1560
        %v1593 = vadd.f32 %v1524, %v1561
        %v1594 = vadd.f32 %v1525, %v1562
        %v1595 = vadd.f32 %v1526, %v1563
        %v1596 = vadd.f32 %v1527, %v1564
        %v1597 = vadd.f32 %v1528, %v1565
        %v1598 = vadd.f32 %v1529, %v1566
        %v1599 = vadd.f32 %v1530, %v1567
        %v1600 = vadd.f32 %v1531, %v1568
        %v1601 = vadd.f32 %v1532, %v1569
        %v1602 = vadd.f32 %v1533, %v1570
        %v1603 = vadd.f32 %v1534, %v1571
        %v1604 = vadd.f32 %v1535, %v1572
        %v1605 = vadd.f32 %v1536, %v1573
        %v1606 = vadd.f32 %v1537, %v1574
        %v1607 = vadd.f32 %v1538, %v1575
        %v1608 = vadd.f32 %v1539, %v1576
        %v1609 = vadd.f32 %v1540, %v1577
        %v1610 = vadd.f32 %v1541, %v1578
        %v1611 = vadd.f32 %v1542, %v1579
        %v1612 = vadd.f32 %v1543, %v1580
        %v1613 = vadd.f32 %v1544, %v1581
        %v1614 = vadd.f32 %v1545, %v1582
        %v1615 = vadd.f32 %v1546, %v1583
        %v1616 = vadd.f32 %v1547, %v1584
        %v1617 = vadd.f32 %v1548, %v1585
        %v1618 = vadd.f32 %v1549, %v1586
        %v1619 = vadd.f32 %v1550, %v1587
        %v1620 = vadd.f32 %v1551, %v1588
        %v1621 = vadd.f32 %v1552, %v1589
        %v1622 = vld [vmem:[#allocation11 + $0x2] sm:$0x1]
        %v1623 = vlaneseq
        %v1624 = vshrl.u32 %v1623, 7
        %v1625 = vsub.s32 0, %v1624
        %v1626 = vrot.slane %v1622, %v1625
        %v1627 = vmul.f32 %v1480, %v1626
        %v1628 = vmul.f32 %v1481, %v1626
        %v1629 = vmul.f32 %v1482, %v1626
        %v1630 = vmul.f32 %v1483, %v1626
        %v1631 = vmul.f32 %v1484, %v1626
        %v1632 = vmul.f32 %v1485, %v1626
        %v1633 = vmul.f32 %v1486, %v1626
        %v1634 = vmul.f32 %v1487, %v1626
        %v1635 = vmul.f32 %v1488, %v1626
        %v1636 = vmul.f32 %v1489, %v1626
        %v1637 = vmul.f32 %v1490, %v1626
        %v1638 = vmul.f32 %v1491, %v1626
        %v1639 = vmul.f32 %v1492, %v1626
        %v1640 = vmul.f32 %v1493, %v1626
        %v1641 = vmul.f32 %v1494, %v1626
        %v1642 = vmul.f32 %v1495, %v1626
        %v1643 = vmul.f32 %v1496, %v1626
        %v1644 = vmul.f32 %v1497, %v1626
        %v1645 = vmul.f32 %v1498, %v1626
        %v1646 = vmul.f32 %v1499, %v1626
        %v1647 = vmul.f32 %v1500, %v1626
        %v1648 = vmul.f32 %v1501, %v1626
        %v1649 = vmul.f32 %v1502, %v1626
        %v1650 = vmul.f32 %v1503, %v1626
        %v1651 = vmul.f32 %v1504, %v1626
        %v1652 = vmul.f32 %v1505, %v1626
        %v1653 = vmul.f32 %v1506, %v1626
        %v1654 = vmul.f32 %v1507, %v1626
        %v1655 = vmul.f32 %v1508, %v1626
        %v1656 = vmul.f32 %v1509, %v1626
        %v1657 = vmul.f32 %v1510, %v1626
        %v1658 = vmul.f32 %v1511, %v1626
        %v1659 = vadd.f32 %v1590, %v1627
        %v1660 = vadd.f32 %v1591, %v1628
        %v1661 = vadd.f32 %v1592, %v1629
        %v1662 = vadd.f32 %v1593, %v1630
        %v1663 = vadd.f32 %v1594, %v1631
        %v1664 = vadd.f32 %v1595, %v1632
        %v1665 = vadd.f32 %v1596, %v1633
        %v1666 = vadd.f32 %v1597, %v1634
        %v1667 = vadd.f32 %v1598, %v1635
        %v1668 = vadd.f32 %v1599, %v1636
        %v1669 = vadd.f32 %v1600, %v1637
        %v1670 = vadd.f32 %v1601, %v1638
        %v1671 = vadd.f32 %v1602, %v1639
        %v1672 = vadd.f32 %v1603, %v1640
        %v1673 = vadd.f32 %v1604, %v1641
        %v1674 = vadd.f32 %v1605, %v1642
        %v1675 = vadd.f32 %v1606, %v1643
        %v1676 = vadd.f32 %v1607, %v1644
        %v1677 = vadd.f32 %v1608, %v1645
        %v1678 = vadd.f32 %v1609, %v1646
        %v1679 = vadd.f32 %v1610, %v1647
        %v1680 = vadd.f32 %v1611, %v1648
        %v1681 = vadd.f32 %v1612, %v1649
        %v1682 = vadd.f32 %v1613, %v1650
        %v1683 = vadd.f32 %v1614, %v1651
        %v1684 = vadd.f32 %v1615, %v1652
        %v1685 = vadd.f32 %v1616, %v1653
        %v1686 = vadd.f32 %v1617, %v1654
        %v1687 = vadd.f32 %v1618, %v1655
        %v1688 = vadd.f32 %v1619, %v1656
        %v1689 = vadd.f32 %v1620, %v1657
        %v1690 = vadd.f32 %v1621, %v1658
        %v1691 = vld [vmem:[#allocation11 + $0x3] sm:$0x1]
        %v1692 = vlaneseq
        %v1693 = vshrl.u32 %v1692, 7
        %v1694 = vsub.s32 0, %v1693
        %v1695 = vrot.slane %v1691, %v1694
        %v1696 = vmul.f32 %v1367, %v1695
        %v1697 = vmul.f32 %v1368, %v1695
        %v1698 = vmul.f32 %v1369, %v1695
        %v1699 = vmul.f32 %v1370, %v1695
        %v1700 = vmul.f32 %v1371, %v1695
        %v1701 = vmul.f32 %v1372, %v1695
        %v1702 = vmul.f32 %v1373, %v1695
        %v1703 = vmul.f32 %v1374, %v1695
        %v1704 = vmul.f32 %v1375, %v1695
        %v1705 = vmul.f32 %v1376, %v1695
        %v1706 = vmul.f32 %v1377, %v1695
        %v1707 = vmul.f32 %v1378, %v1695
        %v1708 = vmul.f32 %v1379, %v1695
        %v1709 = vmul.f32 %v1380, %v1695
        %v1710 = vmul.f32 %v1381, %v1695
        %v1711 = vmul.f32 %v1382, %v1695
        %v1712 = vmul.f32 %v1383, %v1695
        %v1713 = vmul.f32 %v1384, %v1695
        %v1714 = vmul.f32 %v1385, %v1695
        %v1715 = vmul.f32 %v1386, %v1695
        %v1716 = vmul.f32 %v1387, %v1695
        %v1717 = vmul.f32 %v1388, %v1695
        %v1718 = vmul.f32 %v1389, %v1695
        %v1719 = vmul.f32 %v1390, %v1695
        %v1720 = vmul.f32 %v1391, %v1695
        %v1721 = vmul.f32 %v1392, %v1695
        %v1722 = vmul.f32 %v1393, %v1695
        %v1723 = vmul.f32 %v1394, %v1695
        %v1724 = vmul.f32 %v1395, %v1695
        %v1725 = vmul.f32 %v1396, %v1695
        %v1726 = vmul.f32 %v1397, %v1695
        %v1727 = vmul.f32 %v1398, %v1695
        %v1728 = vadd.f32 %v1659, %v1696
        %v1729 = vadd.f32 %v1660, %v1697
        %v1730 = vadd.f32 %v1661, %v1698
        %v1731 = vadd.f32 %v1662, %v1699
        %v1732 = vadd.f32 %v1663, %v1700
        %v1733 = vadd.f32 %v1664, %v1701
        %v1734 = vadd.f32 %v1665, %v1702
        %v1735 = vadd.f32 %v1666, %v1703
        %v1736 = vadd.f32 %v1667, %v1704
        %v1737 = vadd.f32 %v1668, %v1705
        %v1738 = vadd.f32 %v1669, %v1706
        %v1739 = vadd.f32 %v1670, %v1707
        %v1740 = vadd.f32 %v1671, %v1708
        %v1741 = vadd.f32 %v1672, %v1709
        %v1742 = vadd.f32 %v1673, %v1710
        %v1743 = vadd.f32 %v1674, %v1711
        %v1744 = vadd.f32 %v1675, %v1712
        %v1745 = vadd.f32 %v1676, %v1713
        %v1746 = vadd.f32 %v1677, %v1714
        %v1747 = vadd.f32 %v1678, %v1715
        %v1748 = vadd.f32 %v1679, %v1716
        %v1749 = vadd.f32 %v1680, %v1717
        %v1750 = vadd.f32 %v1681, %v1718
        %v1751 = vadd.f32 %v1682, %v1719
        %v1752 = vadd.f32 %v1683, %v1720
        %v1753 = vadd.f32 %v1684, %v1721
        %v1754 = vadd.f32 %v1685, %v1722
        %v1755 = vadd.f32 %v1686, %v1723
        %v1756 = vadd.f32 %v1687, %v1724
        %v1757 = vadd.f32 %v1688, %v1725
        %v1758 = vadd.f32 %v1689, %v1726
        %v1759 = vadd.f32 %v1690, %v1727
        %v1760 = vld [vmem:[#allocation11 + $0x4] sm:$0x1]
        %v1761 = vlaneseq
        %v1762 = vshrl.u32 %v1761, 7
        %v1763 = vsub.s32 0, %v1762
        %v1764 = vrot.slane %v1760, %v1763
        %v1765 = vmul.f32 %v1249, %v1764
        %v1766 = vmul.f32 %v1250, %v1764
        %v1767 = vmul.f32 %v1251, %v1764
        %v1768 = vmul.f32 %v1252, %v1764
        %v1769 = vmul.f32 %v1253, %v1764
        %v1770 = vmul.f32 %v1254, %v1764
        %v1771 = vmul.f32 %v1255, %v1764
        %v1772 = vmul.f32 %v1256, %v1764
        %v1773 = vmul.f32 %v1257, %v1764
        %v1774 = vmul.f32 %v1258, %v1764
        %v1775 = vmul.f32 %v1259, %v1764
        %v1776 = vmul.f32 %v1260, %v1764
        %v1777 = vmul.f32 %v1261, %v1764
        %v1778 = vmul.f32 %v1262, %v1764
        %v1779 = vmul.f32 %v1263, %v1764
        %v1780 = vmul.f32 %v1264, %v1764
        %v1781 = vmul.f32 %v1265, %v1764
        %v1782 = vmul.f32 %v1266, %v1764
        %v1783 = vmul.f32 %v1267, %v1764
        %v1784 = vmul.f32 %v1268, %v1764
        %v1785 = vmul.f32 %v1269, %v1764
        %v1786 = vmul.f32 %v1270, %v1764
        %v1787 = vmul.f32 %v1271, %v1764
        %v1788 = vmul.f32 %v1272, %v1764
        %v1789 = vmul.f32 %v1273, %v1764
        %v1790 = vmul.f32 %v1274, %v1764
        %v1791 = vmul.f32 %v1275, %v1764
        %v1792 = vmul.f32 %v1276, %v1764
        %v1793 = vmul.f32 %v1277, %v1764
        %v1794 = vmul.f32 %v1278, %v1764
        %v1795 = vmul.f32 %v1279, %v1764
        %v1796 = vmul.f32 %v1280, %v1764
        %v1797 = vadd.f32 %v1728, %v1765
        %v1798 = vadd.f32 %v1729, %v1766
        %v1799 = vadd.f32 %v1730, %v1767
        %v1800 = vadd.f32 %v1731, %v1768
        %v1801 = vadd.f32 %v1732, %v1769
        %v1802 = vadd.f32 %v1733, %v1770
        %v1803 = vadd.f32 %v1734, %v1771
        %v1804 = vadd.f32 %v1735, %v1772
        %v1805 = vadd.f32 %v1736, %v1773
        %v1806 = vadd.f32 %v1737, %v1774
        %v1807 = vadd.f32 %v1738, %v1775
        %v1808 = vadd.f32 %v1739, %v1776
        %v1809 = vadd.f32 %v1740, %v1777
        %v1810 = vadd.f32 %v1741, %v1778
        %v1811 = vadd.f32 %v1742, %v1779
        %v1812 = vadd.f32 %v1743, %v1780
        %v1813 = vadd.f32 %v1744, %v1781
        %v1814 = vadd.f32 %v1745, %v1782
        %v1815 = vadd.f32 %v1746, %v1783
        %v1816 = vadd.f32 %v1747, %v1784
        %v1817 = vadd.f32 %v1748, %v1785
        %v1818 = vadd.f32 %v1749, %v1786
        %v1819 = vadd.f32 %v1750, %v1787
        %v1820 = vadd.f32 %v1751, %v1788
        %v1821 = vadd.f32 %v1752, %v1789
        %v1822 = vadd.f32 %v1753, %v1790
        %v1823 = vadd.f32 %v1754, %v1791
        %v1824 = vadd.f32 %v1755, %v1792
        %v1825 = vadd.f32 %v1756, %v1793
        %v1826 = vadd.f32 %v1757, %v1794
        %v1827 = vadd.f32 %v1758, %v1795
        %v1828 = vadd.f32 %v1759, %v1796
        %v1829 = vld [vmem:[#allocation11 + $0x5] sm:$0x1]
        %v1830 = vlaneseq
        %v1831 = vshrl.u32 %v1830, 7
        %v1832 = vsub.s32 0, %v1831
        %v1833 = vrot.slane %v1829, %v1832
        %v1834 = vmul.f32 %v1482, %v1833
        %v1835 = vmul.f32 %v1483, %v1833
        %v1836 = vmul.f32 %v1484, %v1833
        %v1837 = vmul.f32 %v1485, %v1833
        %v1838 = vmul.f32 %v1486, %v1833
        %v1839 = vmul.f32 %v1487, %v1833
        %v1840 = vmul.f32 %v1488, %v1833
        %v1841 = vmul.f32 %v1489, %v1833
        %v1842 = vmul.f32 %v1490, %v1833
        %v1843 = vmul.f32 %v1491, %v1833
        %v1844 = vmul.f32 %v1492, %v1833
        %v1845 = vmul.f32 %v1493, %v1833
        %v1846 = vmul.f32 %v1494, %v1833
        %v1847 = vmul.f32 %v1495, %v1833
        %v1848 = vmul.f32 %v1496, %v1833
        %v1849 = vmul.f32 %v1497, %v1833
        %v1850 = vmul.f32 %v1498, %v1833
        %v1851 = vmul.f32 %v1499, %v1833
        %v1852 = vmul.f32 %v1500, %v1833
        %v1853 = vmul.f32 %v1501, %v1833
        %v1854 = vmul.f32 %v1502, %v1833
        %v1855 = vmul.f32 %v1503, %v1833
        %v1856 = vmul.f32 %v1504, %v1833
        %v1857 = vmul.f32 %v1505, %v1833
        %v1858 = vmul.f32 %v1506, %v1833
        %v1859 = vmul.f32 %v1507, %v1833
        %v1860 = vmul.f32 %v1508, %v1833
        %v1861 = vmul.f32 %v1509, %v1833
        %v1862 = vmul.f32 %v1510, %v1833
        %v1863 = vmul.f32 %v1511, %v1833
        %v1864 = vmul.f32 %v1512, %v1833
        %v1865 = vmul.f32 %v1513, %v1833
        %v1866 = vadd.f32 %v1797, %v1834
        %v1867 = vadd.f32 %v1798, %v1835
        %v1868 = vadd.f32 %v1799, %v1836
        %v1869 = vadd.f32 %v1800, %v1837
        %v1870 = vadd.f32 %v1801, %v1838
        %v1871 = vadd.f32 %v1802, %v1839
        %v1872 = vadd.f32 %v1803, %v1840
        %v1873 = vadd.f32 %v1804, %v1841
        %v1874 = vadd.f32 %v1805, %v1842
        %v1875 = vadd.f32 %v1806, %v1843
        %v1876 = vadd.f32 %v1807, %v1844
        %v1877 = vadd.f32 %v1808, %v1845
        %v1878 = vadd.f32 %v1809, %v1846
        %v1879 = vadd.f32 %v1810, %v1847
        %v1880 = vadd.f32 %v1811, %v1848
        %v1881 = vadd.f32 %v1812, %v1849
        %v1882 = vadd.f32 %v1813, %v1850
        %v1883 = vadd.f32 %v1814, %v1851
        %v1884 = vadd.f32 %v1815, %v1852
        %v1885 = vadd.f32 %v1816, %v1853
        %v1886 = vadd.f32 %v1817, %v1854
        %v1887 = vadd.f32 %v1818, %v1855
        %v1888 = vadd.f32 %v1819, %v1856
        %v1889 = vadd.f32 %v1820, %v1857
        %v1890 = vadd.f32 %v1821, %v1858
        %v1891 = vadd.f32 %v1822, %v1859
        %v1892 = vadd.f32 %v1823, %v1860
        %v1893 = vadd.f32 %v1824, %v1861
        %v1894 = vadd.f32 %v1825, %v1862
        %v1895 = vadd.f32 %v1826, %v1863
        %v1896 = vadd.f32 %v1827, %v1864
        %v1897 = vadd.f32 %v1828, %v1865
        %v1898 = vld [vmem:[#allocation11 + $0x6] sm:$0x1]
        %v1899 = vlaneseq
        %v1900 = vshrl.u32 %v1899, 7
        %v1901 = vsub.s32 0, %v1900
        %v1902 = vrot.slane %v1898, %v1901
        %v1903 = vmul.f32 %v1369, %v1902
        %v1904 = vmul.f32 %v1370, %v1902
        %v1905 = vmul.f32 %v1371, %v1902
        %v1906 = vmul.f32 %v1372, %v1902
        %v1907 = vmul.f32 %v1373, %v1902
        %v1908 = vmul.f32 %v1374, %v1902
        %v1909 = vmul.f32 %v1375, %v1902
        %v1910 = vmul.f32 %v1376, %v1902
        %v1911 = vmul.f32 %v1377, %v1902
        %v1912 = vmul.f32 %v1378, %v1902
        %v1913 = vmul.f32 %v1379, %v1902
        %v1914 = vmul.f32 %v1380, %v1902
        %v1915 = vmul.f32 %v1381, %v1902
        %v1916 = vmul.f32 %v1382, %v1902
        %v1917 = vmul.f32 %v1383, %v1902
        %v1918 = vmul.f32 %v1384, %v1902
        %v1919 = vmul.f32 %v1385, %v1902
        %v1920 = vmul.f32 %v1386, %v1902
        %v1921 = vmul.f32 %v1387, %v1902
        %v1922 = vmul.f32 %v1388, %v1902
        %v1923 = vmul.f32 %v1389, %v1902
        %v1924 = vmul.f32 %v1390, %v1902
        %v1925 = vmul.f32 %v1391, %v1902
        %v1926 = vmul.f32 %v1392, %v1902
        %v1927 = vmul.f32 %v1393, %v1902
        %v1928 = vmul.f32 %v1394, %v1902
        %v1929 = vmul.f32 %v1395, %v1902
        %v1930 = vmul.f32 %v1396, %v1902
        %v1931 = vmul.f32 %v1397, %v1902
        %v1932 = vmul.f32 %v1398, %v1902
        %v1933 = vmul.f32 %v1399, %v1902
        %v1934 = vmul.f32 %v1400, %v1902
        %v1935 = vadd.f32 %v1866, %v1903
        %v1936 = vadd.f32 %v1867, %v1904
        %v1937 = vadd.f32 %v1868, %v1905
        %v1938 = vadd.f32 %v1869, %v1906
        %v1939 = vadd.f32 %v1870, %v1907
        %v1940 = vadd.f32 %v1871, %v1908
        %v1941 = vadd.f32 %v1872, %v1909
        %v1942 = vadd.f32 %v1873, %v1910
        %v1943 = vadd.f32 %v1874, %v1911
        %v1944 = vadd.f32 %v1875, %v1912
        %v1945 = vadd.f32 %v1876, %v1913
        %v1946 = vadd.f32 %v1877, %v1914
        %v1947 = vadd.f32 %v1878, %v1915
        %v1948 = vadd.f32 %v1879, %v1916
        %v1949 = vadd.f32 %v1880, %v1917
        %v1950 = vadd.f32 %v1881, %v1918
        %v1951 = vadd.f32 %v1882, %v1919
        %v1952 = vadd.f32 %v1883, %v1920
        %v1953 = vadd.f32 %v1884, %v1921
        %v1954 = vadd.f32 %v1885, %v1922
        %v1955 = vadd.f32 %v1886, %v1923
        %v1956 = vadd.f32 %v1887, %v1924
        %v1957 = vadd.f32 %v1888, %v1925
        %v1958 = vadd.f32 %v1889, %v1926
        %v1959 = vadd.f32 %v1890, %v1927
        %v1960 = vadd.f32 %v1891, %v1928
        %v1961 = vadd.f32 %v1892, %v1929
        %v1962 = vadd.f32 %v1893, %v1930
        %v1963 = vadd.f32 %v1894, %v1931
        %v1964 = vadd.f32 %v1895, %v1932
        %v1965 = vadd.f32 %v1896, %v1933
        %v1966 = vadd.f32 %v1897, %v1934
        %v1967 = vld [vmem:[#allocation11 + $0x7] sm:$0x1]
        %v1968 = vlaneseq
        %v1969 = vshrl.u32 %v1968, 7
        %v1970 = vsub.s32 0, %v1969
        %v1971 = vrot.slane %v1967, %v1970
        %v1972 = vmul.f32 %v1251, %v1971
        %v1973 = vmul.f32 %v1252, %v1971
        %v1974 = vmul.f32 %v1253, %v1971
        %v1975 = vmul.f32 %v1254, %v1971
        %v1976 = vmul.f32 %v1255, %v1971
        %v1977 = vmul.f32 %v1256, %v1971
        %v1978 = vmul.f32 %v1257, %v1971
        %v1979 = vmul.f32 %v1258, %v1971
        %v1980 = vmul.f32 %v1259, %v1971
        %v1981 = vmul.f32 %v1260, %v1971
        %v1982 = vmul.f32 %v1261, %v1971
        %v1983 = vmul.f32 %v1262, %v1971
        %v1984 = vmul.f32 %v1263, %v1971
        %v1985 = vmul.f32 %v1264, %v1971
        %v1986 = vmul.f32 %v1265, %v1971
        %v1987 = vmul.f32 %v1266, %v1971
        %v1988 = vmul.f32 %v1267, %v1971
        %v1989 = vmul.f32 %v1268, %v1971
        %v1990 = vmul.f32 %v1269, %v1971
        %v1991 = vmul.f32 %v1270, %v1971
        %v1992 = vmul.f32 %v1271, %v1971
        %v1993 = vmul.f32 %v1272, %v1971
        %v1994 = vmul.f32 %v1273, %v1971
        %v1995 = vmul.f32 %v1274, %v1971
        %v1996 = vmul.f32 %v1275, %v1971
        %v1997 = vmul.f32 %v1276, %v1971
        %v1998 = vmul.f32 %v1277, %v1971
        %v1999 = vmul.f32 %v1278, %v1971
        %v2000 = vmul.f32 %v1279, %v1971
        %v2001 = vmul.f32 %v1280, %v1971
        %v2002 = vmul.f32 %v1281, %v1971
        %v2003 = vmul.f32 %v1282, %v1971
        %v2004 = vadd.f32 %v1935, %v1972
        %v2005 = vadd.f32 %v1936, %v1973
        %v2006 = vadd.f32 %v1937, %v1974
        %v2007 = vadd.f32 %v1938, %v1975
        %v2008 = vadd.f32 %v1939, %v1976
        %v2009 = vadd.f32 %v1940, %v1977
        %v2010 = vadd.f32 %v1941, %v1978
        %v2011 = vadd.f32 %v1942, %v1979
        %v2012 = vadd.f32 %v1943, %v1980
        %v2013 = vadd.f32 %v1944, %v1981
        %v2014 = vadd.f32 %v1945, %v1982
        %v2015 = vadd.f32 %v1946, %v1983
        %v2016 = vadd.f32 %v1947, %v1984
        %v2017 = vadd.f32 %v1948, %v1985
        %v2018 = vadd.f32 %v1949, %v1986
        %v2019 = vadd.f32 %v1950, %v1987
        %v2020 = vadd.f32 %v1951, %v1988
        %v2021 = vadd.f32 %v1952, %v1989
        %v2022 = vadd.f32 %v1953, %v1990
        %v2023 = vadd.f32 %v1954, %v1991
        %v2024 = vadd.f32 %v1955, %v1992
        %v2025 = vadd.f32 %v1956, %v1993
        %v2026 = vadd.f32 %v1957, %v1994
        %v2027 = vadd.f32 %v1958, %v1995
        %v2028 = vadd.f32 %v1959, %v1996
        %v2029 = vadd.f32 %v1960, %v1997
        %v2030 = vadd.f32 %v1961, %v1998
        %v2031 = vadd.f32 %v1962, %v1999
        %v2032 = vadd.f32 %v1963, %v2000
        %v2033 = vadd.f32 %v1964, %v2001
        %v2034 = vadd.f32 %v1965, %v2002
        %v2035 = vadd.f32 %v1966, %v2003
        %v2036 = vld [vmem:[#allocation11 + $0x8] sm:$0x1]
        %v2037 = vlaneseq
        %v2038 = vshrl.u32 %v2037, 7
        %v2039 = vsub.s32 0, %v2038
        %v2040 = vrot.slane %v2036, %v2039
        %v2041 = vmul.f32 %v1484, %v2040
        %v2042 = vmul.f32 %v1485, %v2040
        %v2043 = vmul.f32 %v1486, %v2040
        %v2044 = vmul.f32 %v1487, %v2040
        %v2045 = vmul.f32 %v1488, %v2040
        %v2046 = vmul.f32 %v1489, %v2040
        %v2047 = vmul.f32 %v1490, %v2040
        %v2048 = vmul.f32 %v1491, %v2040
        %v2049 = vmul.f32 %v1492, %v2040
        %v2050 = vmul.f32 %v1493, %v2040
        %v2051 = vmul.f32 %v1494, %v2040
        %v2052 = vmul.f32 %v1495, %v2040
        %v2053 = vmul.f32 %v1496, %v2040
        %v2054 = vmul.f32 %v1497, %v2040
        %v2055 = vmul.f32 %v1498, %v2040
        %v2056 = vmul.f32 %v1499, %v2040
        %v2057 = vmul.f32 %v1500, %v2040
        %v2058 = vmul.f32 %v1501, %v2040
        %v2059 = vmul.f32 %v1502, %v2040
        %v2060 = vmul.f32 %v1503, %v2040
        %v2061 = vmul.f32 %v1504, %v2040
        %v2062 = vmul.f32 %v1505, %v2040
        %v2063 = vmul.f32 %v1506, %v2040
        %v2064 = vmul.f32 %v1507, %v2040
        %v2065 = vmul.f32 %v1508, %v2040
        %v2066 = vmul.f32 %v1509, %v2040
        %v2067 = vmul.f32 %v1510, %v2040
        %v2068 = vmul.f32 %v1511, %v2040
        %v2069 = vmul.f32 %v1512, %v2040
        %v2070 = vmul.f32 %v1513, %v2040
        %v2071 = vmul.f32 %v1514, %v2040
        %v2072 = vmul.f32 %v1515, %v2040
        %v2073 = vadd.f32 %v2004, %v2041
        %v2074 = vadd.f32 %v2005, %v2042
        %v2075 = vadd.f32 %v2006, %v2043
        %v2076 = vadd.f32 %v2007, %v2044
        %v2077 = vadd.f32 %v2008, %v2045
        %v2078 = vadd.f32 %v2009, %v2046
        %v2079 = vadd.f32 %v2010, %v2047
        %v2080 = vadd.f32 %v2011, %v2048
        %v2081 = vadd.f32 %v2012, %v2049
        %v2082 = vadd.f32 %v2013, %v2050
        %v2083 = vadd.f32 %v2014, %v2051
        %v2084 = vadd.f32 %v2015, %v2052
        %v2085 = vadd.f32 %v2016, %v2053
        %v2086 = vadd.f32 %v2017, %v2054
        %v2087 = vadd.f32 %v2018, %v2055
        %v2088 = vadd.f32 %v2019, %v2056
        %v2089 = vadd.f32 %v2020, %v2057
        %v2090 = vadd.f32 %v2021, %v2058
        %v2091 = vadd.f32 %v2022, %v2059
        %v2092 = vadd.f32 %v2023, %v2060
        %v2093 = vadd.f32 %v2024, %v2061
        %v2094 = vadd.f32 %v2025, %v2062
        %v2095 = vadd.f32 %v2026, %v2063
        %v2096 = vadd.f32 %v2027, %v2064
        %v2097 = vadd.f32 %v2028, %v2065
        %v2098 = vadd.f32 %v2029, %v2066
        %v2099 = vadd.f32 %v2030, %v2067
        %v2100 = vadd.f32 %v2031, %v2068
        %v2101 = vadd.f32 %v2032, %v2069
        %v2102 = vadd.f32 %v2033, %v2070
        %v2103 = vadd.f32 %v2034, %v2071
        %v2104 = vadd.f32 %v2035, %v2072
        %v2105 = vld [vmem:[%s6] sm:$0x1]
        %v2106 = vlaneseq
        %v2107 = vshrl.u32 %v2106, 7
        %v2108 = vsub.s32 0, %v2107
        %v2109 = vrot.slane %v2105, %v2108
        %v2110 = vmul.f32 %v2073, %v2109
        %v2111 = vmul.f32 %v2074, %v2109
        %v2112 = vmul.f32 %v2075, %v2109
        %v2113 = vmul.f32 %v2076, %v2109
        %v2114 = vmul.f32 %v2077, %v2109
        %v2115 = vmul.f32 %v2078, %v2109
        %v2116 = vmul.f32 %v2079, %v2109
        %v2117 = vmul.f32 %v2080, %v2109
        %v2118 = vmul.f32 %v2081, %v2109
        %v2119 = vmul.f32 %v2082, %v2109
        %v2120 = vmul.f32 %v2083, %v2109
        %v2121 = vmul.f32 %v2084, %v2109
        %v2122 = vmul.f32 %v2085, %v2109
        %v2123 = vmul.f32 %v2086, %v2109
        %v2124 = vmul.f32 %v2087, %v2109
        %v2125 = vmul.f32 %v2088, %v2109
        %v2126 = vmul.f32 %v2089, %v2109
        %v2127 = vmul.f32 %v2090, %v2109
        %v2128 = vmul.f32 %v2091, %v2109
        %v2129 = vmul.f32 %v2092, %v2109
        %v2130 = vmul.f32 %v2093, %v2109
        %v2131 = vmul.f32 %v2094, %v2109
        %v2132 = vmul.f32 %v2095, %v2109
        %v2133 = vmul.f32 %v2096, %v2109
        %v2134 = vmul.f32 %v2097, %v2109
        %v2135 = vmul.f32 %v2098, %v2109
        %v2136 = vmul.f32 %v2099, %v2109
        %v2137 = vmul.f32 %v2100, %v2109
        %v2138 = vmul.f32 %v2101, %v2109
        %v2139 = vmul.f32 %v2102, %v2109
        %v2140 = vmul.f32 %v2103, %v2109
        %v2141 = vmul.f32 %v2104, %v2109
        %v2142 = vld [vmem:[%s6 + $0x1] sm:$0x1]
        %v2143 = vlaneseq
        %v2144 = vshrl.u32 %v2143, 7
        %v2145 = vsub.s32 0, %v2144
        %v2146 = vrot.slane %v2142, %v2145
        %v2147 = vadd.f32 %v2110, %v2146
        %v2148 = vadd.f32 %v2111, %v2146
        %v2149 = vadd.f32 %v2112, %v2146
        %v2150 = vadd.f32 %v2113, %v2146
        %v2151 = vadd.f32 %v2114, %v2146
        %v2152 = vadd.f32 %v2115, %v2146
        %v2153 = vadd.f32 %v2116, %v2146
        %v2154 = vadd.f32 %v2117, %v2146
        %v2155 = vadd.f32 %v2118, %v2146
        %v2156 = vadd.f32 %v2119, %v2146
        %v2157 = vadd.f32 %v2120, %v2146
        %v2158 = vadd.f32 %v2121, %v2146
        %v2159 = vadd.f32 %v2122, %v2146
        %v2160 = vadd.f32 %v2123, %v2146
        %v2161 = vadd.f32 %v2124, %v2146
        %v2162 = vadd.f32 %v2125, %v2146
        %v2163 = vadd.f32 %v2126, %v2146
        %v2164 = vadd.f32 %v2127, %v2146
        %v2165 = vadd.f32 %v2128, %v2146
        %v2166 = vadd.f32 %v2129, %v2146
        %v2167 = vadd.f32 %v2130, %v2146
        %v2168 = vadd.f32 %v2131, %v2146
        %v2169 = vadd.f32 %v2132, %v2146
        %v2170 = vadd.f32 %v2133, %v2146
        %v2171 = vadd.f32 %v2134, %v2146
        %v2172 = vadd.f32 %v2135, %v2146
        %v2173 = vadd.f32 %v2136, %v2146
        %v2174 = vadd.f32 %v2137, %v2146
        %v2175 = vadd.f32 %v2138, %v2146
        %v2176 = vadd.f32 %v2139, %v2146
        %v2177 = vadd.f32 %v2140, %v2146
        %v2178 = vadd.f32 %v2141, %v2146
        %v2179 = vmax.f32 %v2147, 0.0
        %v2180 = vmax.f32 %v2148, 0.0
        %v2181 = vmax.f32 %v2149, 0.0
        %v2182 = vmax.f32 %v2150, 0.0
        %v2183 = vmax.f32 %v2151, 0.0
        %v2184 = vmax.f32 %v2152, 0.0
        %v2185 = vmax.f32 %v2153, 0.0
        %v2186 = vmax.f32 %v2154, 0.0
        %v2187 = vmax.f32 %v2155, 0.0
        %v2188 = vmax.f32 %v2156, 0.0
        %v2189 = vmax.f32 %v2157, 0.0
        %v2190 = vmax.f32 %v2158, 0.0
        %v2191 = vmax.f32 %v2159, 0.0
        %v2192 = vmax.f32 %v2160, 0.0
        %v2193 = vmax.f32 %v2161, 0.0
        %v2194 = vmax.f32 %v2162, 0.0
        %v2195 = vmax.f32 %v2163, 0.0
        %v2196 = vmax.f32 %v2164, 0.0
        %v2197 = vmax.f32 %v2165, 0.0
        %v2198 = vmax.f32 %v2166, 0.0
        %v2199 = vmax.f32 %v2167, 0.0
        %v2200 = vmax.f32 %v2168, 0.0
        %v2201 = vmax.f32 %v2169, 0.0
        %v2202 = vmax.f32 %v2170, 0.0
        %v2203 = vmax.f32 %v2171, 0.0
        %v2204 = vmax.f32 %v2172, 0.0
        %v2205 = vmax.f32 %v2173, 0.0
        %v2206 = vmax.f32 %v2174, 0.0
        %v2207 = vmax.f32 %v2175, 0.0
        %v2208 = vmax.f32 %v2176, 0.0
        %v2209 = vmax.f32 %v2177, 0.0
        %v2210 = vmax.f32 %v2178, 0.0
        %v2211 = vmin.f32 %v2179, 6.0
        %v2212 = vmin.f32 %v2180, 6.0
        %v2213 = vmin.f32 %v2181, 6.0
        %v2214 = vmin.f32 %v2182, 6.0
        %v2215 = vmin.f32 %v2183, 6.0
        %v2216 = vmin.f32 %v2184, 6.0
        %v2217 = vmin.f32 %v2185, 6.0
        %v2218 = vmin.f32 %v2186, 6.0
        %v2219 = vmin.f32 %v2187, 6.0
        %v2220 = vmin.f32 %v2188, 6.0
        %v2221 = vmin.f32 %v2189, 6.0
        %v2222 = vmin.f32 %v2190, 6.0
        %v2223 = vmin.f32 %v2191, 6.0
        %v2224 = vmin.f32 %v2192, 6.0
        %v2225 = vmin.f32 %v2193, 6.0
        %v2226 = vmin.f32 %v2194, 6.0
        %v2227 = vmin.f32 %v2195, 6.0
        %v2228 = vmin.f32 %v2196, 6.0
        %v2229 = vmin.f32 %v2197, 6.0
        %v2230 = vmin.f32 %v2198, 6.0
        %v2231 = vmin.f32 %v2199, 6.0
        %v2232 = vmin.f32 %v2200, 6.0
        %v2233 = vmin.f32 %v2201, 6.0
        %v2234 = vmin.f32 %v2202, 6.0
        %v2235 = vmin.f32 %v2203, 6.0
        %v2236 = vmin.f32 %v2204, 6.0
        %v2237 = vmin.f32 %v2205, 6.0
        %v2238 = vmin.f32 %v2206, 6.0
        %v2239 = vmin.f32 %v2207, 6.0
        %v2240 = vmin.f32 %v2208, 6.0
        %v2241 = vmin.f32 %v2209, 6.0
        %v2242 = vmin.f32 %v2210, 6.0
        %v2243 = vpack.c.bf16 %v2212, %v2211
        %v2244 = vpack.c.bf16 %v2214, %v2213
        %v2245 = vpack.c.bf16 %v2216, %v2215
        %v2246 = vpack.c.bf16 %v2218, %v2217
        %v2247 = vpack.c.bf16 %v2220, %v2219
        %v2248 = vpack.c.bf16 %v2222, %v2221
        %v2249 = vpack.c.bf16 %v2224, %v2223
        %v2250 = vpack.c.bf16 %v2226, %v2225
        %v2251 = vpack.c.bf16 %v2228, %v2227
        %v2252 = vpack.c.bf16 %v2230, %v2229
        %v2253 = vpack.c.bf16 %v2232, %v2231
        %v2254 = vpack.c.bf16 %v2234, %v2233
        %v2255 = vpack.c.bf16 %v2236, %v2235
        %v2256 = vpack.c.bf16 %v2238, %v2237
        %v2257 = vpack.c.bf16 %v2240, %v2239
        %v2258 = vpack.c.bf16 %v2242, %v2241
        %v2259 = vld [vmem:[#allocation12] sm:$0xf]
        %v2260 = vld [vmem:[#allocation12 + $0x4] sm:$0xf]
        %v2261 = vld [vmem:[#allocation12 + $0x8] sm:$0xf]
        %v2262 = vld [vmem:[#allocation12 + $0xc] sm:$0xf]
        %v2263 = vld [vmem:[#allocation12 + $0x10] sm:$0xf]
        %v2264 = vld [vmem:[#allocation12 + $0x14] sm:$0xf]
        %v2265 = vld [vmem:[#allocation12 + $0x18] sm:$0xf]
        %v2266 = vld [vmem:[#allocation12 + $0x1c] sm:$0xf]
        %v2267 = vld [vmem:[#allocation12 + $0x20] sm:$0xf]
        %v2268 = vld [vmem:[#allocation12 + $0x24] sm:$0xf]
        %v2269 = vld [vmem:[#allocation12 + $0x28] sm:$0xf]
        %v2270 = vld [vmem:[#allocation12 + $0x2c] sm:$0xf]
        %v2271 = vld [vmem:[#allocation12 + $0x30] sm:$0xf]
        %v2272 = vld [vmem:[#allocation12 + $0x34] sm:$0xf]
        %v2273 = vld [vmem:[#allocation12 + $0x38] sm:$0xf]
        %v2274 = vld [vmem:[#allocation12 + $0x3c] sm:$0xf]
        %v2291 = vunpack.c.l.b16 %v2259
        %v2292 = vunpack.c.l.b16 %v2260
        %v2293 = vunpack.c.l.b16 %v2261
        %v2294 = vunpack.c.l.b16 %v2262
        %v2295 = vunpack.c.l.b16 %v2263
        %v2296 = vunpack.c.l.b16 %v2264
        %v2297 = vunpack.c.l.b16 %v2265
        %v2298 = vunpack.c.l.b16 %v2266
        %v2299 = vunpack.c.l.b16 %v2267
        %v2300 = vunpack.c.l.b16 %v2268
        %v2301 = vunpack.c.l.b16 %v2269
        %v2302 = vunpack.c.l.b16 %v2270
        %v2303 = vunpack.c.l.b16 %v2271
        %v2304 = vunpack.c.l.b16 %v2272
        %v2305 = vunpack.c.l.b16 %v2273
        %v2306 = vunpack.c.l.b16 %v2274
        %v2307 = vpack.c.b16 %v2292, %v2291
        %v2308 = vpack.c.b16 %v2294, %v2293
        %v2309 = vpack.c.b16 %v2296, %v2295
        %v2310 = vpack.c.b16 %v2298, %v2297
        %v2311 = vpack.c.b16 %v2300, %v2299
        %v2312 = vpack.c.b16 %v2302, %v2301
        %v2313 = vpack.c.b16 %v2304, %v2303
        %v2314 = vpack.c.b16 %v2306, %v2305
        %2323 = vmatprep.subr.bf16.mxu0 0
        %2324 = vmatpush1.bf16.msra.mxu0 %v2314
        %2325 = vmatprep.subr.bf16.mxu0 0
        %2326 = vmatpush1.bf16.msra.mxu0 %v2313
        %2327 = vmatprep.subr.bf16.mxu0 0
        %2328 = vmatpush1.bf16.msra.mxu0 %v2312
        %2329 = vmatprep.subr.bf16.mxu0 0
        %2330 = vmatpush1.bf16.msra.mxu0 %v2311
        %2331 = vmatprep.subr.bf16.mxu0 0
        %2332 = vmatpush1.bf16.msra.mxu0 %v2310
        %2333 = vmatprep.subr.bf16.mxu0 0
        %2334 = vmatpush1.bf16.msra.mxu0 %v2309
        %2335 = vmatprep.subr.bf16.mxu0 0
        %2336 = vmatpush1.bf16.msra.mxu0 %v2308
        %2337 = vmatprep.subr.bf16.mxu0 0
        %2338 = vmatpush1.bf16.msra.mxu0 %v2307
        %2339 = vmatprep.subr.bf16.mxu0 0
        %2340 = vmatpush2.bf16.msra.mxu0 0
        %2341 = vmatprep.subr.bf16.mxu0 0
        %2342 = vmatpush2.bf16.msra.mxu0 0
        %2343 = vmatprep.subr.bf16.mxu0 0
        %2344 = vmatpush2.bf16.msra.mxu0 0
        %2345 = vmatprep.subr.bf16.mxu0 0
        %2346 = vmatpush2.bf16.msra.mxu0 0
        %2347 = vmatprep.subr.bf16.mxu0 0
        %2348 = vmatpush2.bf16.msra.mxu0 0
        %2349 = vmatprep.subr.bf16.mxu0 0
        %2350 = vmatpush2.bf16.msra.mxu0 0
        %2351 = vmatprep.subr.bf16.mxu0 0
        %2352 = vmatpush2.bf16.msra.mxu0 0
        %2353 = vmatprep.subr.bf16.mxu0 0
        %2354 = vmatpush2.bf16.msra.mxu0 0
        %2355 = vmatprep.mubr.bf16.mxu0 0
        %2356 = vmatmul.mubr.bf16.gmra.mxu0 %v2243
        %v2357 = vpop.f32.mrf.mxu0
        %v2358 = vadd.f32 0.0, %v2357
        %v2359 = vpop.f32.mrf.mxu0
        %v2360 = vpop.f32.mrf.mxu0
        %v2361 = vadd.f32 0.0, %v2360
        %v2362 = vpop.f32.mrf.mxu0
        %2363 = vmatprep.mubr.bf16.mxu0 0
        %2364 = vmatmul.mubr.bf16.gmra.mxu0 %v2244
        %v2365 = vpop.f32.mrf.mxu0
        %v2366 = vadd.f32 0.0, %v2365
        %v2367 = vpop.f32.mrf.mxu0
        %v2368 = vpop.f32.mrf.mxu0
        %v2369 = vadd.f32 0.0, %v2368
        %v2370 = vpop.f32.mrf.mxu0
        %2371 = vmatprep.mubr.bf16.mxu0 0
        %2372 = vmatmul.mubr.bf16.gmra.mxu0 %v2245
        %v2373 = vpop.f32.mrf.mxu0
        %v2374 = vadd.f32 0.0, %v2373
        %v2375 = vpop.f32.mrf.mxu0
        %v2376 = vpop.f32.mrf.mxu0
        %v2377 = vadd.f32 0.0, %v2376
        %v2378 = vpop.f32.mrf.mxu0
        %2379 = vmatprep.mubr.bf16.mxu0 0
        %2380 = vmatmul.mubr.bf16.gmra.mxu0 %v2246
        %v2381 = vpop.f32.mrf.mxu0
        %v2382 = vadd.f32 0.0, %v2381
        %v2383 = vpop.f32.mrf.mxu0
        %v2384 = vpop.f32.mrf.mxu0
        %v2385 = vadd.f32 0.0, %v2384
        %v2386 = vpop.f32.mrf.mxu0
        %2387 = vmatprep.mubr.bf16.mxu0 0
        %2388 = vmatmul.mubr.bf16.gmra.mxu0 %v2247
        %v2389 = vpop.f32.mrf.mxu0
        %v2390 = vadd.f32 0.0, %v2389
        %v2391 = vpop.f32.mrf.mxu0
        %v2392 = vpop.f32.mrf.mxu0
        %v2393 = vadd.f32 0.0, %v2392
        %v2394 = vpop.f32.mrf.mxu0
        %2395 = vmatprep.mubr.bf16.mxu0 0
        %2396 = vmatmul.mubr.bf16.gmra.mxu0 %v2248
        %v2397 = vpop.f32.mrf.mxu0
        %v2398 = vadd.f32 0.0, %v2397
        %v2399 = vpop.f32.mrf.mxu0
        %v2400 = vpop.f32.mrf.mxu0
        %v2401 = vadd.f32 0.0, %v2400
        %v2402 = vpop.f32.mrf.mxu0
        %2403 = vmatprep.mubr.bf16.mxu0 0
        %2404 = vmatmul.mubr.bf16.gmra.mxu0 %v2249
        %v2405 = vpop.f32.mrf.mxu0
        %v2406 = vadd.f32 0.0, %v2405
        %v2407 = vpop.f32.mrf.mxu0
        %v2408 = vpop.f32.mrf.mxu0
        %v2409 = vadd.f32 0.0, %v2408
        %v2410 = vpop.f32.mrf.mxu0
        %2411 = vmatprep.mubr.bf16.mxu0 0
        %2412 = vmatmul.mubr.bf16.gmra.mxu0 %v2250
        %v2413 = vpop.f32.mrf.mxu0
        %v2414 = vadd.f32 0.0, %v2413
        %v2415 = vpop.f32.mrf.mxu0
        %v2416 = vpop.f32.mrf.mxu0
        %v2417 = vadd.f32 0.0, %v2416
        %v2418 = vpop.f32.mrf.mxu0
        %2419 = vmatprep.mubr.bf16.mxu0 0
        %2420 = vmatmul.mubr.bf16.gmra.mxu0 %v2251
        %v2421 = vpop.f32.mrf.mxu0
        %v2422 = vadd.f32 0.0, %v2421
        %v2423 = vpop.f32.mrf.mxu0
        %v2424 = vpop.f32.mrf.mxu0
        %v2425 = vadd.f32 0.0, %v2424
        %v2426 = vpop.f32.mrf.mxu0
        %2427 = vmatprep.mubr.bf16.mxu0 0
        %2428 = vmatmul.mubr.bf16.gmra.mxu0 %v2252
        %v2429 = vpop.f32.mrf.mxu0
        %v2430 = vadd.f32 0.0, %v2429
        %v2431 = vpop.f32.mrf.mxu0
        %v2432 = vpop.f32.mrf.mxu0
        %v2433 = vadd.f32 0.0, %v2432
        %v2434 = vpop.f32.mrf.mxu0
        %2435 = vmatprep.mubr.bf16.mxu0 0
        %2436 = vmatmul.mubr.bf16.gmra.mxu0 %v2253
        %v2437 = vpop.f32.mrf.mxu0
        %v2438 = vadd.f32 0.0, %v2437
        %v2439 = vpop.f32.mrf.mxu0
        %v2440 = vpop.f32.mrf.mxu0
        %v2441 = vadd.f32 0.0, %v2440
        %v2442 = vpop.f32.mrf.mxu0
        %2443 = vmatprep.mubr.bf16.mxu0 0
        %2444 = vmatmul.mubr.bf16.gmra.mxu0 %v2254
        %v2445 = vpop.f32.mrf.mxu0
        %v2446 = vadd.f32 0.0, %v2445
        %v2447 = vpop.f32.mrf.mxu0
        %v2448 = vpop.f32.mrf.mxu0
        %v2449 = vadd.f32 0.0, %v2448
        %v2450 = vpop.f32.mrf.mxu0
        %2451 = vmatprep.mubr.bf16.mxu0 0
        %2452 = vmatmul.mubr.bf16.gmra.mxu0 %v2255
        %v2453 = vpop.f32.mrf.mxu0
        %v2454 = vadd.f32 0.0, %v2453
        %v2455 = vpop.f32.mrf.mxu0
        %v2456 = vpop.f32.mrf.mxu0
        %v2457 = vadd.f32 0.0, %v2456
        %v2458 = vpop.f32.mrf.mxu0
        %2459 = vmatprep.mubr.bf16.mxu0 0
        %2460 = vmatmul.mubr.bf16.gmra.mxu0 %v2256
        %v2461 = vpop.f32.mrf.mxu0
        %v2462 = vadd.f32 0.0, %v2461
        %v2463 = vpop.f32.mrf.mxu0
        %v2464 = vpop.f32.mrf.mxu0
        %v2465 = vadd.f32 0.0, %v2464
        %v2466 = vpop.f32.mrf.mxu0
        %2467 = vmatprep.mubr.bf16.mxu0 0
        %2468 = vmatmul.mubr.bf16.gmra.mxu0 %v2257
        %v2469 = vpop.f32.mrf.mxu0
        %v2470 = vadd.f32 0.0, %v2469
        %v2471 = vpop.f32.mrf.mxu0
        %v2472 = vpop.f32.mrf.mxu0
        %v2473 = vadd.f32 0.0, %v2472
        %v2474 = vpop.f32.mrf.mxu0
        %2475 = vmatprep.mubr.bf16.mxu0 0
        %2476 = vmatmul.mubr.bf16.gmra.mxu0 %v2258
        %v2477 = vpop.f32.mrf.mxu0
        %v2478 = vadd.f32 0.0, %v2477
        %v2479 = vpop.f32.mrf.mxu0
        %v2480 = vpop.f32.mrf.mxu0
        %v2481 = vadd.f32 0.0, %v2480
        %v2482 = vpop.f32.mrf.mxu0
        %2483 = vdwg.mxu0
        %v2484 = vld [vmem:[%s8] sm:$0x1]
        %v2485 = vlaneseq
        %v2486 = vshrl.u32 %v2485, 7
        %v2487 = vsub.s32 0, %v2486
        %v2488 = vrot.slane %v2484, %v2487
        %v2489 = vmul.f32 %v2358, %v2488
        %v2490 = vmul.f32 %v2361, %v2488
        %v2491 = vmul.f32 %v2366, %v2488
        %v2492 = vmul.f32 %v2369, %v2488
        %v2493 = vmul.f32 %v2374, %v2488
        %v2494 = vmul.f32 %v2377, %v2488
        %v2495 = vmul.f32 %v2382, %v2488
        %v2496 = vmul.f32 %v2385, %v2488
        %v2497 = vmul.f32 %v2390, %v2488
        %v2498 = vmul.f32 %v2393, %v2488
        %v2499 = vmul.f32 %v2398, %v2488
        %v2500 = vmul.f32 %v2401, %v2488
        %v2501 = vmul.f32 %v2406, %v2488
        %v2502 = vmul.f32 %v2409, %v2488
        %v2503 = vmul.f32 %v2414, %v2488
        %v2504 = vmul.f32 %v2417, %v2488
        %v2505 = vmul.f32 %v2422, %v2488
        %v2506 = vmul.f32 %v2425, %v2488
        %v2507 = vmul.f32 %v2430, %v2488
        %v2508 = vmul.f32 %v2433, %v2488
        %v2509 = vmul.f32 %v2438, %v2488
        %v2510 = vmul.f32 %v2441, %v2488
        %v2511 = vmul.f32 %v2446, %v2488
        %v2512 = vmul.f32 %v2449, %v2488
        %v2513 = vmul.f32 %v2454, %v2488
        %v2514 = vmul.f32 %v2457, %v2488
        %v2515 = vmul.f32 %v2462, %v2488
        %v2516 = vmul.f32 %v2465, %v2488
        %v2517 = vmul.f32 %v2470, %v2488
        %v2518 = vmul.f32 %v2473, %v2488
        %v2519 = vmul.f32 %v2478, %v2488
        %v2520 = vmul.f32 %v2481, %v2488
        %v2521 = vld [vmem:[%s8 + $0x1] sm:$0x1]
        %v2522 = vlaneseq
        %v2523 = vshrl.u32 %v2522, 7
        %v2524 = vsub.s32 0, %v2523
        %v2525 = vrot.slane %v2521, %v2524
        %v2526 = vadd.f32 %v2489, %v2525
        %v2527 = vadd.f32 %v2490, %v2525
        %v2528 = vadd.f32 %v2491, %v2525
        %v2529 = vadd.f32 %v2492, %v2525
        %v2530 = vadd.f32 %v2493, %v2525
        %v2531 = vadd.f32 %v2494, %v2525
        %v2532 = vadd.f32 %v2495, %v2525
        %v2533 = vadd.f32 %v2496, %v2525
        %v2534 = vadd.f32 %v2497, %v2525
        %v2535 = vadd.f32 %v2498, %v2525
        %v2536 = vadd.f32 %v2499, %v2525
        %v2537 = vadd.f32 %v2500, %v2525
        %v2538 = vadd.f32 %v2501, %v2525
        %v2539 = vadd.f32 %v2502, %v2525
        %v2540 = vadd.f32 %v2503, %v2525
        %v2541 = vadd.f32 %v2504, %v2525
        %v2542 = vadd.f32 %v2505, %v2525
        %v2543 = vadd.f32 %v2506, %v2525
        %v2544 = vadd.f32 %v2507, %v2525
        %v2545 = vadd.f32 %v2508, %v2525
        %v2546 = vadd.f32 %v2509, %v2525
        %v2547 = vadd.f32 %v2510, %v2525
        %v2548 = vadd.f32 %v2511, %v2525
        %v2549 = vadd.f32 %v2512, %v2525
        %v2550 = vadd.f32 %v2513, %v2525
        %v2551 = vadd.f32 %v2514, %v2525
        %v2552 = vadd.f32 %v2515, %v2525
        %v2553 = vadd.f32 %v2516, %v2525
        %v2554 = vadd.f32 %v2517, %v2525
        %v2555 = vadd.f32 %v2518, %v2525
        %v2556 = vadd.f32 %v2519, %v2525
        %v2557 = vadd.f32 %v2520, %v2525
        %v2558 = vld [vmem:[%s457] sm:$0xff]
        %v2559 = vld [vmem:[%s457 + $0x8] sm:$0xff]
        %v2560 = vld [vmem:[%s457 + $0x10] sm:$0xff]
        %v2561 = vld [vmem:[%s457 + $0x18] sm:$0xff]
        %v2562 = vld [vmem:[%s457 + $0x20] sm:$0xff]
        %v2563 = vld [vmem:[%s457 + $0x28] sm:$0xff]
        %v2564 = vld [vmem:[%s457 + $0x30] sm:$0xff]
        %v2565 = vld [vmem:[%s457 + $0x38] sm:$0xff]
        %v2566 = vld [vmem:[%s457 + $0x40] sm:$0xff]
        %v2567 = vld [vmem:[%s457 + $0x48] sm:$0xff]
        %v2568 = vld [vmem:[%s457 + $0x50] sm:$0xff]
        %v2569 = vld [vmem:[%s457 + $0x58] sm:$0xff]
        %v2570 = vld [vmem:[%s457 + $0x60] sm:$0xff]
        %v2571 = vld [vmem:[%s457 + $0x68] sm:$0xff]
        %v2572 = vld [vmem:[%s457 + $0x70] sm:$0xff]
        %v2573 = vld [vmem:[%s457 + $0x78] sm:$0xff]
        %v2574 = vld [vmem:[%s457 + $0x80] sm:$0xff]
        %v2575 = vld [vmem:[%s457 + $0x88] sm:$0xff]
        %v2576 = vld [vmem:[%s457 + $0x90] sm:$0xff]
        %v2577 = vld [vmem:[%s457 + $0x98] sm:$0xff]
        %v2578 = vld [vmem:[%s457 + $0xa0] sm:$0xff]
        %v2579 = vld [vmem:[%s457 + $0xa8] sm:$0xff]
        %v2580 = vld [vmem:[%s457 + $0xb0] sm:$0xff]
        %v2581 = vld [vmem:[%s457 + $0xb8] sm:$0xff]
        %v2582 = vld [vmem:[%s457 + $0xc0] sm:$0xff]
        %v2583 = vld [vmem:[%s457 + $0xc8] sm:$0xff]
        %v2584 = vld [vmem:[%s457 + $0xd0] sm:$0xff]
        %v2585 = vld [vmem:[%s457 + $0xd8] sm:$0xff]
        %v2586 = vld [vmem:[%s457 + $0xe0] sm:$0xff]
        %v2587 = vld [vmem:[%s457 + $0xe8] sm:$0xff]
        %v2588 = vld [vmem:[%s457 + $0xf0] sm:$0xff]
        %v2589 = vld [vmem:[%s457 + $0xf8] sm:$0xff]
        %v2590 = vadd.f32 %v2526, %v2558
        %v2591 = vadd.f32 %v2527, %v2559
        %v2592 = vadd.f32 %v2528, %v2560
        %v2593 = vadd.f32 %v2529, %v2561
        %v2594 = vadd.f32 %v2530, %v2562
        %v2595 = vadd.f32 %v2531, %v2563
        %v2596 = vadd.f32 %v2532, %v2564
        %v2597 = vadd.f32 %v2533, %v2565
        %v2598 = vadd.f32 %v2534, %v2566
        %v2599 = vadd.f32 %v2535, %v2567
        %v2600 = vadd.f32 %v2536, %v2568
        %v2601 = vadd.f32 %v2537, %v2569
        %v2602 = vadd.f32 %v2538, %v2570
        %v2603 = vadd.f32 %v2539, %v2571
        %v2604 = vadd.f32 %v2540, %v2572
        %v2605 = vadd.f32 %v2541, %v2573
        %v2606 = vadd.f32 %v2542, %v2574
        %v2607 = vadd.f32 %v2543, %v2575
        %v2608 = vadd.f32 %v2544, %v2576
        %v2609 = vadd.f32 %v2545, %v2577
        %v2610 = vadd.f32 %v2546, %v2578
        %v2611 = vadd.f32 %v2547, %v2579
        %v2612 = vadd.f32 %v2548, %v2580
        %v2613 = vadd.f32 %v2549, %v2581
        %v2614 = vadd.f32 %v2550, %v2582
        %v2615 = vadd.f32 %v2551, %v2583
        %v2616 = vadd.f32 %v2552, %v2584
        %v2617 = vadd.f32 %v2553, %v2585
        %v2618 = vadd.f32 %v2554, %v2586
        %v2619 = vadd.f32 %v2555, %v2587
        %v2620 = vadd.f32 %v2556, %v2588
        %v2621 = vadd.f32 %v2557, %v2589
        %2622 = vst [vmem:[%s522] sm:$0xff] %v2590
        %2623 = vst [vmem:[%s522 + $0x8] sm:$0xff] %v2591
        %2624 = vst [vmem:[%s522 + $0x10] sm:$0xff] %v2592
        %2625 = vst [vmem:[%s522 + $0x18] sm:$0xff] %v2593
        %2626 = vst [vmem:[%s522 + $0x20] sm:$0xff] %v2594
        %2627 = vst [vmem:[%s522 + $0x28] sm:$0xff] %v2595
        %2628 = vst [vmem:[%s522 + $0x30] sm:$0xff] %v2596
        %2629 = vst [vmem:[%s522 + $0x38] sm:$0xff] %v2597
        %2630 = vst [vmem:[%s522 + $0x40] sm:$0xff] %v2598
        %2631 = vst [vmem:[%s522 + $0x48] sm:$0xff] %v2599
        %2632 = vst [vmem:[%s522 + $0x50] sm:$0xff] %v2600
        %2633 = vst [vmem:[%s522 + $0x58] sm:$0xff] %v2601
        %2634 = vst [vmem:[%s522 + $0x60] sm:$0xff] %v2602
        %2635 = vst [vmem:[%s522 + $0x68] sm:$0xff] %v2603
        %2636 = vst [vmem:[%s522 + $0x70] sm:$0xff] %v2604
        %2637 = vst [vmem:[%s522 + $0x78] sm:$0xff] %v2605
        %2638 = vst [vmem:[%s522 + $0x80] sm:$0xff] %v2606
        %2639 = vst [vmem:[%s522 + $0x88] sm:$0xff] %v2607
        %2640 = vst [vmem:[%s522 + $0x90] sm:$0xff] %v2608
        %2641 = vst [vmem:[%s522 + $0x98] sm:$0xff] %v2609
        %2642 = vst [vmem:[%s522 + $0xa0] sm:$0xff] %v2610
        %2643 = vst [vmem:[%s522 + $0xa8] sm:$0xff] %v2611
        %2644 = vst [vmem:[%s522 + $0xb0] sm:$0xff] %v2612
        %2645 = vst [vmem:[%s522 + $0xb8] sm:$0xff] %v2613
        %2646 = vst [vmem:[%s522 + $0xc0] sm:$0xff] %v2614
        %2647 = vst [vmem:[%s522 + $0xc8] sm:$0xff] %v2615
        %2648 = vst [vmem:[%s522 + $0xd0] sm:$0xff] %v2616
        %2649 = vst [vmem:[%s522 + $0xd8] sm:$0xff] %v2617
        %2650 = vst [vmem:[%s522 + $0xe0] sm:$0xff] %v2618
        %2651 = vst [vmem:[%s522 + $0xe8] sm:$0xff] %v2619
        %2652 = vst [vmem:[%s522 + $0xf0] sm:$0xff] %v2620
        %2653 = vst [vmem:[%s522 + $0xf8] sm:$0xff] %v2621
        %s2654 = sand.u32 %s279, 1
        %s2655 = scalar_lea.sflag [#allocation5], %s2654
        %s2656 = sand.u32 %s279, 1
        %s2657 = smul.addr %s2656, 256
        %s2658 = scalar_lea.vmem [#allocation14], %s2657
        // Predicated region
        $region81: #{tpu_custom_call.1} parent=55 // pred_check
          %p2659 = pneg %p289
        $region82: #{tpu_custom_call.1} parent=55 // pred_check_branch
          %2661 = sbr.rel (%p2659) target = $region84
        $region83: #{tpu_custom_call.1} parent=55 // pred_region
          %s2662 = smul.u32 16, %s36
          %s2664 = ssub.s32 4096, 4096
          %2665 = vsyncadd %s2655, %s2664
          %s2666 = smul.addr %s2662, 2
          %s2667 = smul.addr %s35, 32
          %s2668 = sadd.s32 %s2666, %s2667
          %s2669 = smul.addr %s2668, 128
          %s2670 = scalar_lea.hbm %s9, %s2669
          %s2671 = sshll.u32 %s2658, 4
          %s2672 = int_to_ptr.vmem [resolvable:$true] %s2671
          %2677 = dma.vmem_to_hbm [thread:$0]  %s2672, 4096, %s2670, %s2655, 128, 128, 8
        $region84: #{tpu_custom_call.1} parent=55 // pred_fallthru
          _
      $region56: #{tpu_custom_call.1} parent=5 // pred_fallthru
        _
      %p2678 = scmp.le.s32.totalorder 2, %s26
      // Predicated region
      $region85: #{tpu_custom_call.1} parent=5 // pred_check
        %p2679 = pneg %p2678
      $region86: #{tpu_custom_call.1} parent=5 // pred_check_branch
        %2681 = sbr.rel (%p2679) target = $region88
      $region87: #{tpu_custom_call.1} parent=5 // pred_region
        %s2682 = ssub.s32 %s26, 2
        // Predicated region
        $region89: #{tpu_custom_call.1} parent=87 // pred_check
          %p2683 = pneg %p295
        $region90: #{tpu_custom_call.1} parent=87 // pred_check_branch
          %2685 = sbr.rel (%p2683) target = $region92
        $region91: #{tpu_custom_call.1} parent=87 // pred_region
          %s2686 = sand.u32 %s280, 1
          %s2687 = scalar_lea.sflag [#allocation5], %s2686
          %s2688 = sand.u32 %s280, 1
          %s2689 = smul.addr %s2688, 256
          %s2690 = scalar_lea.vmem [#allocation14], %s2689
          %2691 = dma.done %s2687, 4096
        $region92: #{tpu_custom_call.1} parent=87 // pred_fallthru
          _
      $region88: #{tpu_custom_call.1} parent=5 // pred_fallthru
        _
    $region6: #{tpu_custom_call.1} parent=1 // loop_footer
      %s30 = sadd.s32 1, %s26
    $region7: #{tpu_custom_call.1} parent=1 // loop_footer_branch
      %25 = sbr.rel target = $region3
    $region8: #{tpu_custom_call.1} parent=1 // loop_exit
      _
    %2692 = vsyncpa [#allocation4], 1
    %s2693 = scalar_lea.sflag [#allocation4], 1
    %2694 = vsyncpa %s2693, 1
    %2695 = vsyncpa [#allocation7], 1
    %s2696 = scalar_lea.sflag [#allocation7], 1
    %2697 = vsyncpa %s2696, 1
    %2698 = vsyncpa [#allocation10], 1
    %2699 = vsyncpa [#allocation13], 1
    %2700 = vsyncpa [#allocation5], 1
    %s2701 = scalar_lea.sflag [#allocation5], 1
    %2702 = vsyncpa %s2701, 1

</llo_original>
